<compile_context>
chip_gen: v6e
topology: v6e:2x2x1
jax: 0.10.0
libtpu: 0.0.40
codegen_flags: <defaults>
</compile_context>

<pallas_src>
import functools

import jax
import jax.numpy as jnp
from jax.experimental import pallas as pl
from jax.experimental.pallas import tpu as pltpu


# -----------------------------------------------------------------------------
# Kernel 1: feature_high = ReLU(Conv1x1*s + t) plus its global average pool.
# Layout per batch element: (C, HW) -- channels on sublanes, pixels on lanes.
# -----------------------------------------------------------------------------
def _feature_high_kernel(xh_ref, w1_ref, t1_ref, feat_ref, gap_ref):
    xh = xh_ref[0]                                            # (C_high, HW)
    feat = jnp.dot(w1_ref[...], xh, preferred_element_type=jnp.float32)
    feat = jnp.maximum(feat + t1_ref[...], 0.0)               # (C_out, HW)
    feat_ref[0] = feat
    gap_ref[0] = jnp.sum(feat, axis=1, keepdims=True) * (1.0 / feat.shape[1])


# -----------------------------------------------------------------------------
# Kernel 2: bottomup 7x7 spatial attention + asymmetric fuse + post 3x3 conv.
#
# Spatial taps are realized on flat (C, H*W) rows: the map is zero-padded in
# flat index space, a tap (dy, dx) is the in-bounds slice at offset dy*W + dx,
# and a per-dx lane mask kills the columns that would wrap across image rows.
# -----------------------------------------------------------------------------
def _fuse_post_kernel(xl_ref, feat_ref, td_ref, w7_ref, wp_ref, tp_ref, o_ref,
                      *, width):
    w = width
    xl = xl_ref[0]                                            # (C, HW)
    feat = feat_ref[0]                                        # (C, HW)
    td = td_ref[0]                                            # (C, 1)
    c, hw = xl.shape

    # Pad so every 7x7 / 3x3 tap is an in-bounds slice of a flat padded row.
    # Multiple of 128 keeps the concatenation below vreg-aligned.
    pad = ((3 * w + 3 + 127) // 128) * 128

    # Column index of every flattened pixel -> horizontal edge masks per dx.
    xcol = jax.lax.broadcasted_iota(jnp.int32, (1, hw), 1) % w
    masks = {dx: jnp.where((xcol + dx >= 0) & (xcol + dx < w), 1.0, 0.0)
             for dx in range(-3, 4)}

    # ---- bottomup: sigmoid(Conv7x7([mean_c(xl); max_c(xl)])) -> (1, HW) ----
    avg = jnp.mean(xl, axis=0, keepdims=True)                 # (1, HW)
    mx = jnp.max(xl, axis=0, keepdims=True)                   # (1, HW)
    z1 = jnp.zeros((1, pad), jnp.float32)
    pavg = jnp.concatenate([z1, avg, z1], axis=1)             # (1, HW + 2*pad)
    pmax = jnp.concatenate([z1, mx, z1], axis=1)
    bu = jnp.zeros((1, hw), jnp.float32)
    for kh in range(7):
        for kw in range(7):
            dy, dx = kh - 3, kw - 3
            s = pad + dy * w + dx
            k = kh * 7 + kw
            tap = (w7_ref[0, k] * pavg[:, s:s + hw]
                   + w7_ref[1, k] * pmax[:, s:s + hw])
            bu = bu + tap * masks[dx]
    bu = jax.nn.sigmoid(bu)                                   # (1, HW)

    # ---- fuse: td broadcasts over pixels (lanes), bu over channels ----
    xs = 2.0 * xl * td + 2.0 * feat * bu                      # (C, HW)

    # ---- post: ReLU(Conv3x3(xs) + t) as one (C, 9C) @ (9C, HW) matmul ----
    zc = jnp.zeros((c, pad), jnp.float32)
    pxs = jnp.concatenate([zc, xs, zc], axis=1)               # (C, HW + 2*pad)
    taps = []
    for kh in range(3):
        for kw in range(3):
            dy, dx = kh - 1, kw - 1
            s = pad + dy * w + dx
            taps.append(pxs[:, s:s + hw] * masks[dx])
    stacked = jnp.concatenate(taps, axis=0)                   # (9C, HW)
    out = jnp.dot(wp_ref[...], stacked, preferred_element_type=jnp.float32)
    o_ref[0] = jnp.maximum(out + tp_ref[...], 0.0)


# -----------------------------------------------------------------------------
# Wrapper: BN folding, reshape-only layout glue, topdown head, two pallas_calls.
# -----------------------------------------------------------------------------
def asym_bi_cs_fuse_reduce_pallas(xh, xl, params):
    p = params
    n, c_high, h, w = xh.shape
    _, c_low, _, _ = xl.shape
    hw = h * w
    c_out = p["w_fh"].shape[0]
    c_b = p["w_td1"].shape[0]
    assert c_low == c_out, "module requires in_low_channels == out_channels"
    eps = 1e-5

    # ---- fold eval-mode BN into conv weights (scale) and additive shifts ----
    s_fh = p["g_fh"] / jnp.sqrt(p["v_fh"] + eps)
    w1 = p["w_fh"].reshape(c_out, c_high) * s_fh[:, None]          # (C, Ch)
    t1 = (s_fh * (p["b_fh"] - p["m_fh"]) + p["be_fh"])[:, None]    # (C, 1)

    s_td1 = p["g_td1"] / jnp.sqrt(p["v_td1"] + eps)
    w2a = p["w_td1"].reshape(c_b, c_out) * s_td1[:, None]
    t2a = s_td1 * (p["b_td1"] - p["m_td1"]) + p["be_td1"]

    s_td2 = p["g_td2"] / jnp.sqrt(p["v_td2"] + eps)
    w2b = p["w_td2"].reshape(c_out, c_b) * s_td2[:, None]
    t2b = s_td2 * (p["b_td2"] - p["m_td2"]) + p["be_td2"]

    s_po = p["g_po"] / jnp.sqrt(p["v_po"] + eps)
    wpo = p["w_po"] * s_po[:, None, None, None]                    # (C, C, 3, 3)
    wp_mat = jnp.transpose(wpo, (0, 2, 3, 1)).reshape(c_out, 9 * c_out)
    tpo = (s_po * (p["b_po"] - p["m_po"]) + p["be_po"])[:, None]   # (C, 1)

    w7_mat = p["w_bu"].reshape(2, 49)                              # SMEM table

    # ---- NCHW-native flattening: reshape only, no transposes ----
    xh_flat = xh.reshape(n, c_high, hw)
    xl_flat = xl.reshape(n, c_low, hw)

    # ---- kernel 1: feature_high and its GAP ----
    feat, gap = pl.pallas_call(
        _feature_high_kernel,
        out_shape=(jax.ShapeDtypeStruct((n, c_out, hw), jnp.float32),
                   jax.ShapeDtypeStruct((n, c_out, 1), jnp.float32)),
        grid_spec=pltpu.PrefetchScalarGridSpec(
            num_scalar_prefetch=0,
            grid=(n,),
            in_specs=[
                pl.BlockSpec((1, c_high, hw), lambda i: (i, 0, 0)),
                pl.BlockSpec((c_out, c_high), lambda i: (0, 0)),
                pl.BlockSpec((c_out, 1), lambda i: (0, 0)),
            ],
            out_specs=(
                pl.BlockSpec((1, c_out, hw), lambda i: (i, 0, 0)),
                pl.BlockSpec((1, c_out, 1), lambda i: (i, 0, 0)),
            ),
        ),
        compiler_params=pltpu.CompilerParams(
            dimension_semantics=("parallel",)),
    )(xh_flat, w1, t1)

    # ---- topdown head (GAP -> 1x1 -> ReLU -> 1x1 -> sigmoid), in the wrapper
    g = gap[..., 0]                                               # (N, C)
    hid = jnp.maximum(g @ w2a.T + t2a, 0.0)                       # (N, Cb)
    td = jax.nn.sigmoid(hid @ w2b.T + t2b)[..., None]             # (N, C, 1)

    # ---- kernel 2: bottomup attention + fuse + post conv ----
    out_flat = pl.pallas_call(
        functools.partial(_fuse_post_kernel, width=w),
        out_shape=jax.ShapeDtypeStruct((n, c_out, hw), jnp.float32),
        grid_spec=pltpu.PrefetchScalarGridSpec(
            num_scalar_prefetch=0,
            grid=(n,),
            in_specs=[
                pl.BlockSpec((1, c_out, hw), lambda i: (i, 0, 0)),
                pl.BlockSpec((1, c_out, hw), lambda i: (i, 0, 0)),
                pl.BlockSpec((1, c_out, 1), lambda i: (i, 0, 0)),
                pl.BlockSpec(memory_space=pltpu.MemorySpace.SMEM),
                pl.BlockSpec((c_out, 9 * c_out), lambda i: (0, 0)),
                pl.BlockSpec((c_out, 1), lambda i: (0, 0)),
            ],
            out_specs=pl.BlockSpec((1, c_out, hw), lambda i: (i, 0, 0)),
        ),
        compiler_params=pltpu.CompilerParams(
            dimension_semantics=("parallel",)),
    )(xl_flat, feat, td, w7_mat, wp_mat, tpo)

    return out_flat.reshape(n, c_out, h, w)


# -----------------------------------------------------------------------------
# Pure-JAX reference (eval-mode BatchNorm) for correctness checking.
# -----------------------------------------------------------------------------
def asym_bi_cs_fuse_reduce_reference(xh, xl, params):
    p = params
    eps = 1e-5

    def bn(x, g, b, m, v):
        return ((x - m[None, :, None, None]) / jnp.sqrt(v + eps)[None, :, None, None]
                * g[None, :, None, None] + b[None, :, None, None])

    def conv(x, wgt, pad):
        return jax.lax.conv_general_dilated(
            x, wgt, window_strides=(1, 1), padding=[(pad, pad), (pad, pad)],
            dimension_numbers=("NCHW", "OIHW", "NCHW"))

    xh_f = conv(xh, p["w_fh"], 0) + p["b_fh"][None, :, None, None]
    xh_f = jnp.maximum(bn(xh_f, p["g_fh"], p["be_fh"], p["m_fh"], p["v_fh"]), 0.0)

    gap = jnp.mean(xh_f, axis=(2, 3), keepdims=True)
    t = conv(gap, p["w_td1"], 0) + p["b_td1"][None, :, None, None]
    t = jnp.maximum(bn(t, p["g_td1"], p["be_td1"], p["m_td1"], p["v_td1"]), 0.0)
    t = conv(t, p["w_td2"], 0) + p["b_td2"][None, :, None, None]
    td = jax.nn.sigmoid(bn(t, p["g_td2"], p["be_td2"], p["m_td2"], p["v_td2"]))

    avg = jnp.mean(xl, axis=1, keepdims=True)
    mx = jnp.max(xl, axis=1, keepdims=True)
    bu = jax.nn.sigmoid(conv(jnp.concatenate([avg, mx], axis=1), p["w_bu"], 3))

    xs = 2.0 * xl * td + 2.0 * xh_f * bu
    out = conv(xs, p["w_po"], 1) + p["b_po"][None, :, None, None]
    out = jnp.maximum(bn(out, p["g_po"], p["be_po"], p["m_po"], p["v_po"]), 0.0)
    return out


def make_params(key, c_high, c_out, r=4):
    c_b = c_out // r
    ks = iter(jax.random.split(key, 32))

    def nrm(shape, scale):
        return scale * jax.random.normal(next(ks), shape, jnp.float32)

    def uni(shape, lo, hi):
        return jax.random.uniform(next(ks), shape, jnp.float32, lo, hi)

    p = {}
    # feature_high: Conv1x1(c_high -> c_out) + BN
    p["w_fh"] = nrm((c_out, c_high, 1, 1), 0.3)
    p["b_fh"] = nrm((c_out,), 0.1)
    p["g_fh"] = 1.0 + nrm((c_out,), 0.1)
    p["be_fh"] = nrm((c_out,), 0.1)
    p["m_fh"] = nrm((c_out,), 0.05)
    p["v_fh"] = uni((c_out,), 0.5, 1.5)
    # topdown conv1: Conv1x1(c_out -> c_b) + BN
    p["w_td1"] = nrm((c_b, c_out, 1, 1), 0.3)
    p["b_td1"] = nrm((c_b,), 0.1)
    p["g_td1"] = 1.0 + nrm((c_b,), 0.1)
    p["be_td1"] = nrm((c_b,), 0.1)
    p["m_td1"] = nrm((c_b,), 0.05)
    p["v_td1"] = uni((c_b,), 0.5, 1.5)
    # topdown conv2: Conv1x1(c_b -> c_out) + BN
    p["w_td2"] = nrm((c_out, c_b, 1, 1), 0.3)
    p["b_td2"] = nrm((c_out,), 0.1)
    p["g_td2"] = 1.0 + nrm((c_out,), 0.1)
    p["be_td2"] = nrm((c_out,), 0.1)
    p["m_td2"] = nrm((c_out,), 0.05)
    p["v_td2"] = uni((c_out,), 0.5, 1.5)
    # bottomup: Conv7x7(2 -> 1), no bias
    p["w_bu"] = nrm((1, 2, 7, 7), 0.1)
    # post: Conv3x3(c_out -> c_out) + BN
    p["w_po"] = nrm((c_out, c_out, 3, 3), 0.1)
    p["b_po"] = nrm((c_out,), 0.1)
    p["g_po"] = 1.0 + nrm((c_out,), 0.1)
    p["be_po"] = nrm((c_out,), 0.1)
    p["m_po"] = nrm((c_out,), 0.05)
    p["v_po"] = uni((c_out,), 0.5, 1.5)
    return p


if __name__ == "__main__":
    key = jax.random.PRNGKey(0)
    k_xh, k_xl, k_p = jax.random.split(key, 3)

    N, C_HIGH, C_OUT, R, H, W = 2, 8, 16, 4, 16, 16

    xh = jax.random.normal(k_xh, (N, C_HIGH, H, W), jnp.float32)
    xl = jax.random.normal(k_xl, (N, C_OUT, H, W), jnp.float32)  # in_low == out
    params = make_params(k_p, C_HIGH, C_OUT, R)

    out = jax.jit(asym_bi_cs_fuse_reduce_pallas)(xh, xl, params)
    out = jax.block_until_ready(out)

    ref = asym_bi_cs_fuse_reduce_reference(xh, xl, params)
    assert out.shape == (N, C_OUT, H, W)
    max_err = jnp.max(jnp.abs(out - ref))
    assert jnp.allclose(out, ref, atol=1e-3, rtol=1e-3), f"max err {max_err}"

    print("KERNEL_OK")
</pallas_src>

<mosaic_0001>
module attributes {stable_mosaic.version = 11 : i64} {
  func.func @_feature_high_kernel(%arg0: i32, %arg1: memref<1x8x256xf32, #tpu.memory_space<vmem>>, %arg2: memref<16x8xf32, #tpu.memory_space<vmem>>, %arg3: memref<16x1xf32, #tpu.memory_space<vmem>>, %arg4: memref<1x16x256xf32, #tpu.memory_space<vmem>>, %arg5: memref<1x16x1xf32, #tpu.memory_space<vmem>>) attributes {dimension_semantics = [#tpu.dimension_semantics<parallel>], iteration_bounds = array<i64: 2>, scalar_prefetch = 0 : i64, scratch_operands = 0 : i64, tpu.core_type = #tpu.core_type<tc>, window_params = [{transform_indices = @transform_0, window_bounds = array<i64: 1, 8, 256>}, {pipeline_mode = #tpu.pipeline_mode<synchronous>, transform_indices = @transform_1, window_bounds = array<i64: 16, 8>}, {pipeline_mode = #tpu.pipeline_mode<synchronous>, transform_indices = @transform_2, window_bounds = array<i64: 16, 1>}, {transform_indices = @transform_3, window_bounds = array<i64: 1, 16, 256>}, {transform_indices = @transform_4, window_bounds = array<i64: 1, 16, 1>}]} {
    %c0 = arith.constant 0 : index
    %c0_0 = arith.constant 0 : index
    %c0_1 = arith.constant 0 : index
    %0 = vector.load %arg1[%c0, %c0_0, %c0_1] : memref<1x8x256xf32, #tpu.memory_space<vmem>>, vector<1x8x256xf32>
    %1 = vector.shape_cast %0 : vector<1x8x256xf32> to vector<8x256xf32>
    %c0_2 = arith.constant 0 : index
    %c0_3 = arith.constant 0 : index
    %2 = vector.load %arg2[%c0_2, %c0_3] : memref<16x8xf32, #tpu.memory_space<vmem>>, vector<16x8xf32>
    %cst = arith.constant dense<0.000000e+00> : vector<16x256xf32>
    %3 = tpu.matmul %2, %1, %cst {dimension_numbers = #tpu.dot_dimension_numbers<[1], [0], [0], [1], [0, 0, 1, 1], [], []>} : vector<16x8xf32>, vector<8x256xf32>, vector<16x256xf32> -> vector<16x256xf32>
    %c0_4 = arith.constant 0 : index
    %c0_5 = arith.constant 0 : index
    %4 = vector.load %arg3[%c0_4, %c0_5] : memref<16x1xf32, #tpu.memory_space<vmem>>, vector<16x1xf32>
    %5 = vector.broadcast %4 : vector<16x1xf32> to vector<16x256xf32>
    %6 = arith.addf %3, %5 : vector<16x256xf32>
    %cst_6 = arith.constant 0.000000e+00 : f32
    %7 = vector.broadcast %cst_6 : f32 to vector<16x256xf32>
    %8 = arith.maximumf %6, %7 : vector<16x256xf32>
    %c0_7 = arith.constant 0 : index
    %c0_8 = arith.constant 0 : index
    %c0_9 = arith.constant 0 : index
    %9 = vector.load %arg4[%c0_7, %c0_8, %c0_9] : memref<1x16x256xf32, #tpu.memory_space<vmem>>, vector<1x16x256xf32>
    %10 = vector.shape_cast %9 : vector<1x16x256xf32> to vector<16x256xf32>
    %11 = vector.shape_cast %8 : vector<16x256xf32> to vector<1x16x256xf32>
    tpu.vector_store %arg4[%c0_7, %c0_8, %c0_9], %11 {strides = array<i32>} : memref<1x16x256xf32, #tpu.memory_space<vmem>>, vector<1x16x256xf32>,
    %cst_10 = arith.constant dense<0.000000e+00> : vector<16xf32>
    %12 = vector.multi_reduction <add>, %8, %cst_10 [1] : vector<16x256xf32> to vector<16xf32>
    %13 = vector.shape_cast %12 : vector<16xf32> to vector<16x1xf32>
    %cst_11 = arith.constant 3.906250e-03 : f32
    %14 = vector.broadcast %cst_11 : f32 to vector<16x1xf32>
    %15 = arith.mulf %13, %14 : vector<16x1xf32>
    %c0_12 = arith.constant 0 : index
    %c0_13 = arith.constant 0 : index
    %c0_14 = arith.constant 0 : index
    %16 = vector.load %arg5[%c0_12, %c0_13, %c0_14] : memref<1x16x1xf32, #tpu.memory_space<vmem>>, vector<1x16x1xf32>
    %17 = vector.shape_cast %16 : vector<1x16x1xf32> to vector<16x1xf32>
    %18 = vector.shape_cast %15 : vector<16x1xf32> to vector<1x16x1xf32>
    tpu.vector_store %arg5[%c0_12, %c0_13, %c0_14], %18 {strides = array<i32>} : memref<1x16x1xf32, #tpu.memory_space<vmem>>, vector<1x16x1xf32>,
    return
  }
  func.func @transform_0(%arg0: i32) -> (i32, i32, i32) {
    %c0_i32 = arith.constant 0 : i32
    %c0_i32_0 = arith.constant 0 : i32
    %c0_i32_1 = arith.constant 0 : i32
    return %arg0, %c0_i32, %c0_i32_0 : i32, i32, i32
  }
  func.func @transform_1(%arg0: i32) -> (i32, i32) {
    %c0_i32 = arith.constant 0 : i32
    %c0_i32_0 = arith.constant 0 : i32
    %c0_i32_1 = arith.constant 0 : i32
    return %c0_i32, %c0_i32_0 : i32, i32
  }
  func.func @transform_2(%arg0: i32) -> (i32, i32) {
    %c0_i32 = arith.constant 0 : i32
    %c0_i32_0 = arith.constant 0 : i32
    %c0_i32_1 = arith.constant 0 : i32
    return %c0_i32, %c0_i32_0 : i32, i32
  }
  func.func @transform_3(%arg0: i32) -> (i32, i32, i32) {
    %c0_i32 = arith.constant 0 : i32
    %c0_i32_0 = arith.constant 0 : i32
    %c0_i32_1 = arith.constant 0 : i32
    return %arg0, %c0_i32, %c0_i32_0 : i32, i32, i32
  }
  func.func @transform_4(%arg0: i32) -> (i32, i32, i32) {
    %c0_i32 = arith.constant 0 : i32
    %c0_i32_0 = arith.constant 0 : i32
    %c0_i32_1 = arith.constant 0 : i32
    return %arg0, %c0_i32, %c0_i32_0 : i32, i32, i32
  }
}

module attributes {stable_mosaic.version = 11 : i64} {
  func.func @_fuse_post_kernel(%arg0: i32, %arg1: memref<1x16x256xf32, #tpu.memory_space<vmem>>, %arg2: memref<1x16x256xf32, #tpu.memory_space<vmem>>, %arg3: memref<1x16x1xf32, #tpu.memory_space<vmem>>, %arg4: memref<2x49xf32, #tpu.memory_space<smem>>, %arg5: memref<16x144xf32, #tpu.memory_space<vmem>>, %arg6: memref<16x1xf32, #tpu.memory_space<vmem>>, %arg7: memref<1x16x256xf32, #tpu.memory_space<vmem>>) attributes {dimension_semantics = [#tpu.dimension_semantics<parallel>], iteration_bounds = array<i64: 2>, scalar_prefetch = 0 : i64, scratch_operands = 0 : i64, tpu.core_type = #tpu.core_type<tc>, window_params = [{transform_indices = @transform_0, window_bounds = array<i64: 1, 16, 256>}, {transform_indices = @transform_1, window_bounds = array<i64: 1, 16, 256>}, {transform_indices = @transform_2, window_bounds = array<i64: 1, 16, 1>}, {transform_indices = @transform_3, window_bounds = array<i64: 2, 49>}, {pipeline_mode = #tpu.pipeline_mode<synchronous>, transform_indices = @transform_4, window_bounds = array<i64: 16, 144>}, {pipeline_mode = #tpu.pipeline_mode<synchronous>, transform_indices = @transform_5, window_bounds = array<i64: 16, 1>}, {transform_indices = @transform_6, window_bounds = array<i64: 1, 16, 256>}]} {
    %c0 = arith.constant 0 : index
    %c0_0 = arith.constant 0 : index
    %c0_1 = arith.constant 0 : index
    %0 = vector.load %arg1[%c0, %c0_0, %c0_1] : memref<1x16x256xf32, #tpu.memory_space<vmem>>, vector<1x16x256xf32>
    %1 = vector.shape_cast %0 : vector<1x16x256xf32> to vector<16x256xf32>
    %c0_2 = arith.constant 0 : index
    %c0_3 = arith.constant 0 : index
    %c0_4 = arith.constant 0 : index
    %2 = vector.load %arg2[%c0_2, %c0_3, %c0_4] : memref<1x16x256xf32, #tpu.memory_space<vmem>>, vector<1x16x256xf32>
    %3 = vector.shape_cast %2 : vector<1x16x256xf32> to vector<16x256xf32>
    %c0_5 = arith.constant 0 : index
    %c0_6 = arith.constant 0 : index
    %c0_7 = arith.constant 0 : index
    %4 = vector.load %arg3[%c0_5, %c0_6, %c0_7] : memref<1x16x1xf32, #tpu.memory_space<vmem>>, vector<1x16x1xf32>
    %5 = vector.shape_cast %4 : vector<1x16x1xf32> to vector<16x1xf32>
    %6 = tpu.iota {dimensions = array<i32: 1>} : vector<1x256xi32>
    %c16_i32 = arith.constant 16 : i32
    %c0_i32 = arith.constant 0 : i32
    %7 = arith.cmpi eq, %c16_i32, %c0_i32 : i32
    %c1_i32 = arith.constant 1 : i32
    %8 = arith.select %7, %c1_i32, %c16_i32 : i32
    %9 = vector.broadcast %8 : i32 to vector<1x256xi32>
    %10 = arith.remsi %6, %9 : vector<1x256xi32>
    %c0_i32_8 = arith.constant 0 : i32
    %11 = vector.broadcast %c0_i32_8 : i32 to vector<1x256xi32>
    %12 = arith.cmpi ne, %10, %11 : vector<1x256xi32>
    %c0_i32_9 = arith.constant 0 : i32
    %13 = vector.broadcast %c0_i32_9 : i32 to vector<1x256xi32>
    %14 = arith.cmpi slt, %10, %13 : vector<1x256xi32>
    %c0_i32_10 = arith.constant 0 : i32
    %15 = arith.cmpi slt, %8, %c0_i32_10 : i32
    %16 = vector.broadcast %15 : i1 to vector<1x256xi1>
    %17 = vector.broadcast %16 : vector<1x256xi1> to vector<1x256xi1>
    %18 = arith.xori %14, %17 : vector<1x256xi1>
    %19 = arith.andi %18, %12 : vector<1x256xi1>
    %20 = vector.broadcast %8 : i32 to vector<1x256xi32>
    %21 = arith.addi %10, %20 : vector<1x256xi32>
    %22 = arith.select %19, %21, %10 : vector<1x256xi1>, vector<1x256xi32>
    %c-3_i32 = arith.constant -3 : i32
    %23 = vector.broadcast %c-3_i32 : i32 to vector<1x256xi32>
    %24 = arith.addi %22, %23 : vector<1x256xi32>
    %c0_i32_11 = arith.constant 0 : i32
    %25 = vector.broadcast %c0_i32_11 : i32 to vector<1x256xi32>
    %26 = arith.cmpi sge, %24, %25 : vector<1x256xi32>
    %c-3_i32_12 = arith.constant -3 : i32
    %27 = vector.broadcast %c-3_i32_12 : i32 to vector<1x256xi32>
    %28 = arith.addi %22, %27 : vector<1x256xi32>
    %c16_i32_13 = arith.constant 16 : i32
    %29 = vector.broadcast %c16_i32_13 : i32 to vector<1x256xi32>
    %30 = arith.cmpi slt, %28, %29 : vector<1x256xi32>
    %31 = arith.andi %26, %30 : vector<1x256xi1>
    %cst = arith.constant 1.000000e+00 : f32
    %cst_14 = arith.constant 0.000000e+00 : f32
    %32 = vector.broadcast %cst : f32 to vector<1x256xf32>
    %33 = vector.broadcast %cst_14 : f32 to vector<1x256xf32>
    %34 = arith.select %31, %32, %33 : vector<1x256xi1>, vector<1x256xf32>
    %c-2_i32 = arith.constant -2 : i32
    %35 = vector.broadcast %c-2_i32 : i32 to vector<1x256xi32>
    %36 = arith.addi %22, %35 : vector<1x256xi32>
    %c0_i32_15 = arith.constant 0 : i32
    %37 = vector.broadcast %c0_i32_15 : i32 to vector<1x256xi32>
    %38 = arith.cmpi sge, %36, %37 : vector<1x256xi32>
    %c-2_i32_16 = arith.constant -2 : i32
    %39 = vector.broadcast %c-2_i32_16 : i32 to vector<1x256xi32>
    %40 = arith.addi %22, %39 : vector<1x256xi32>
    %c16_i32_17 = arith.constant 16 : i32
    %41 = vector.broadcast %c16_i32_17 : i32 to vector<1x256xi32>
    %42 = arith.cmpi slt, %40, %41 : vector<1x256xi32>
    %43 = arith.andi %38, %42 : vector<1x256xi1>
    %cst_18 = arith.constant 1.000000e+00 : f32
    %cst_19 = arith.constant 0.000000e+00 : f32
    %44 = vector.broadcast %cst_18 : f32 to vector<1x256xf32>
    %45 = vector.broadcast %cst_19 : f32 to vector<1x256xf32>
    %46 = arith.select %43, %44, %45 : vector<1x256xi1>, vector<1x256xf32>
    %c-1_i32 = arith.constant -1 : i32
    %47 = vector.broadcast %c-1_i32 : i32 to vector<1x256xi32>
    %48 = arith.addi %22, %47 : vector<1x256xi32>
    %c0_i32_20 = arith.constant 0 : i32
    %49 = vector.broadcast %c0_i32_20 : i32 to vector<1x256xi32>
    %50 = arith.cmpi sge, %48, %49 : vector<1x256xi32>
    %c-1_i32_21 = arith.constant -1 : i32
    %51 = vector.broadcast %c-1_i32_21 : i32 to vector<1x256xi32>
    %52 = arith.addi %22, %51 : vector<1x256xi32>
    %c16_i32_22 = arith.constant 16 : i32
    %53 = vector.broadcast %c16_i32_22 : i32 to vector<1x256xi32>
    %54 = arith.cmpi slt, %52, %53 : vector<1x256xi32>
    %55 = arith.andi %50, %54 : vector<1x256xi1>
    %cst_23 = arith.constant 1.000000e+00 : f32
    %cst_24 = arith.constant 0.000000e+00 : f32
    %56 = vector.broadcast %cst_23 : f32 to vector<1x256xf32>
    %57 = vector.broadcast %cst_24 : f32 to vector<1x256xf32>
    %58 = arith.select %55, %56, %57 : vector<1x256xi1>, vector<1x256xf32>
    %c0_i32_25 = arith.constant 0 : i32
    %59 = vector.broadcast %c0_i32_25 : i32 to vector<1x256xi32>
    %60 = arith.addi %22, %59 : vector<1x256xi32>
    %c0_i32_26 = arith.constant 0 : i32
    %61 = vector.broadcast %c0_i32_26 : i32 to vector<1x256xi32>
    %62 = arith.cmpi sge, %60, %61 : vector<1x256xi32>
    %c0_i32_27 = arith.constant 0 : i32
    %63 = vector.broadcast %c0_i32_27 : i32 to vector<1x256xi32>
    %64 = arith.addi %22, %63 : vector<1x256xi32>
    %c16_i32_28 = arith.constant 16 : i32
    %65 = vector.broadcast %c16_i32_28 : i32 to vector<1x256xi32>
    %66 = arith.cmpi slt, %64, %65 : vector<1x256xi32>
    %67 = arith.andi %62, %66 : vector<1x256xi1>
    %cst_29 = arith.constant 1.000000e+00 : f32
    %cst_30 = arith.constant 0.000000e+00 : f32
    %68 = vector.broadcast %cst_29 : f32 to vector<1x256xf32>
    %69 = vector.broadcast %cst_30 : f32 to vector<1x256xf32>
    %70 = arith.select %67, %68, %69 : vector<1x256xi1>, vector<1x256xf32>
    %c1_i32_31 = arith.constant 1 : i32
    %71 = vector.broadcast %c1_i32_31 : i32 to vector<1x256xi32>
    %72 = arith.addi %22, %71 : vector<1x256xi32>
    %c0_i32_32 = arith.constant 0 : i32
    %73 = vector.broadcast %c0_i32_32 : i32 to vector<1x256xi32>
    %74 = arith.cmpi sge, %72, %73 : vector<1x256xi32>
    %c1_i32_33 = arith.constant 1 : i32
    %75 = vector.broadcast %c1_i32_33 : i32 to vector<1x256xi32>
    %76 = arith.addi %22, %75 : vector<1x256xi32>
    %c16_i32_34 = arith.constant 16 : i32
    %77 = vector.broadcast %c16_i32_34 : i32 to vector<1x256xi32>
    %78 = arith.cmpi slt, %76, %77 : vector<1x256xi32>
    %79 = arith.andi %74, %78 : vector<1x256xi1>
    %cst_35 = arith.constant 1.000000e+00 : f32
    %cst_36 = arith.constant 0.000000e+00 : f32
    %80 = vector.broadcast %cst_35 : f32 to vector<1x256xf32>
    %81 = vector.broadcast %cst_36 : f32 to vector<1x256xf32>
    %82 = arith.select %79, %80, %81 : vector<1x256xi1>, vector<1x256xf32>
    %c2_i32 = arith.constant 2 : i32
    %83 = vector.broadcast %c2_i32 : i32 to vector<1x256xi32>
    %84 = arith.addi %22, %83 : vector<1x256xi32>
    %c0_i32_37 = arith.constant 0 : i32
    %85 = vector.broadcast %c0_i32_37 : i32 to vector<1x256xi32>
    %86 = arith.cmpi sge, %84, %85 : vector<1x256xi32>
    %c2_i32_38 = arith.constant 2 : i32
    %87 = vector.broadcast %c2_i32_38 : i32 to vector<1x256xi32>
    %88 = arith.addi %22, %87 : vector<1x256xi32>
    %c16_i32_39 = arith.constant 16 : i32
    %89 = vector.broadcast %c16_i32_39 : i32 to vector<1x256xi32>
    %90 = arith.cmpi slt, %88, %89 : vector<1x256xi32>
    %91 = arith.andi %86, %90 : vector<1x256xi1>
    %cst_40 = arith.constant 1.000000e+00 : f32
    %cst_41 = arith.constant 0.000000e+00 : f32
    %92 = vector.broadcast %cst_40 : f32 to vector<1x256xf32>
    %93 = vector.broadcast %cst_41 : f32 to vector<1x256xf32>
    %94 = arith.select %91, %92, %93 : vector<1x256xi1>, vector<1x256xf32>
    %c3_i32 = arith.constant 3 : i32
    %95 = vector.broadcast %c3_i32 : i32 to vector<1x256xi32>
    %96 = arith.addi %22, %95 : vector<1x256xi32>
    %c0_i32_42 = arith.constant 0 : i32
    %97 = vector.broadcast %c0_i32_42 : i32 to vector<1x256xi32>
    %98 = arith.cmpi sge, %96, %97 : vector<1x256xi32>
    %c3_i32_43 = arith.constant 3 : i32
    %99 = vector.broadcast %c3_i32_43 : i32 to vector<1x256xi32>
    %100 = arith.addi %22, %99 : vector<1x256xi32>
    %c16_i32_44 = arith.constant 16 : i32
    %101 = vector.broadcast %c16_i32_44 : i32 to vector<1x256xi32>
    %102 = arith.cmpi slt, %100, %101 : vector<1x256xi32>
    %103 = arith.andi %98, %102 : vector<1x256xi1>
    %cst_45 = arith.constant 1.000000e+00 : f32
    %cst_46 = arith.constant 0.000000e+00 : f32
    %104 = vector.broadcast %cst_45 : f32 to vector<1x256xf32>
    %105 = vector.broadcast %cst_46 : f32 to vector<1x256xf32>
    %106 = arith.select %103, %104, %105 : vector<1x256xi1>, vector<1x256xf32>
    %cst_47 = arith.constant dense<0.000000e+00> : vector<256xf32>
    %107 = vector.multi_reduction <add>, %1, %cst_47 [0] : vector<16x256xf32> to vector<256xf32>
    %108 = vector.shape_cast %107 : vector<256xf32> to vector<1x256xf32>
    %cst_48 = arith.constant 1.600000e+01 : f32
    %109 = vector.broadcast %cst_48 : f32 to vector<1x256xf32>
    %110 = arith.divf %108, %109 : vector<1x256xf32>
    %cst_49 = arith.constant dense<0xFF800000> : vector<256xf32>
    %111 = vector.multi_reduction <maximumf>, %1, %cst_49 [0] : vector<16x256xf32> to vector<256xf32>
    %112 = vector.shape_cast %111 : vector<256xf32> to vector<1x256xf32>
    %cst_50 = arith.constant 0.000000e+00 : f32
    %113 = vector.broadcast %cst_50 : f32 to vector<1x128xf32>
    %114 = tpu.concatenate %113, %110, %113 in 1 : vector<1x128xf32>, vector<1x256xf32>, vector<1x128xf32> -> vector<1x512xf32>
    %115 = tpu.concatenate %113, %112, %113 in 1 : vector<1x128xf32>, vector<1x256xf32>, vector<1x128xf32> -> vector<1x512xf32>
    %cst_51 = arith.constant 0.000000e+00 : f32
    %116 = vector.broadcast %cst_51 : f32 to vector<1x256xf32>
    %c0_52 = arith.constant 0 : index
    %c0_53 = arith.constant 0 : index
    %117 = memref.load %arg4[%c0_52, %c0_53] : memref<2x49xf32, #tpu.memory_space<smem>>
    %118 = vector.extract_strided_slice %114 {offsets = [0, 77], sizes = [1, 256], strides = [1, 1]} : vector<1x512xf32> to vector<1x256xf32>
    %119 = vector.broadcast %117 : f32 to vector<1x256xf32>
    %120 = arith.mulf %119, %118 : vector<1x256xf32>
    %c1 = arith.constant 1 : index
    %c0_54 = arith.constant 0 : index
    %121 = memref.load %arg4[%c1, %c0_54] : memref<2x49xf32, #tpu.memory_space<smem>>
    %122 = vector.extract_strided_slice %115 {offsets = [0, 77], sizes = [1, 256], strides = [1, 1]} : vector<1x512xf32> to vector<1x256xf32>
    %123 = vector.broadcast %121 : f32 to vector<1x256xf32>
    %124 = arith.mulf %123, %122 : vector<1x256xf32>
    %125 = arith.addf %120, %124 : vector<1x256xf32>
    %126 = arith.mulf %125, %34 : vector<1x256xf32>
    %127 = arith.addf %116, %126 : vector<1x256xf32>
    %c0_55 = arith.constant 0 : index
    %c1_56 = arith.constant 1 : index
    %128 = memref.load %arg4[%c0_55, %c1_56] : memref<2x49xf32, #tpu.memory_space<smem>>
    %129 = vector.extract_strided_slice %114 {offsets = [0, 78], sizes = [1, 256], strides = [1, 1]} : vector<1x512xf32> to vector<1x256xf32>
    %130 = vector.broadcast %128 : f32 to vector<1x256xf32>
    %131 = arith.mulf %130, %129 : vector<1x256xf32>
    %c1_57 = arith.constant 1 : index
    %c1_58 = arith.constant 1 : index
    %132 = memref.load %arg4[%c1_57, %c1_58] : memref<2x49xf32, #tpu.memory_space<smem>>
    %133 = vector.extract_strided_slice %115 {offsets = [0, 78], sizes = [1, 256], strides = [1, 1]} : vector<1x512xf32> to vector<1x256xf32>
    %134 = vector.broadcast %132 : f32 to vector<1x256xf32>
    %135 = arith.mulf %134, %133 : vector<1x256xf32>
    %136 = arith.addf %131, %135 : vector<1x256xf32>
    %137 = arith.mulf %136, %46 : vector<1x256xf32>
    %138 = arith.addf %127, %137 : vector<1x256xf32>
    %c0_59 = arith.constant 0 : index
    %c2 = arith.constant 2 : index
    %139 = memref.load %arg4[%c0_59, %c2] : memref<2x49xf32, #tpu.memory_space<smem>>
    %140 = vector.extract_strided_slice %114 {offsets = [0, 79], sizes = [1, 256], strides = [1, 1]} : vector<1x512xf32> to vector<1x256xf32>
    %141 = vector.broadcast %139 : f32 to vector<1x256xf32>
    %142 = arith.mulf %141, %140 : vector<1x256xf32>
    %c1_60 = arith.constant 1 : index
    %c2_61 = arith.constant 2 : index
    %143 = memref.load %arg4[%c1_60, %c2_61] : memref<2x49xf32, #tpu.memory_space<smem>>
    %144 = vector.extract_strided_slice %115 {offsets = [0, 79], sizes = [1, 256], strides = [1, 1]} : vector<1x512xf32> to vector<1x256xf32>
    %145 = vector.broadcast %143 : f32 to vector<1x256xf32>
    %146 = arith.mulf %145, %144 : vector<1x256xf32>
    %147 = arith.addf %142, %146 : vector<1x256xf32>
    %148 = arith.mulf %147, %58 : vector<1x256xf32>
    %149 = arith.addf %138, %148 : vector<1x256xf32>
    %c0_62 = arith.constant 0 : index
    %c3 = arith.constant 3 : index
    %150 = memref.load %arg4[%c0_62, %c3] : memref<2x49xf32, #tpu.memory_space<smem>>
    %151 = vector.extract_strided_slice %114 {offsets = [0, 80], sizes = [1, 256], strides = [1, 1]} : vector<1x512xf32> to vector<1x256xf32>
    %152 = vector.broadcast %150 : f32 to vector<1x256xf32>
    %153 = arith.mulf %152, %151 : vector<1x256xf32>
    %c1_63 = arith.constant 1 : index
    %c3_64 = arith.constant 3 : index
    %154 = memref.load %arg4[%c1_63, %c3_64] : memref<2x49xf32, #tpu.memory_space<smem>>
    %155 = vector.extract_strided_slice %115 {offsets = [0, 80], sizes = [1, 256], strides = [1, 1]} : vector<1x512xf32> to vector<1x256xf32>
    %156 = vector.broadcast %154 : f32 to vector<1x256xf32>
    %157 = arith.mulf %156, %155 : vector<1x256xf32>
    %158 = arith.addf %153, %157 : vector<1x256xf32>
    %159 = arith.mulf %158, %70 : vector<1x256xf32>
    %160 = arith.addf %149, %159 : vector<1x256xf32>
    %c0_65 = arith.constant 0 : index
    %c4 = arith.constant 4 : index
    %161 = memref.load %arg4[%c0_65, %c4] : memref<2x49xf32, #tpu.memory_space<smem>>
    %162 = vector.extract_strided_slice %114 {offsets = [0, 81], sizes = [1, 256], strides = [1, 1]} : vector<1x512xf32> to vector<1x256xf32>
    %163 = vector.broadcast %161 : f32 to vector<1x256xf32>
    %164 = arith.mulf %163, %162 : vector<1x256xf32>
    %c1_66 = arith.constant 1 : index
    %c4_67 = arith.constant 4 : index
    %165 = memref.load %arg4[%c1_66, %c4_67] : memref<2x49xf32, #tpu.memory_space<smem>>
    %166 = vector.extract_strided_slice %115 {offsets = [0, 81], sizes = [1, 256], strides = [1, 1]} : vector<1x512xf32> to vector<1x256xf32>
    %167 = vector.broadcast %165 : f32 to vector<1x256xf32>
    %168 = arith.mulf %167, %166 : vector<1x256xf32>
    %169 = arith.addf %164, %168 : vector<1x256xf32>
    %170 = arith.mulf %169, %82 : vector<1x256xf32>
    %171 = arith.addf %160, %170 : vector<1x256xf32>
    %c0_68 = arith.constant 0 : index
    %c5 = arith.constant 5 : index
    %172 = memref.load %arg4[%c0_68, %c5] : memref<2x49xf32, #tpu.memory_space<smem>>
    %173 = vector.extract_strided_slice %114 {offsets = [0, 82], sizes = [1, 256], strides = [1, 1]} : vector<1x512xf32> to vector<1x256xf32>
    %174 = vector.broadcast %172 : f32 to vector<1x256xf32>
    %175 = arith.mulf %174, %173 : vector<1x256xf32>
    %c1_69 = arith.constant 1 : index
    %c5_70 = arith.constant 5 : index
    %176 = memref.load %arg4[%c1_69, %c5_70] : memref<2x49xf32, #tpu.memory_space<smem>>
    %177 = vector.extract_strided_slice %115 {offsets = [0, 82], sizes = [1, 256], strides = [1, 1]} : vector<1x512xf32> to vector<1x256xf32>
    %178 = vector.broadcast %176 : f32 to vector<1x256xf32>
    %179 = arith.mulf %178, %177 : vector<1x256xf32>
    %180 = arith.addf %175, %179 : vector<1x256xf32>
    %181 = arith.mulf %180, %94 : vector<1x256xf32>
    %182 = arith.addf %171, %181 : vector<1x256xf32>
    %c0_71 = arith.constant 0 : index
    %c6 = arith.constant 6 : index
    %183 = memref.load %arg4[%c0_71, %c6] : memref<2x49xf32, #tpu.memory_space<smem>>
    %184 = vector.extract_strided_slice %114 {offsets = [0, 83], sizes = [1, 256], strides = [1, 1]} : vector<1x512xf32> to vector<1x256xf32>
    %185 = vector.broadcast %183 : f32 to vector<1x256xf32>
    %186 = arith.mulf %185, %184 : vector<1x256xf32>
    %c1_72 = arith.constant 1 : index
    %c6_73 = arith.constant 6 : index
    %187 = memref.load %arg4[%c1_72, %c6_73] : memref<2x49xf32, #tpu.memory_space<smem>>
    %188 = vector.extract_strided_slice %115 {offsets = [0, 83], sizes = [1, 256], strides = [1, 1]} : vector<1x512xf32> to vector<1x256xf32>
    %189 = vector.broadcast %187 : f32 to vector<1x256xf32>
    %190 = arith.mulf %189, %188 : vector<1x256xf32>
    %191 = arith.addf %186, %190 : vector<1x256xf32>
    %192 = arith.mulf %191, %106 : vector<1x256xf32>
    %193 = arith.addf %182, %192 : vector<1x256xf32>
    %c0_74 = arith.constant 0 : index
    %c7 = arith.constant 7 : index
    %194 = memref.load %arg4[%c0_74, %c7] : memref<2x49xf32, #tpu.memory_space<smem>>
    %195 = vector.extract_strided_slice %114 {offsets = [0, 93], sizes = [1, 256], strides = [1, 1]} : vector<1x512xf32> to vector<1x256xf32>
    %196 = vector.broadcast %194 : f32 to vector<1x256xf32>
    %197 = arith.mulf %196, %195 : vector<1x256xf32>
    %c1_75 = arith.constant 1 : index
    %c7_76 = arith.constant 7 : index
    %198 = memref.load %arg4[%c1_75, %c7_76] : memref<2x49xf32, #tpu.memory_space<smem>>
    %199 = vector.extract_strided_slice %115 {offsets = [0, 93], sizes = [1, 256], strides = [1, 1]} : vector<1x512xf32> to vector<1x256xf32>
    %200 = vector.broadcast %198 : f32 to vector<1x256xf32>
    %201 = arith.mulf %200, %199 : vector<1x256xf32>
    %202 = arith.addf %197, %201 : vector<1x256xf32>
    %203 = arith.mulf %202, %34 : vector<1x256xf32>
    %204 = arith.addf %193, %203 : vector<1x256xf32>
    %c0_77 = arith.constant 0 : index
    %c8 = arith.constant 8 : index
    %205 = memref.load %arg4[%c0_77, %c8] : memref<2x49xf32, #tpu.memory_space<smem>>
    %206 = vector.extract_strided_slice %114 {offsets = [0, 94], sizes = [1, 256], strides = [1, 1]} : vector<1x512xf32> to vector<1x256xf32>
    %207 = vector.broadcast %205 : f32 to vector<1x256xf32>
    %208 = arith.mulf %207, %206 : vector<1x256xf32>
    %c1_78 = arith.constant 1 : index
    %c8_79 = arith.constant 8 : index
    %209 = memref.load %arg4[%c1_78, %c8_79] : memref<2x49xf32, #tpu.memory_space<smem>>
    %210 = vector.extract_strided_slice %115 {offsets = [0, 94], sizes = [1, 256], strides = [1, 1]} : vector<1x512xf32> to vector<1x256xf32>
    %211 = vector.broadcast %209 : f32 to vector<1x256xf32>
    %212 = arith.mulf %211, %210 : vector<1x256xf32>
    %213 = arith.addf %208, %212 : vector<1x256xf32>
    %214 = arith.mulf %213, %46 : vector<1x256xf32>
    %215 = arith.addf %204, %214 : vector<1x256xf32>
    %c0_80 = arith.constant 0 : index
    %c9 = arith.constant 9 : index
    %216 = memref.load %arg4[%c0_80, %c9] : memref<2x49xf32, #tpu.memory_space<smem>>
    %217 = vector.extract_strided_slice %114 {offsets = [0, 95], sizes = [1, 256], strides = [1, 1]} : vector<1x512xf32> to vector<1x256xf32>
    %218 = vector.broadcast %216 : f32 to vector<1x256xf32>
    %219 = arith.mulf %218, %217 : vector<1x256xf32>
    %c1_81 = arith.constant 1 : index
    %c9_82 = arith.constant 9 : index
    %220 = memref.load %arg4[%c1_81, %c9_82] : memref<2x49xf32, #tpu.memory_space<smem>>
    %221 = vector.extract_strided_slice %115 {offsets = [0, 95], sizes = [1, 256], strides = [1, 1]} : vector<1x512xf32> to vector<1x256xf32>
    %222 = vector.broadcast %220 : f32 to vector<1x256xf32>
    %223 = arith.mulf %222, %221 : vector<1x256xf32>
    %224 = arith.addf %219, %223 : vector<1x256xf32>
    %225 = arith.mulf %224, %58 : vector<1x256xf32>
    %226 = arith.addf %215, %225 : vector<1x256xf32>
    %c0_83 = arith.constant 0 : index
    %c10 = arith.constant 10 : index
    %227 = memref.load %arg4[%c0_83, %c10] : memref<2x49xf32, #tpu.memory_space<smem>>
    %228 = vector.extract_strided_slice %114 {offsets = [0, 96], sizes = [1, 256], strides = [1, 1]} : vector<1x512xf32> to vector<1x256xf32>
    %229 = vector.broadcast %227 : f32 to vector<1x256xf32>
    %230 = arith.mulf %229, %228 : vector<1x256xf32>
    %c1_84 = arith.constant 1 : index
    %c10_85 = arith.constant 10 : index
    %231 = memref.load %arg4[%c1_84, %c10_85] : memref<2x49xf32, #tpu.memory_space<smem>>
    %232 = vector.extract_strided_slice %115 {offsets = [0, 96], sizes = [1, 256], strides = [1, 1]} : vector<1x512xf32> to vector<1x256xf32>
    %233 = vector.broadcast %231 : f32 to vector<1x256xf32>
    %234 = arith.mulf %233, %232 : vector<1x256xf32>
    %235 = arith.addf %230, %234 : vector<1x256xf32>
    %236 = arith.mulf %235, %70 : vector<1x256xf32>
    %237 = arith.addf %226, %236 : vector<1x256xf32>
    %c0_86 = arith.constant 0 : index
    %c11 = arith.constant 11 : index
    %238 = memref.load %arg4[%c0_86, %c11] : memref<2x49xf32, #tpu.memory_space<smem>>
    %239 = vector.extract_strided_slice %114 {offsets = [0, 97], sizes = [1, 256], strides = [1, 1]} : vector<1x512xf32> to vector<1x256xf32>
    %240 = vector.broadcast %238 : f32 to vector<1x256xf32>
    %241 = arith.mulf %240, %239 : vector<1x256xf32>
    %c1_87 = arith.constant 1 : index
    %c11_88 = arith.constant 11 : index
    %242 = memref.load %arg4[%c1_87, %c11_88] : memref<2x49xf32, #tpu.memory_space<smem>>
    %243 = vector.extract_strided_slice %115 {offsets = [0, 97], sizes = [1, 256], strides = [1, 1]} : vector<1x512xf32> to vector<1x256xf32>
    %244 = vector.broadcast %242 : f32 to vector<1x256xf32>
    %245 = arith.mulf %244, %243 : vector<1x256xf32>
    %246 = arith.addf %241, %245 : vector<1x256xf32>
    %247 = arith.mulf %246, %82 : vector<1x256xf32>
    %248 = arith.addf %237, %247 : vector<1x256xf32>
    %c0_89 = arith.constant 0 : index
    %c12 = arith.constant 12 : index
    %249 = memref.load %arg4[%c0_89, %c12] : memref<2x49xf32, #tpu.memory_space<smem>>
    %250 = vector.extract_strided_slice %114 {offsets = [0, 98], sizes = [1, 256], strides = [1, 1]} : vector<1x512xf32> to vector<1x256xf32>
    %251 = vector.broadcast %249 : f32 to vector<1x256xf32>
    %252 = arith.mulf %251, %250 : vector<1x256xf32>
    %c1_90 = arith.constant 1 : index
    %c12_91 = arith.constant 12 : index
    %253 = memref.load %arg4[%c1_90, %c12_91] : memref<2x49xf32, #tpu.memory_space<smem>>
    %254 = vector.extract_strided_slice %115 {offsets = [0, 98], sizes = [1, 256], strides = [1, 1]} : vector<1x512xf32> to vector<1x256xf32>
    %255 = vector.broadcast %253 : f32 to vector<1x256xf32>
    %256 = arith.mulf %255, %254 : vector<1x256xf32>
    %257 = arith.addf %252, %256 : vector<1x256xf32>
    %258 = arith.mulf %257, %94 : vector<1x256xf32>
    %259 = arith.addf %248, %258 : vector<1x256xf32>
    %c0_92 = arith.constant 0 : index
    %c13 = arith.constant 13 : index
    %260 = memref.load %arg4[%c0_92, %c13] : memref<2x49xf32, #tpu.memory_space<smem>>
    %261 = vector.extract_strided_slice %114 {offsets = [0, 99], sizes = [1, 256], strides = [1, 1]} : vector<1x512xf32> to vector<1x256xf32>
    %262 = vector.broadcast %260 : f32 to vector<1x256xf32>
    %263 = arith.mulf %262, %261 : vector<1x256xf32>
    %c1_93 = arith.constant 1 : index
    %c13_94 = arith.constant 13 : index
    %264 = memref.load %arg4[%c1_93, %c13_94] : memref<2x49xf32, #tpu.memory_space<smem>>
    %265 = vector.extract_strided_slice %115 {offsets = [0, 99], sizes = [1, 256], strides = [1, 1]} : vector<1x512xf32> to vector<1x256xf32>
    %266 = vector.broadcast %264 : f32 to vector<1x256xf32>
    %267 = arith.mulf %266, %265 : vector<1x256xf32>
    %268 = arith.addf %263, %267 : vector<1x256xf32>
    %269 = arith.mulf %268, %106 : vector<1x256xf32>
    %270 = arith.addf %259, %269 : vector<1x256xf32>
    %c0_95 = arith.constant 0 : index
    %c14 = arith.constant 14 : index
    %271 = memref.load %arg4[%c0_95, %c14] : memref<2x49xf32, #tpu.memory_space<smem>>
    %272 = vector.extract_strided_slice %114 {offsets = [0, 109], sizes = [1, 256], strides = [1, 1]} : vector<1x512xf32> to vector<1x256xf32>
    %273 = vector.broadcast %271 : f32 to vector<1x256xf32>
    %274 = arith.mulf %273, %272 : vector<1x256xf32>
    %c1_96 = arith.constant 1 : index
    %c14_97 = arith.constant 14 : index
    %275 = memref.load %arg4[%c1_96, %c14_97] : memref<2x49xf32, #tpu.memory_space<smem>>
    %276 = vector.extract_strided_slice %115 {offsets = [0, 109], sizes = [1, 256], strides = [1, 1]} : vector<1x512xf32> to vector<1x256xf32>
    %277 = vector.broadcast %275 : f32 to vector<1x256xf32>
    %278 = arith.mulf %277, %276 : vector<1x256xf32>
    %279 = arith.addf %274, %278 : vector<1x256xf32>
    %280 = arith.mulf %279, %34 : vector<1x256xf32>
    %281 = arith.addf %270, %280 : vector<1x256xf32>
    %c0_98 = arith.constant 0 : index
    %c15 = arith.constant 15 : index
    %282 = memref.load %arg4[%c0_98, %c15] : memref<2x49xf32, #tpu.memory_space<smem>>
    %283 = vector.extract_strided_slice %114 {offsets = [0, 110], sizes = [1, 256], strides = [1, 1]} : vector<1x512xf32> to vector<1x256xf32>
    %284 = vector.broadcast %282 : f32 to vector<1x256xf32>
    %285 = arith.mulf %284, %283 : vector<1x256xf32>
    %c1_99 = arith.constant 1 : index
    %c15_100 = arith.constant 15 : index
    %286 = memref.load %arg4[%c1_99, %c15_100] : memref<2x49xf32, #tpu.memory_space<smem>>
    %287 = vector.extract_strided_slice %115 {offsets = [0, 110], sizes = [1, 256], strides = [1, 1]} : vector<1x512xf32> to vector<1x256xf32>
    %288 = vector.broadcast %286 : f32 to vector<1x256xf32>
    %289 = arith.mulf %288, %287 : vector<1x256xf32>
    %290 = arith.addf %285, %289 : vector<1x256xf32>
    %291 = arith.mulf %290, %46 : vector<1x256xf32>
    %292 = arith.addf %281, %291 : vector<1x256xf32>
    %c0_101 = arith.constant 0 : index
    %c16 = arith.constant 16 : index
    %293 = memref.load %arg4[%c0_101, %c16] : memref<2x49xf32, #tpu.memory_space<smem>>
    %294 = vector.extract_strided_slice %114 {offsets = [0, 111], sizes = [1, 256], strides = [1, 1]} : vector<1x512xf32> to vector<1x256xf32>
    %295 = vector.broadcast %293 : f32 to vector<1x256xf32>
    %296 = arith.mulf %295, %294 : vector<1x256xf32>
    %c1_102 = arith.constant 1 : index
    %c16_103 = arith.constant 16 : index
    %297 = memref.load %arg4[%c1_102, %c16_103] : memref<2x49xf32, #tpu.memory_space<smem>>
    %298 = vector.extract_strided_slice %115 {offsets = [0, 111], sizes = [1, 256], strides = [1, 1]} : vector<1x512xf32> to vector<1x256xf32>
    %299 = vector.broadcast %297 : f32 to vector<1x256xf32>
    %300 = arith.mulf %299, %298 : vector<1x256xf32>
    %301 = arith.addf %296, %300 : vector<1x256xf32>
    %302 = arith.mulf %301, %58 : vector<1x256xf32>
    %303 = arith.addf %292, %302 : vector<1x256xf32>
    %c0_104 = arith.constant 0 : index
    %c17 = arith.constant 17 : index
    %304 = memref.load %arg4[%c0_104, %c17] : memref<2x49xf32, #tpu.memory_space<smem>>
    %305 = vector.extract_strided_slice %114 {offsets = [0, 112], sizes = [1, 256], strides = [1, 1]} : vector<1x512xf32> to vector<1x256xf32>
    %306 = vector.broadcast %304 : f32 to vector<1x256xf32>
    %307 = arith.mulf %306, %305 : vector<1x256xf32>
    %c1_105 = arith.constant 1 : index
    %c17_106 = arith.constant 17 : index
    %308 = memref.load %arg4[%c1_105, %c17_106] : memref<2x49xf32, #tpu.memory_space<smem>>
    %309 = vector.extract_strided_slice %115 {offsets = [0, 112], sizes = [1, 256], strides = [1, 1]} : vector<1x512xf32> to vector<1x256xf32>
    %310 = vector.broadcast %308 : f32 to vector<1x256xf32>
    %311 = arith.mulf %310, %309 : vector<1x256xf32>
    %312 = arith.addf %307, %311 : vector<1x256xf32>
    %313 = arith.mulf %312, %70 : vector<1x256xf32>
    %314 = arith.addf %303, %313 : vector<1x256xf32>
    %c0_107 = arith.constant 0 : index
    %c18 = arith.constant 18 : index
    %315 = memref.load %arg4[%c0_107, %c18] : memref<2x49xf32, #tpu.memory_space<smem>>
    %316 = vector.extract_strided_slice %114 {offsets = [0, 113], sizes = [1, 256], strides = [1, 1]} : vector<1x512xf32> to vector<1x256xf32>
    %317 = vector.broadcast %315 : f32 to vector<1x256xf32>
    %318 = arith.mulf %317, %316 : vector<1x256xf32>
    %c1_108 = arith.constant 1 : index
    %c18_109 = arith.constant 18 : index
    %319 = memref.load %arg4[%c1_108, %c18_109] : memref<2x49xf32, #tpu.memory_space<smem>>
    %320 = vector.extract_strided_slice %115 {offsets = [0, 113], sizes = [1, 256], strides = [1, 1]} : vector<1x512xf32> to vector<1x256xf32>
    %321 = vector.broadcast %319 : f32 to vector<1x256xf32>
    %322 = arith.mulf %321, %320 : vector<1x256xf32>
    %323 = arith.addf %318, %322 : vector<1x256xf32>
    %324 = arith.mulf %323, %82 : vector<1x256xf32>
    %325 = arith.addf %314, %324 : vector<1x256xf32>
    %c0_110 = arith.constant 0 : index
    %c19 = arith.constant 19 : index
    %326 = memref.load %arg4[%c0_110, %c19] : memref<2x49xf32, #tpu.memory_space<smem>>
    %327 = vector.extract_strided_slice %114 {offsets = [0, 114], sizes = [1, 256], strides = [1, 1]} : vector<1x512xf32> to vector<1x256xf32>
    %328 = vector.broadcast %326 : f32 to vector<1x256xf32>
    %329 = arith.mulf %328, %327 : vector<1x256xf32>
    %c1_111 = arith.constant 1 : index
    %c19_112 = arith.constant 19 : index
    %330 = memref.load %arg4[%c1_111, %c19_112] : memref<2x49xf32, #tpu.memory_space<smem>>
    %331 = vector.extract_strided_slice %115 {offsets = [0, 114], sizes = [1, 256], strides = [1, 1]} : vector<1x512xf32> to vector<1x256xf32>
    %332 = vector.broadcast %330 : f32 to vector<1x256xf32>
    %333 = arith.mulf %332, %331 : vector<1x256xf32>
    %334 = arith.addf %329, %333 : vector<1x256xf32>
    %335 = arith.mulf %334, %94 : vector<1x256xf32>
    %336 = arith.addf %325, %335 : vector<1x256xf32>
    %c0_113 = arith.constant 0 : index
    %c20 = arith.constant 20 : index
    %337 = memref.load %arg4[%c0_113, %c20] : memref<2x49xf32, #tpu.memory_space<smem>>
    %338 = vector.extract_strided_slice %114 {offsets = [0, 115], sizes = [1, 256], strides = [1, 1]} : vector<1x512xf32> to vector<1x256xf32>
    %339 = vector.broadcast %337 : f32 to vector<1x256xf32>
    %340 = arith.mulf %339, %338 : vector<1x256xf32>
    %c1_114 = arith.constant 1 : index
    %c20_115 = arith.constant 20 : index
    %341 = memref.load %arg4[%c1_114, %c20_115] : memref<2x49xf32, #tpu.memory_space<smem>>
    %342 = vector.extract_strided_slice %115 {offsets = [0, 115], sizes = [1, 256], strides = [1, 1]} : vector<1x512xf32> to vector<1x256xf32>
    %343 = vector.broadcast %341 : f32 to vector<1x256xf32>
    %344 = arith.mulf %343, %342 : vector<1x256xf32>
    %345 = arith.addf %340, %344 : vector<1x256xf32>
    %346 = arith.mulf %345, %106 : vector<1x256xf32>
    %347 = arith.addf %336, %346 : vector<1x256xf32>
    %c0_116 = arith.constant 0 : index
    %c21 = arith.constant 21 : index
    %348 = memref.load %arg4[%c0_116, %c21] : memref<2x49xf32, #tpu.memory_space<smem>>
    %349 = vector.extract_strided_slice %114 {offsets = [0, 125], sizes = [1, 256], strides = [1, 1]} : vector<1x512xf32> to vector<1x256xf32>
    %350 = vector.broadcast %348 : f32 to vector<1x256xf32>
    %351 = arith.mulf %350, %349 : vector<1x256xf32>
    %c1_117 = arith.constant 1 : index
    %c21_118 = arith.constant 21 : index
    %352 = memref.load %arg4[%c1_117, %c21_118] : memref<2x49xf32, #tpu.memory_space<smem>>
    %353 = vector.extract_strided_slice %115 {offsets = [0, 125], sizes = [1, 256], strides = [1, 1]} : vector<1x512xf32> to vector<1x256xf32>
    %354 = vector.broadcast %352 : f32 to vector<1x256xf32>
    %355 = arith.mulf %354, %353 : vector<1x256xf32>
    %356 = arith.addf %351, %355 : vector<1x256xf32>
    %357 = arith.mulf %356, %34 : vector<1x256xf32>
    %358 = arith.addf %347, %357 : vector<1x256xf32>
    %c0_119 = arith.constant 0 : index
    %c22 = arith.constant 22 : index
    %359 = memref.load %arg4[%c0_119, %c22] : memref<2x49xf32, #tpu.memory_space<smem>>
    %360 = vector.extract_strided_slice %114 {offsets = [0, 126], sizes = [1, 256], strides = [1, 1]} : vector<1x512xf32> to vector<1x256xf32>
    %361 = vector.broadcast %359 : f32 to vector<1x256xf32>
    %362 = arith.mulf %361, %360 : vector<1x256xf32>
    %c1_120 = arith.constant 1 : index
    %c22_121 = arith.constant 22 : index
    %363 = memref.load %arg4[%c1_120, %c22_121] : memref<2x49xf32, #tpu.memory_space<smem>>
    %364 = vector.extract_strided_slice %115 {offsets = [0, 126], sizes = [1, 256], strides = [1, 1]} : vector<1x512xf32> to vector<1x256xf32>
    %365 = vector.broadcast %363 : f32 to vector<1x256xf32>
    %366 = arith.mulf %365, %364 : vector<1x256xf32>
    %367 = arith.addf %362, %366 : vector<1x256xf32>
    %368 = arith.mulf %367, %46 : vector<1x256xf32>
    %369 = arith.addf %358, %368 : vector<1x256xf32>
    %c0_122 = arith.constant 0 : index
    %c23 = arith.constant 23 : index
    %370 = memref.load %arg4[%c0_122, %c23] : memref<2x49xf32, #tpu.memory_space<smem>>
    %371 = vector.extract_strided_slice %114 {offsets = [0, 127], sizes = [1, 256], strides = [1, 1]} : vector<1x512xf32> to vector<1x256xf32>
    %372 = vector.broadcast %370 : f32 to vector<1x256xf32>
    %373 = arith.mulf %372, %371 : vector<1x256xf32>
    %c1_123 = arith.constant 1 : index
    %c23_124 = arith.constant 23 : index
    %374 = memref.load %arg4[%c1_123, %c23_124] : memref<2x49xf32, #tpu.memory_space<smem>>
    %375 = vector.extract_strided_slice %115 {offsets = [0, 127], sizes = [1, 256], strides = [1, 1]} : vector<1x512xf32> to vector<1x256xf32>
    %376 = vector.broadcast %374 : f32 to vector<1x256xf32>
    %377 = arith.mulf %376, %375 : vector<1x256xf32>
    %378 = arith.addf %373, %377 : vector<1x256xf32>
    %379 = arith.mulf %378, %58 : vector<1x256xf32>
    %380 = arith.addf %369, %379 : vector<1x256xf32>
    %c0_125 = arith.constant 0 : index
    %c24 = arith.constant 24 : index
    %381 = memref.load %arg4[%c0_125, %c24] : memref<2x49xf32, #tpu.memory_space<smem>>
    %382 = vector.extract_strided_slice %114 {offsets = [0, 128], sizes = [1, 256], strides = [1, 1]} : vector<1x512xf32> to vector<1x256xf32>
    %383 = vector.broadcast %381 : f32 to vector<1x256xf32>
    %384 = arith.mulf %383, %382 : vector<1x256xf32>
    %c1_126 = arith.constant 1 : index
    %c24_127 = arith.constant 24 : index
    %385 = memref.load %arg4[%c1_126, %c24_127] : memref<2x49xf32, #tpu.memory_space<smem>>
    %386 = vector.extract_strided_slice %115 {offsets = [0, 128], sizes = [1, 256], strides = [1, 1]} : vector<1x512xf32> to vector<1x256xf32>
    %387 = vector.broadcast %385 : f32 to vector<1x256xf32>
    %388 = arith.mulf %387, %386 : vector<1x256xf32>
    %389 = arith.addf %384, %388 : vector<1x256xf32>
    %390 = arith.mulf %389, %70 : vector<1x256xf32>
    %391 = arith.addf %380, %390 : vector<1x256xf32>
    %c0_128 = arith.constant 0 : index
    %c25 = arith.constant 25 : index
    %392 = memref.load %arg4[%c0_128, %c25] : memref<2x49xf32, #tpu.memory_space<smem>>
    %393 = vector.extract_strided_slice %114 {offsets = [0, 129], sizes = [1, 256], strides = [1, 1]} : vector<1x512xf32> to vector<1x256xf32>
    %394 = vector.broadcast %392 : f32 to vector<1x256xf32>
    %395 = arith.mulf %394, %393 : vector<1x256xf32>
    %c1_129 = arith.constant 1 : index
    %c25_130 = arith.constant 25 : index
    %396 = memref.load %arg4[%c1_129, %c25_130] : memref<2x49xf32, #tpu.memory_space<smem>>
    %397 = vector.extract_strided_slice %115 {offsets = [0, 129], sizes = [1, 256], strides = [1, 1]} : vector<1x512xf32> to vector<1x256xf32>
    %398 = vector.broadcast %396 : f32 to vector<1x256xf32>
    %399 = arith.mulf %398, %397 : vector<1x256xf32>
    %400 = arith.addf %395, %399 : vector<1x256xf32>
    %401 = arith.mulf %400, %82 : vector<1x256xf32>
    %402 = arith.addf %391, %401 : vector<1x256xf32>
    %c0_131 = arith.constant 0 : index
    %c26 = arith.constant 26 : index
    %403 = memref.load %arg4[%c0_131, %c26] : memref<2x49xf32, #tpu.memory_space<smem>>
    %404 = vector.extract_strided_slice %114 {offsets = [0, 130], sizes = [1, 256], strides = [1, 1]} : vector<1x512xf32> to vector<1x256xf32>
    %405 = vector.broadcast %403 : f32 to vector<1x256xf32>
    %406 = arith.mulf %405, %404 : vector<1x256xf32>
    %c1_132 = arith.constant 1 : index
    %c26_133 = arith.constant 26 : index
    %407 = memref.load %arg4[%c1_132, %c26_133] : memref<2x49xf32, #tpu.memory_space<smem>>
    %408 = vector.extract_strided_slice %115 {offsets = [0, 130], sizes = [1, 256], strides = [1, 1]} : vector<1x512xf32> to vector<1x256xf32>
    %409 = vector.broadcast %407 : f32 to vector<1x256xf32>
    %410 = arith.mulf %409, %408 : vector<1x256xf32>
    %411 = arith.addf %406, %410 : vector<1x256xf32>
    %412 = arith.mulf %411, %94 : vector<1x256xf32>
    %413 = arith.addf %402, %412 : vector<1x256xf32>
    %c0_134 = arith.constant 0 : index
    %c27 = arith.constant 27 : index
    %414 = memref.load %arg4[%c0_134, %c27] : memref<2x49xf32, #tpu.memory_space<smem>>
    %415 = vector.extract_strided_slice %114 {offsets = [0, 131], sizes = [1, 256], strides = [1, 1]} : vector<1x512xf32> to vector<1x256xf32>
    %416 = vector.broadcast %414 : f32 to vector<1x256xf32>
    %417 = arith.mulf %416, %415 : vector<1x256xf32>
    %c1_135 = arith.constant 1 : index
    %c27_136 = arith.constant 27 : index
    %418 = memref.load %arg4[%c1_135, %c27_136] : memref<2x49xf32, #tpu.memory_space<smem>>
    %419 = vector.extract_strided_slice %115 {offsets = [0, 131], sizes = [1, 256], strides = [1, 1]} : vector<1x512xf32> to vector<1x256xf32>
    %420 = vector.broadcast %418 : f32 to vector<1x256xf32>
    %421 = arith.mulf %420, %419 : vector<1x256xf32>
    %422 = arith.addf %417, %421 : vector<1x256xf32>
    %423 = arith.mulf %422, %106 : vector<1x256xf32>
    %424 = arith.addf %413, %423 : vector<1x256xf32>
    %c0_137 = arith.constant 0 : index
    %c28 = arith.constant 28 : index
    %425 = memref.load %arg4[%c0_137, %c28] : memref<2x49xf32, #tpu.memory_space<smem>>
    %426 = vector.extract_strided_slice %114 {offsets = [0, 141], sizes = [1, 256], strides = [1, 1]} : vector<1x512xf32> to vector<1x256xf32>
    %427 = vector.broadcast %425 : f32 to vector<1x256xf32>
    %428 = arith.mulf %427, %426 : vector<1x256xf32>
    %c1_138 = arith.constant 1 : index
    %c28_139 = arith.constant 28 : index
    %429 = memref.load %arg4[%c1_138, %c28_139] : memref<2x49xf32, #tpu.memory_space<smem>>
    %430 = vector.extract_strided_slice %115 {offsets = [0, 141], sizes = [1, 256], strides = [1, 1]} : vector<1x512xf32> to vector<1x256xf32>
    %431 = vector.broadcast %429 : f32 to vector<1x256xf32>
    %432 = arith.mulf %431, %430 : vector<1x256xf32>
    %433 = arith.addf %428, %432 : vector<1x256xf32>
    %434 = arith.mulf %433, %34 : vector<1x256xf32>
    %435 = arith.addf %424, %434 : vector<1x256xf32>
    %c0_140 = arith.constant 0 : index
    %c29 = arith.constant 29 : index
    %436 = memref.load %arg4[%c0_140, %c29] : memref<2x49xf32, #tpu.memory_space<smem>>
    %437 = vector.extract_strided_slice %114 {offsets = [0, 142], sizes = [1, 256], strides = [1, 1]} : vector<1x512xf32> to vector<1x256xf32>
    %438 = vector.broadcast %436 : f32 to vector<1x256xf32>
    %439 = arith.mulf %438, %437 : vector<1x256xf32>
    %c1_141 = arith.constant 1 : index
    %c29_142 = arith.constant 29 : index
    %440 = memref.load %arg4[%c1_141, %c29_142] : memref<2x49xf32, #tpu.memory_space<smem>>
    %441 = vector.extract_strided_slice %115 {offsets = [0, 142], sizes = [1, 256], strides = [1, 1]} : vector<1x512xf32> to vector<1x256xf32>
    %442 = vector.broadcast %440 : f32 to vector<1x256xf32>
    %443 = arith.mulf %442, %441 : vector<1x256xf32>
    %444 = arith.addf %439, %443 : vector<1x256xf32>
    %445 = arith.mulf %444, %46 : vector<1x256xf32>
    %446 = arith.addf %435, %445 : vector<1x256xf32>
    %c0_143 = arith.constant 0 : index
    %c30 = arith.constant 30 : index
    %447 = memref.load %arg4[%c0_143, %c30] : memref<2x49xf32, #tpu.memory_space<smem>>
    %448 = vector.extract_strided_slice %114 {offsets = [0, 143], sizes = [1, 256], strides = [1, 1]} : vector<1x512xf32> to vector<1x256xf32>
    %449 = vector.broadcast %447 : f32 to vector<1x256xf32>
    %450 = arith.mulf %449, %448 : vector<1x256xf32>
    %c1_144 = arith.constant 1 : index
    %c30_145 = arith.constant 30 : index
    %451 = memref.load %arg4[%c1_144, %c30_145] : memref<2x49xf32, #tpu.memory_space<smem>>
    %452 = vector.extract_strided_slice %115 {offsets = [0, 143], sizes = [1, 256], strides = [1, 1]} : vector<1x512xf32> to vector<1x256xf32>
    %453 = vector.broadcast %451 : f32 to vector<1x256xf32>
    %454 = arith.mulf %453, %452 : vector<1x256xf32>
    %455 = arith.addf %450, %454 : vector<1x256xf32>
    %456 = arith.mulf %455, %58 : vector<1x256xf32>
    %457 = arith.addf %446, %456 : vector<1x256xf32>
    %c0_146 = arith.constant 0 : index
    %c31 = arith.constant 31 : index
    %458 = memref.load %arg4[%c0_146, %c31] : memref<2x49xf32, #tpu.memory_space<smem>>
    %459 = vector.extract_strided_slice %114 {offsets = [0, 144], sizes = [1, 256], strides = [1, 1]} : vector<1x512xf32> to vector<1x256xf32>
    %460 = vector.broadcast %458 : f32 to vector<1x256xf32>
    %461 = arith.mulf %460, %459 : vector<1x256xf32>
    %c1_147 = arith.constant 1 : index
    %c31_148 = arith.constant 31 : index
    %462 = memref.load %arg4[%c1_147, %c31_148] : memref<2x49xf32, #tpu.memory_space<smem>>
    %463 = vector.extract_strided_slice %115 {offsets = [0, 144], sizes = [1, 256], strides = [1, 1]} : vector<1x512xf32> to vector<1x256xf32>
    %464 = vector.broadcast %462 : f32 to vector<1x256xf32>
    %465 = arith.mulf %464, %463 : vector<1x256xf32>
    %466 = arith.addf %461, %465 : vector<1x256xf32>
    %467 = arith.mulf %466, %70 : vector<1x256xf32>
    %468 = arith.addf %457, %467 : vector<1x256xf32>
    %c0_149 = arith.constant 0 : index
    %c32 = arith.constant 32 : index
    %469 = memref.load %arg4[%c0_149, %c32] : memref<2x49xf32, #tpu.memory_space<smem>>
    %470 = vector.extract_strided_slice %114 {offsets = [0, 145], sizes = [1, 256], strides = [1, 1]} : vector<1x512xf32> to vector<1x256xf32>
    %471 = vector.broadcast %469 : f32 to vector<1x256xf32>
    %472 = arith.mulf %471, %470 : vector<1x256xf32>
    %c1_150 = arith.constant 1 : index
    %c32_151 = arith.constant 32 : index
    %473 = memref.load %arg4[%c1_150, %c32_151] : memref<2x49xf32, #tpu.memory_space<smem>>
    %474 = vector.extract_strided_slice %115 {offsets = [0, 145], sizes = [1, 256], strides = [1, 1]} : vector<1x512xf32> to vector<1x256xf32>
    %475 = vector.broadcast %473 : f32 to vector<1x256xf32>
    %476 = arith.mulf %475, %474 : vector<1x256xf32>
    %477 = arith.addf %472, %476 : vector<1x256xf32>
    %478 = arith.mulf %477, %82 : vector<1x256xf32>
    %479 = arith.addf %468, %478 : vector<1x256xf32>
    %c0_152 = arith.constant 0 : index
    %c33 = arith.constant 33 : index
    %480 = memref.load %arg4[%c0_152, %c33] : memref<2x49xf32, #tpu.memory_space<smem>>
    %481 = vector.extract_strided_slice %114 {offsets = [0, 146], sizes = [1, 256], strides = [1, 1]} : vector<1x512xf32> to vector<1x256xf32>
    %482 = vector.broadcast %480 : f32 to vector<1x256xf32>
    %483 = arith.mulf %482, %481 : vector<1x256xf32>
    %c1_153 = arith.constant 1 : index
    %c33_154 = arith.constant 33 : index
    %484 = memref.load %arg4[%c1_153, %c33_154] : memref<2x49xf32, #tpu.memory_space<smem>>
    %485 = vector.extract_strided_slice %115 {offsets = [0, 146], sizes = [1, 256], strides = [1, 1]} : vector<1x512xf32> to vector<1x256xf32>
    %486 = vector.broadcast %484 : f32 to vector<1x256xf32>
    %487 = arith.mulf %486, %485 : vector<1x256xf32>
    %488 = arith.addf %483, %487 : vector<1x256xf32>
    %489 = arith.mulf %488, %94 : vector<1x256xf32>
    %490 = arith.addf %479, %489 : vector<1x256xf32>
    %c0_155 = arith.constant 0 : index
    %c34 = arith.constant 34 : index
    %491 = memref.load %arg4[%c0_155, %c34] : memref<2x49xf32, #tpu.memory_space<smem>>
    %492 = vector.extract_strided_slice %114 {offsets = [0, 147], sizes = [1, 256], strides = [1, 1]} : vector<1x512xf32> to vector<1x256xf32>
    %493 = vector.broadcast %491 : f32 to vector<1x256xf32>
    %494 = arith.mulf %493, %492 : vector<1x256xf32>
    %c1_156 = arith.constant 1 : index
    %c34_157 = arith.constant 34 : index
    %495 = memref.load %arg4[%c1_156, %c34_157] : memref<2x49xf32, #tpu.memory_space<smem>>
    %496 = vector.extract_strided_slice %115 {offsets = [0, 147], sizes = [1, 256], strides = [1, 1]} : vector<1x512xf32> to vector<1x256xf32>
    %497 = vector.broadcast %495 : f32 to vector<1x256xf32>
    %498 = arith.mulf %497, %496 : vector<1x256xf32>
    %499 = arith.addf %494, %498 : vector<1x256xf32>
    %500 = arith.mulf %499, %106 : vector<1x256xf32>
    %501 = arith.addf %490, %500 : vector<1x256xf32>
    %c0_158 = arith.constant 0 : index
    %c35 = arith.constant 35 : index
    %502 = memref.load %arg4[%c0_158, %c35] : memref<2x49xf32, #tpu.memory_space<smem>>
    %503 = vector.extract_strided_slice %114 {offsets = [0, 157], sizes = [1, 256], strides = [1, 1]} : vector<1x512xf32> to vector<1x256xf32>
    %504 = vector.broadcast %502 : f32 to vector<1x256xf32>
    %505 = arith.mulf %504, %503 : vector<1x256xf32>
    %c1_159 = arith.constant 1 : index
    %c35_160 = arith.constant 35 : index
    %506 = memref.load %arg4[%c1_159, %c35_160] : memref<2x49xf32, #tpu.memory_space<smem>>
    %507 = vector.extract_strided_slice %115 {offsets = [0, 157], sizes = [1, 256], strides = [1, 1]} : vector<1x512xf32> to vector<1x256xf32>
    %508 = vector.broadcast %506 : f32 to vector<1x256xf32>
    %509 = arith.mulf %508, %507 : vector<1x256xf32>
    %510 = arith.addf %505, %509 : vector<1x256xf32>
    %511 = arith.mulf %510, %34 : vector<1x256xf32>
    %512 = arith.addf %501, %511 : vector<1x256xf32>
    %c0_161 = arith.constant 0 : index
    %c36 = arith.constant 36 : index
    %513 = memref.load %arg4[%c0_161, %c36] : memref<2x49xf32, #tpu.memory_space<smem>>
    %514 = vector.extract_strided_slice %114 {offsets = [0, 158], sizes = [1, 256], strides = [1, 1]} : vector<1x512xf32> to vector<1x256xf32>
    %515 = vector.broadcast %513 : f32 to vector<1x256xf32>
    %516 = arith.mulf %515, %514 : vector<1x256xf32>
    %c1_162 = arith.constant 1 : index
    %c36_163 = arith.constant 36 : index
    %517 = memref.load %arg4[%c1_162, %c36_163] : memref<2x49xf32, #tpu.memory_space<smem>>
    %518 = vector.extract_strided_slice %115 {offsets = [0, 158], sizes = [1, 256], strides = [1, 1]} : vector<1x512xf32> to vector<1x256xf32>
    %519 = vector.broadcast %517 : f32 to vector<1x256xf32>
    %520 = arith.mulf %519, %518 : vector<1x256xf32>
    %521 = arith.addf %516, %520 : vector<1x256xf32>
    %522 = arith.mulf %521, %46 : vector<1x256xf32>
    %523 = arith.addf %512, %522 : vector<1x256xf32>
    %c0_164 = arith.constant 0 : index
    %c37 = arith.constant 37 : index
    %524 = memref.load %arg4[%c0_164, %c37] : memref<2x49xf32, #tpu.memory_space<smem>>
    %525 = vector.extract_strided_slice %114 {offsets = [0, 159], sizes = [1, 256], strides = [1, 1]} : vector<1x512xf32> to vector<1x256xf32>
    %526 = vector.broadcast %524 : f32 to vector<1x256xf32>
    %527 = arith.mulf %526, %525 : vector<1x256xf32>
    %c1_165 = arith.constant 1 : index
    %c37_166 = arith.constant 37 : index
    %528 = memref.load %arg4[%c1_165, %c37_166] : memref<2x49xf32, #tpu.memory_space<smem>>
    %529 = vector.extract_strided_slice %115 {offsets = [0, 159], sizes = [1, 256], strides = [1, 1]} : vector<1x512xf32> to vector<1x256xf32>
    %530 = vector.broadcast %528 : f32 to vector<1x256xf32>
    %531 = arith.mulf %530, %529 : vector<1x256xf32>
    %532 = arith.addf %527, %531 : vector<1x256xf32>
    %533 = arith.mulf %532, %58 : vector<1x256xf32>
    %534 = arith.addf %523, %533 : vector<1x256xf32>
    %c0_167 = arith.constant 0 : index
    %c38 = arith.constant 38 : index
    %535 = memref.load %arg4[%c0_167, %c38] : memref<2x49xf32, #tpu.memory_space<smem>>
    %536 = vector.extract_strided_slice %114 {offsets = [0, 160], sizes = [1, 256], strides = [1, 1]} : vector<1x512xf32> to vector<1x256xf32>
    %537 = vector.broadcast %535 : f32 to vector<1x256xf32>
    %538 = arith.mulf %537, %536 : vector<1x256xf32>
    %c1_168 = arith.constant 1 : index
    %c38_169 = arith.constant 38 : index
    %539 = memref.load %arg4[%c1_168, %c38_169] : memref<2x49xf32, #tpu.memory_space<smem>>
    %540 = vector.extract_strided_slice %115 {offsets = [0, 160], sizes = [1, 256], strides = [1, 1]} : vector<1x512xf32> to vector<1x256xf32>
    %541 = vector.broadcast %539 : f32 to vector<1x256xf32>
    %542 = arith.mulf %541, %540 : vector<1x256xf32>
    %543 = arith.addf %538, %542 : vector<1x256xf32>
    %544 = arith.mulf %543, %70 : vector<1x256xf32>
    %545 = arith.addf %534, %544 : vector<1x256xf32>
    %c0_170 = arith.constant 0 : index
    %c39 = arith.constant 39 : index
    %546 = memref.load %arg4[%c0_170, %c39] : memref<2x49xf32, #tpu.memory_space<smem>>
    %547 = vector.extract_strided_slice %114 {offsets = [0, 161], sizes = [1, 256], strides = [1, 1]} : vector<1x512xf32> to vector<1x256xf32>
    %548 = vector.broadcast %546 : f32 to vector<1x256xf32>
    %549 = arith.mulf %548, %547 : vector<1x256xf32>
    %c1_171 = arith.constant 1 : index
    %c39_172 = arith.constant 39 : index
    %550 = memref.load %arg4[%c1_171, %c39_172] : memref<2x49xf32, #tpu.memory_space<smem>>
    %551 = vector.extract_strided_slice %115 {offsets = [0, 161], sizes = [1, 256], strides = [1, 1]} : vector<1x512xf32> to vector<1x256xf32>
    %552 = vector.broadcast %550 : f32 to vector<1x256xf32>
    %553 = arith.mulf %552, %551 : vector<1x256xf32>
    %554 = arith.addf %549, %553 : vector<1x256xf32>
    %555 = arith.mulf %554, %82 : vector<1x256xf32>
    %556 = arith.addf %545, %555 : vector<1x256xf32>
    %c0_173 = arith.constant 0 : index
    %c40 = arith.constant 40 : index
    %557 = memref.load %arg4[%c0_173, %c40] : memref<2x49xf32, #tpu.memory_space<smem>>
    %558 = vector.extract_strided_slice %114 {offsets = [0, 162], sizes = [1, 256], strides = [1, 1]} : vector<1x512xf32> to vector<1x256xf32>
    %559 = vector.broadcast %557 : f32 to vector<1x256xf32>
    %560 = arith.mulf %559, %558 : vector<1x256xf32>
    %c1_174 = arith.constant 1 : index
    %c40_175 = arith.constant 40 : index
    %561 = memref.load %arg4[%c1_174, %c40_175] : memref<2x49xf32, #tpu.memory_space<smem>>
    %562 = vector.extract_strided_slice %115 {offsets = [0, 162], sizes = [1, 256], strides = [1, 1]} : vector<1x512xf32> to vector<1x256xf32>
    %563 = vector.broadcast %561 : f32 to vector<1x256xf32>
    %564 = arith.mulf %563, %562 : vector<1x256xf32>
    %565 = arith.addf %560, %564 : vector<1x256xf32>
    %566 = arith.mulf %565, %94 : vector<1x256xf32>
    %567 = arith.addf %556, %566 : vector<1x256xf32>
    %c0_176 = arith.constant 0 : index
    %c41 = arith.constant 41 : index
    %568 = memref.load %arg4[%c0_176, %c41] : memref<2x49xf32, #tpu.memory_space<smem>>
    %569 = vector.extract_strided_slice %114 {offsets = [0, 163], sizes = [1, 256], strides = [1, 1]} : vector<1x512xf32> to vector<1x256xf32>
    %570 = vector.broadcast %568 : f32 to vector<1x256xf32>
    %571 = arith.mulf %570, %569 : vector<1x256xf32>
    %c1_177 = arith.constant 1 : index
    %c41_178 = arith.constant 41 : index
    %572 = memref.load %arg4[%c1_177, %c41_178] : memref<2x49xf32, #tpu.memory_space<smem>>
    %573 = vector.extract_strided_slice %115 {offsets = [0, 163], sizes = [1, 256], strides = [1, 1]} : vector<1x512xf32> to vector<1x256xf32>
    %574 = vector.broadcast %572 : f32 to vector<1x256xf32>
    %575 = arith.mulf %574, %573 : vector<1x256xf32>
    %576 = arith.addf %571, %575 : vector<1x256xf32>
    %577 = arith.mulf %576, %106 : vector<1x256xf32>
    %578 = arith.addf %567, %577 : vector<1x256xf32>
    %c0_179 = arith.constant 0 : index
    %c42 = arith.constant 42 : index
    %579 = memref.load %arg4[%c0_179, %c42] : memref<2x49xf32, #tpu.memory_space<smem>>
    %580 = vector.extract_strided_slice %114 {offsets = [0, 173], sizes = [1, 256], strides = [1, 1]} : vector<1x512xf32> to vector<1x256xf32>
    %581 = vector.broadcast %579 : f32 to vector<1x256xf32>
    %582 = arith.mulf %581, %580 : vector<1x256xf32>
    %c1_180 = arith.constant 1 : index
    %c42_181 = arith.constant 42 : index
    %583 = memref.load %arg4[%c1_180, %c42_181] : memref<2x49xf32, #tpu.memory_space<smem>>
    %584 = vector.extract_strided_slice %115 {offsets = [0, 173], sizes = [1, 256], strides = [1, 1]} : vector<1x512xf32> to vector<1x256xf32>
    %585 = vector.broadcast %583 : f32 to vector<1x256xf32>
    %586 = arith.mulf %585, %584 : vector<1x256xf32>
    %587 = arith.addf %582, %586 : vector<1x256xf32>
    %588 = arith.mulf %587, %34 : vector<1x256xf32>
    %589 = arith.addf %578, %588 : vector<1x256xf32>
    %c0_182 = arith.constant 0 : index
    %c43 = arith.constant 43 : index
    %590 = memref.load %arg4[%c0_182, %c43] : memref<2x49xf32, #tpu.memory_space<smem>>
    %591 = vector.extract_strided_slice %114 {offsets = [0, 174], sizes = [1, 256], strides = [1, 1]} : vector<1x512xf32> to vector<1x256xf32>
    %592 = vector.broadcast %590 : f32 to vector<1x256xf32>
    %593 = arith.mulf %592, %591 : vector<1x256xf32>
    %c1_183 = arith.constant 1 : index
    %c43_184 = arith.constant 43 : index
    %594 = memref.load %arg4[%c1_183, %c43_184] : memref<2x49xf32, #tpu.memory_space<smem>>
    %595 = vector.extract_strided_slice %115 {offsets = [0, 174], sizes = [1, 256], strides = [1, 1]} : vector<1x512xf32> to vector<1x256xf32>
    %596 = vector.broadcast %594 : f32 to vector<1x256xf32>
    %597 = arith.mulf %596, %595 : vector<1x256xf32>
    %598 = arith.addf %593, %597 : vector<1x256xf32>
    %599 = arith.mulf %598, %46 : vector<1x256xf32>
    %600 = arith.addf %589, %599 : vector<1x256xf32>
    %c0_185 = arith.constant 0 : index
    %c44 = arith.constant 44 : index
    %601 = memref.load %arg4[%c0_185, %c44] : memref<2x49xf32, #tpu.memory_space<smem>>
    %602 = vector.extract_strided_slice %114 {offsets = [0, 175], sizes = [1, 256], strides = [1, 1]} : vector<1x512xf32> to vector<1x256xf32>
    %603 = vector.broadcast %601 : f32 to vector<1x256xf32>
    %604 = arith.mulf %603, %602 : vector<1x256xf32>
    %c1_186 = arith.constant 1 : index
    %c44_187 = arith.constant 44 : index
    %605 = memref.load %arg4[%c1_186, %c44_187] : memref<2x49xf32, #tpu.memory_space<smem>>
    %606 = vector.extract_strided_slice %115 {offsets = [0, 175], sizes = [1, 256], strides = [1, 1]} : vector<1x512xf32> to vector<1x256xf32>
    %607 = vector.broadcast %605 : f32 to vector<1x256xf32>
    %608 = arith.mulf %607, %606 : vector<1x256xf32>
    %609 = arith.addf %604, %608 : vector<1x256xf32>
    %610 = arith.mulf %609, %58 : vector<1x256xf32>
    %611 = arith.addf %600, %610 : vector<1x256xf32>
    %c0_188 = arith.constant 0 : index
    %c45 = arith.constant 45 : index
    %612 = memref.load %arg4[%c0_188, %c45] : memref<2x49xf32, #tpu.memory_space<smem>>
    %613 = vector.extract_strided_slice %114 {offsets = [0, 176], sizes = [1, 256], strides = [1, 1]} : vector<1x512xf32> to vector<1x256xf32>
    %614 = vector.broadcast %612 : f32 to vector<1x256xf32>
    %615 = arith.mulf %614, %613 : vector<1x256xf32>
    %c1_189 = arith.constant 1 : index
    %c45_190 = arith.constant 45 : index
    %616 = memref.load %arg4[%c1_189, %c45_190] : memref<2x49xf32, #tpu.memory_space<smem>>
    %617 = vector.extract_strided_slice %115 {offsets = [0, 176], sizes = [1, 256], strides = [1, 1]} : vector<1x512xf32> to vector<1x256xf32>
    %618 = vector.broadcast %616 : f32 to vector<1x256xf32>
    %619 = arith.mulf %618, %617 : vector<1x256xf32>
    %620 = arith.addf %615, %619 : vector<1x256xf32>
    %621 = arith.mulf %620, %70 : vector<1x256xf32>
    %622 = arith.addf %611, %621 : vector<1x256xf32>
    %c0_191 = arith.constant 0 : index
    %c46 = arith.constant 46 : index
    %623 = memref.load %arg4[%c0_191, %c46] : memref<2x49xf32, #tpu.memory_space<smem>>
    %624 = vector.extract_strided_slice %114 {offsets = [0, 177], sizes = [1, 256], strides = [1, 1]} : vector<1x512xf32> to vector<1x256xf32>
    %625 = vector.broadcast %623 : f32 to vector<1x256xf32>
    %626 = arith.mulf %625, %624 : vector<1x256xf32>
    %c1_192 = arith.constant 1 : index
    %c46_193 = arith.constant 46 : index
    %627 = memref.load %arg4[%c1_192, %c46_193] : memref<2x49xf32, #tpu.memory_space<smem>>
    %628 = vector.extract_strided_slice %115 {offsets = [0, 177], sizes = [1, 256], strides = [1, 1]} : vector<1x512xf32> to vector<1x256xf32>
    %629 = vector.broadcast %627 : f32 to vector<1x256xf32>
    %630 = arith.mulf %629, %628 : vector<1x256xf32>
    %631 = arith.addf %626, %630 : vector<1x256xf32>
    %632 = arith.mulf %631, %82 : vector<1x256xf32>
    %633 = arith.addf %622, %632 : vector<1x256xf32>
    %c0_194 = arith.constant 0 : index
    %c47 = arith.constant 47 : index
    %634 = memref.load %arg4[%c0_194, %c47] : memref<2x49xf32, #tpu.memory_space<smem>>
    %635 = vector.extract_strided_slice %114 {offsets = [0, 178], sizes = [1, 256], strides = [1, 1]} : vector<1x512xf32> to vector<1x256xf32>
    %636 = vector.broadcast %634 : f32 to vector<1x256xf32>
    %637 = arith.mulf %636, %635 : vector<1x256xf32>
    %c1_195 = arith.constant 1 : index
    %c47_196 = arith.constant 47 : index
    %638 = memref.load %arg4[%c1_195, %c47_196] : memref<2x49xf32, #tpu.memory_space<smem>>
    %639 = vector.extract_strided_slice %115 {offsets = [0, 178], sizes = [1, 256], strides = [1, 1]} : vector<1x512xf32> to vector<1x256xf32>
    %640 = vector.broadcast %638 : f32 to vector<1x256xf32>
    %641 = arith.mulf %640, %639 : vector<1x256xf32>
    %642 = arith.addf %637, %641 : vector<1x256xf32>
    %643 = arith.mulf %642, %94 : vector<1x256xf32>
    %644 = arith.addf %633, %643 : vector<1x256xf32>
    %c0_197 = arith.constant 0 : index
    %c48 = arith.constant 48 : index
    %645 = memref.load %arg4[%c0_197, %c48] : memref<2x49xf32, #tpu.memory_space<smem>>
    %646 = vector.extract_strided_slice %114 {offsets = [0, 179], sizes = [1, 256], strides = [1, 1]} : vector<1x512xf32> to vector<1x256xf32>
    %647 = vector.broadcast %645 : f32 to vector<1x256xf32>
    %648 = arith.mulf %647, %646 : vector<1x256xf32>
    %c1_198 = arith.constant 1 : index
    %c48_199 = arith.constant 48 : index
    %649 = memref.load %arg4[%c1_198, %c48_199] : memref<2x49xf32, #tpu.memory_space<smem>>
    %650 = vector.extract_strided_slice %115 {offsets = [0, 179], sizes = [1, 256], strides = [1, 1]} : vector<1x512xf32> to vector<1x256xf32>
    %651 = vector.broadcast %649 : f32 to vector<1x256xf32>
    %652 = arith.mulf %651, %650 : vector<1x256xf32>
    %653 = arith.addf %648, %652 : vector<1x256xf32>
    %654 = arith.mulf %653, %106 : vector<1x256xf32>
    %655 = arith.addf %644, %654 : vector<1x256xf32>
    %656 = arith.negf %655 : vector<1x256xf32>
    %657 = math.exp %656 : vector<1x256xf32>
    %cst_200 = arith.constant 1.000000e+00 : f32
    %658 = vector.broadcast %cst_200 : f32 to vector<1x256xf32>
    %659 = arith.addf %658, %657 : vector<1x256xf32>
    %660 = arith.divf %658, %659 : vector<1x256xf32>
    %cst_201 = arith.constant 2.000000e+00 : f32
    %661 = vector.broadcast %cst_201 : f32 to vector<16x256xf32>
    %662 = arith.mulf %661, %1 : vector<16x256xf32>
    %663 = vector.broadcast %5 : vector<16x1xf32> to vector<16x256xf32>
    %664 = arith.mulf %662, %663 : vector<16x256xf32>
    %cst_202 = arith.constant 2.000000e+00 : f32
    %665 = vector.broadcast %cst_202 : f32 to vector<16x256xf32>
    %666 = arith.mulf %665, %3 : vector<16x256xf32>
    %667 = vector.broadcast %660 : vector<1x256xf32> to vector<16x256xf32>
    %668 = arith.mulf %666, %667 : vector<16x256xf32>
    %669 = arith.addf %664, %668 : vector<16x256xf32>
    %cst_203 = arith.constant 0.000000e+00 : f32
    %670 = vector.broadcast %cst_203 : f32 to vector<16x128xf32>
    %671 = tpu.concatenate %670, %669, %670 in 1 : vector<16x128xf32>, vector<16x256xf32>, vector<16x128xf32> -> vector<16x512xf32>
    %672 = vector.extract_strided_slice %671 {offsets = [0, 111], sizes = [16, 256], strides = [1, 1]} : vector<16x512xf32> to vector<16x256xf32>
    %673 = vector.broadcast %58 : vector<1x256xf32> to vector<16x256xf32>
    %674 = arith.mulf %672, %673 : vector<16x256xf32>
    %675 = vector.extract_strided_slice %671 {offsets = [0, 112], sizes = [16, 256], strides = [1, 1]} : vector<16x512xf32> to vector<16x256xf32>
    %676 = vector.broadcast %70 : vector<1x256xf32> to vector<16x256xf32>
    %677 = arith.mulf %675, %676 : vector<16x256xf32>
    %678 = vector.extract_strided_slice %671 {offsets = [0, 113], sizes = [16, 256], strides = [1, 1]} : vector<16x512xf32> to vector<16x256xf32>
    %679 = vector.broadcast %82 : vector<1x256xf32> to vector<16x256xf32>
    %680 = arith.mulf %678, %679 : vector<16x256xf32>
    %681 = vector.extract_strided_slice %671 {offsets = [0, 127], sizes = [16, 256], strides = [1, 1]} : vector<16x512xf32> to vector<16x256xf32>
    %682 = vector.broadcast %58 : vector<1x256xf32> to vector<16x256xf32>
    %683 = arith.mulf %681, %682 : vector<16x256xf32>
    %684 = vector.extract_strided_slice %671 {offsets = [0, 128], sizes = [16, 256], strides = [1, 1]} : vector<16x512xf32> to vector<16x256xf32>
    %685 = vector.broadcast %70 : vector<1x256xf32> to vector<16x256xf32>
    %686 = arith.mulf %684, %685 : vector<16x256xf32>
    %687 = vector.extract_strided_slice %671 {offsets = [0, 129], sizes = [16, 256], strides = [1, 1]} : vector<16x512xf32> to vector<16x256xf32>
    %688 = vector.broadcast %82 : vector<1x256xf32> to vector<16x256xf32>
    %689 = arith.mulf %687, %688 : vector<16x256xf32>
    %690 = vector.extract_strided_slice %671 {offsets = [0, 143], sizes = [16, 256], strides = [1, 1]} : vector<16x512xf32> to vector<16x256xf32>
    %691 = vector.broadcast %58 : vector<1x256xf32> to vector<16x256xf32>
    %692 = arith.mulf %690, %691 : vector<16x256xf32>
    %693 = vector.extract_strided_slice %671 {offsets = [0, 144], sizes = [16, 256], strides = [1, 1]} : vector<16x512xf32> to vector<16x256xf32>
    %694 = vector.broadcast %70 : vector<1x256xf32> to vector<16x256xf32>
    %695 = arith.mulf %693, %694 : vector<16x256xf32>
    %696 = vector.extract_strided_slice %671 {offsets = [0, 145], sizes = [16, 256], strides = [1, 1]} : vector<16x512xf32> to vector<16x256xf32>
    %697 = vector.broadcast %82 : vector<1x256xf32> to vector<16x256xf32>
    %698 = arith.mulf %696, %697 : vector<16x256xf32>
    %699 = tpu.concatenate %674, %677, %680, %683, %686, %689, %692, %695, %698 in 0 : vector<16x256xf32>, vector<16x256xf32>, vector<16x256xf32>, vector<16x256xf32>, vector<16x256xf32>, vector<16x256xf32>, vector<16x256xf32>, vector<16x256xf32>, vector<16x256xf32> -> vector<144x256xf32>
    %c0_204 = arith.constant 0 : index
    %c0_205 = arith.constant 0 : index
    %700 = vector.load %arg5[%c0_204, %c0_205] : memref<16x144xf32, #tpu.memory_space<vmem>>, vector<16x144xf32>
    %cst_206 = arith.constant dense<0.000000e+00> : vector<16x256xf32>
    %701 = tpu.matmul %700, %699, %cst_206 {dimension_numbers = #tpu.dot_dimension_numbers<[1], [0], [0], [1], [0, 0, 1, 1], [], []>} : vector<16x144xf32>, vector<144x256xf32>, vector<16x256xf32> -> vector<16x256xf32>
    %c0_207 = arith.constant 0 : index
    %c0_208 = arith.constant 0 : index
    %702 = vector.load %arg6[%c0_207, %c0_208] : memref<16x1xf32, #tpu.memory_space<vmem>>, vector<16x1xf32>
    %703 = vector.broadcast %702 : vector<16x1xf32> to vector<16x256xf32>
    %704 = arith.addf %701, %703 : vector<16x256xf32>
    %cst_209 = arith.constant 0.000000e+00 : f32
    %705 = vector.broadcast %cst_209 : f32 to vector<16x256xf32>
    %706 = arith.maximumf %704, %705 : vector<16x256xf32>
    %c0_210 = arith.constant 0 : index
    %c0_211 = arith.constant 0 : index
    %c0_212 = arith.constant 0 : index
    %707 = vector.load %arg7[%c0_210, %c0_211, %c0_212] : memref<1x16x256xf32, #tpu.memory_space<vmem>>, vector<1x16x256xf32>
    %708 = vector.shape_cast %707 : vector<1x16x256xf32> to vector<16x256xf32>
    %709 = vector.shape_cast %706 : vector<16x256xf32> to vector<1x16x256xf32>
    tpu.vector_store %arg7[%c0_210, %c0_211, %c0_212], %709 {strides = array<i32>} : memref<1x16x256xf32, #tpu.memory_space<vmem>>, vector<1x16x256xf32>,
    return
  }
  func.func @transform_0(%arg0: i32) -> (i32, i32, i32) {
    %c0_i32 = arith.constant 0 : i32
    %c0_i32_0 = arith.constant 0 : i32
    %c0_i32_1 = arith.constant 0 : i32
    return %arg0, %c0_i32, %c0_i32_0 : i32, i32, i32
  }
  func.func @transform_1(%arg0: i32) -> (i32, i32, i32) {
    %c0_i32 = arith.constant 0 : i32
    %c0_i32_0 = arith.constant 0 : i32
    %c0_i32_1 = arith.constant 0 : i32
    return %arg0, %c0_i32, %c0_i32_0 : i32, i32, i32
  }
  func.func @transform_2(%arg0: i32) -> (i32, i32, i32) {
    %c0_i32 = arith.constant 0 : i32
    %c0_i32_0 = arith.constant 0 : i32
    %c0_i32_1 = arith.constant 0 : i32
    return %arg0, %c0_i32, %c0_i32_0 : i32, i32, i32
  }
  func.func @transform_3(%arg0: i32) -> (i32, i32) {
    %c0_i32 = arith.constant 0 : i32
    %c0_i32_0 = arith.constant 0 : i32
    %c0_i32_1 = arith.constant 0 : i32
    return %c0_i32, %c0_i32_0 : i32, i32
  }
  func.func @transform_4(%arg0: i32) -> (i32, i32) {
    %c0_i32 = arith.constant 0 : i32
    %c0_i32_0 = arith.constant 0 : i32
    %c0_i32_1 = arith.constant 0 : i32
    return %c0_i32, %c0_i32_0 : i32, i32
  }
  func.func @transform_5(%arg0: i32) -> (i32, i32) {
    %c0_i32 = arith.constant 0 : i32
    %c0_i32_0 = arith.constant 0 : i32
    %c0_i32_1 = arith.constant 0 : i32
    return %c0_i32, %c0_i32_0 : i32, i32
  }
  func.func @transform_6(%arg0: i32) -> (i32, i32, i32) {
    %c0_i32 = arith.constant 0 : i32
    %c0_i32_0 = arith.constant 0 : i32
    %c0_i32_1 = arith.constant 0 : i32
    return %arg0, %c0_i32, %c0_i32_0 : i32, i32, i32
  }
}

</mosaic_0001>

<llo_original>
// kernel: asym_bi_cs_fuse_reduce_pallas.2
$region0: #{asym_bi_cs_fuse_reduce_pallas.2}
  #allocation0 [shape = 'u32[]', space=smem, size = 0x4, offset = 0x4, fixed_abs, tag = 'smem constant byte address 0x4 - core index']
  #allocation1 [shape = 'u32[144,128]{1,0:T(1,128)}', space=vmem, size = 0x12000, scoped, tag = 'internal scratch']
  %s0 = inlined_call_operand.vmem [shape: f32[2,8,256], index: 0, kind: input, shape index: {}]
  %s1 = inlined_call_operand.vmem [shape: f32[16,8], index: 1, kind: input, shape index: {}]
  %s2 = inlined_call_operand.vmem [shape: f32[16,1], index: 2, kind: input, shape index: {}]
  %s3 = inlined_call_operand.vmem [shape: f32[2,16,256], index: 3, kind: output, shape index: {0}]
  %s4 = inlined_call_operand.vmem [shape: f32[2,16,1], index: 4, kind: output, shape index: {1}]
  %5 = xla_tuple %s3, %s4
  %s6 = sld [smem:[#allocation0]]
  $region53: #{asym_bi_cs_fuse_reduce_pallas.2} parent=0
    _
  %s8 = ssub.s32 1, %s6
  %s9 = scalar_select 0, %s8, %s6
  loop: start=0, step=1, limit=4
  $region2: #{asym_bi_cs_fuse_reduce_pallas.2} parent=0 // loop_pre_header
    _
  $region3: #{asym_bi_cs_fuse_reduce_pallas.2} parent=0 // loop_header
    %s11 = sphi 0, %s15
    %p12 = scmp.ge.s32.totalorder %s11, 4
    %s21 = sphi 0, %s23
    %s24 = sphi 0, %s21
    %s25 = sphi 0, %s24
    %s41 = sphi 0, %s25
    %s45 = sphi 0, %s45
    %s47 = sphi 0, %s45
    %s48 = sphi 0, %s47
    %s62 = sphi 0, %s48
    %s66 = sphi 0, %s66
    %s68 = sphi 0, %s66
    %s69 = sphi 0, %s68
    %s83 = sphi 0, %s69
    %s89 = sphi 0, %s91
    %s92 = sphi 0, %s89
    %s93 = sphi 0, %s92
    %s109 = sphi 0, %s93
    %s115 = sphi 0, %s117
    %s118 = sphi 0, %s115
    %s119 = sphi 0, %s118
    %s135 = sphi 0, %s119
  $region4: #{asym_bi_cs_fuse_reduce_pallas.2} parent=0 // loop_header_branch
    %14 = sbr.rel (%p12) target = $region8
  $region5: #{asym_bi_cs_fuse_reduce_pallas.2} parent=0 // loop_body
    %s16 = ssub.s32 %s11, 1
    %s17 = ssub.s32 %s11, 2
    %s18 = sadd.s32 %s11, 1
    %s19 = ssub.s32 %s11, %s18
    %p20 = scmp.eq.s32.totalorder %s19, 0
    %s22 = sadd.s32 %s21, 1
    %s23 = scalar_select %p20, %s21, %s22
    %p26 = pneg %p20
    %p27 = scmp.eq.s32.totalorder %s11, 1
    %p28 = por %p26, %p27
    %p29 = scmp.ne.s32.totalorder %s21, %s24
    %p30 = scmp.eq.s32.totalorder %s11, 0
    %p31 = por %p29, %p30
    %p32 = scmp.ne.s32.totalorder %s21, %s24
    %p33 = scmp.eq.s32.totalorder %s16, 1
    %p34 = por %p32, %p33
    %p35 = scmp.ne.s32.totalorder %s24, %s25
    %p36 = scmp.eq.s32.totalorder %s16, 0
    %p37 = por %p35, %p36
    %p38 = scmp.ne.s32.totalorder %s24, %s25
    %p39 = scmp.eq.s32.totalorder %s17, 1
    %p40 = por %p38, %p39
    %p42 = scmp.ne.s32.totalorder %s25, %s41
    %p43 = scmp.eq.s32.totalorder %s17, 0
    %p44 = por %p42, %p43
    %s46 = sadd.s32 %s45, 1
    %p49 = scmp.eq.s32.totalorder %s11, 1
    %p50 = scmp.ne.s32.totalorder %s45, %s47
    %p51 = scmp.eq.s32.totalorder %s11, 0
    %p52 = por %p50, %p51
    %p53 = scmp.ne.s32.totalorder %s45, %s47
    %p54 = scmp.eq.s32.totalorder %s16, 1
    %p55 = por %p53, %p54
    %p56 = scmp.ne.s32.totalorder %s47, %s48
    %p57 = scmp.eq.s32.totalorder %s16, 0
    %p58 = por %p56, %p57
    %p59 = scmp.ne.s32.totalorder %s47, %s48
    %p60 = scmp.eq.s32.totalorder %s17, 1
    %p61 = por %p59, %p60
    %p63 = scmp.ne.s32.totalorder %s48, %s62
    %p64 = scmp.eq.s32.totalorder %s17, 0
    %p65 = por %p63, %p64
    %s67 = sadd.s32 %s66, 1
    %p70 = scmp.eq.s32.totalorder %s11, 1
    %p71 = scmp.ne.s32.totalorder %s66, %s68
    %p72 = scmp.eq.s32.totalorder %s11, 0
    %p73 = por %p71, %p72
    %p74 = scmp.ne.s32.totalorder %s66, %s68
    %p75 = scmp.eq.s32.totalorder %s16, 1
    %p76 = por %p74, %p75
    %p77 = scmp.ne.s32.totalorder %s68, %s69
    %p78 = scmp.eq.s32.totalorder %s16, 0
    %p79 = por %p77, %p78
    %p80 = scmp.ne.s32.totalorder %s68, %s69
    %p81 = scmp.eq.s32.totalorder %s17, 1
    %p82 = por %p80, %p81
    %p84 = scmp.ne.s32.totalorder %s69, %s83
    %p85 = scmp.eq.s32.totalorder %s17, 0
    %p86 = por %p84, %p85
    %s87 = ssub.s32 %s11, %s18
    %p88 = scmp.eq.s32.totalorder %s87, 0
    %s90 = sadd.s32 %s89, 1
    %s91 = scalar_select %p88, %s89, %s90
    %p94 = pneg %p88
    %p95 = scmp.eq.s32.totalorder %s11, 1
    %p96 = por %p94, %p95
    %p97 = scmp.ne.s32.totalorder %s89, %s92
    %p98 = scmp.eq.s32.totalorder %s11, 0
    %p99 = por %p97, %p98
    %p100 = scmp.ne.s32.totalorder %s89, %s92
    %p101 = scmp.eq.s32.totalorder %s16, 1
    %p102 = por %p100, %p101
    %p103 = scmp.ne.s32.totalorder %s92, %s93
    %p104 = scmp.eq.s32.totalorder %s16, 0
    %p105 = por %p103, %p104
    %p106 = scmp.ne.s32.totalorder %s92, %s93
    %p107 = scmp.eq.s32.totalorder %s17, 1
    %p108 = por %p106, %p107
    %p110 = scmp.ne.s32.totalorder %s93, %s109
    %p111 = scmp.eq.s32.totalorder %s17, 0
    %p112 = por %p110, %p111
    %s113 = ssub.s32 %s11, %s18
    %p114 = scmp.eq.s32.totalorder %s113, 0
    %s116 = sadd.s32 %s115, 1
    %s117 = scalar_select %p114, %s115, %s116
    %p120 = pneg %p114
    %p121 = scmp.eq.s32.totalorder %s11, 1
    %p122 = por %p120, %p121
    %p123 = scmp.ne.s32.totalorder %s115, %s118
    %p124 = scmp.eq.s32.totalorder %s11, 0
    %p125 = por %p123, %p124
    %p126 = scmp.ne.s32.totalorder %s115, %s118
    %p127 = scmp.eq.s32.totalorder %s16, 1
    %p128 = por %p126, %p127
    %p129 = scmp.ne.s32.totalorder %s118, %s119
    %p130 = scmp.eq.s32.totalorder %s16, 0
    %p131 = por %p129, %p130
    %p132 = scmp.ne.s32.totalorder %s118, %s119
    %p133 = scmp.eq.s32.totalorder %s17, 1
    %p134 = por %p132, %p133
    %p136 = scmp.ne.s32.totalorder %s119, %s135
    %p137 = scmp.eq.s32.totalorder %s17, 0
    %p138 = por %p136, %p137
    %p139 = scmp.le.s32.totalorder 1, %s11
    %p140 = scmp.lt.s32.totalorder %s11, 3
    %p141 = pnand %p139, %p140
    %p142 = pneg %p141
    // Predicated region
    $region9: #{asym_bi_cs_fuse_reduce_pallas.2} parent=5 // pred_check
      _
    $region10: #{asym_bi_cs_fuse_reduce_pallas.2} parent=5 // pred_check_branch
      %144 = sbr.rel (%p141) target = $region12
    $region11: #{asym_bi_cs_fuse_reduce_pallas.2} parent=5 // pred_region
      %s145 = ssub.s32 %s11, 1
      // Predicated region
      $region13: #{asym_bi_cs_fuse_reduce_pallas.2} parent=11 // pred_check
        %p146 = pneg %p58
      $region14: #{asym_bi_cs_fuse_reduce_pallas.2} parent=11 // pred_check_branch
        %148 = sbr.rel (%p146) target = $region16
      $region15: #{asym_bi_cs_fuse_reduce_pallas.2} parent=11 // pred_region
        _
      $region16: #{asym_bi_cs_fuse_reduce_pallas.2} parent=11 // pred_fallthru
        _
      // Predicated region
      $region17: #{asym_bi_cs_fuse_reduce_pallas.2} parent=11 // pred_check
        %p149 = pneg %p79
      $region18: #{asym_bi_cs_fuse_reduce_pallas.2} parent=11 // pred_check_branch
        %151 = sbr.rel (%p149) target = $region20
      $region19: #{asym_bi_cs_fuse_reduce_pallas.2} parent=11 // pred_region
        _
      $region20: #{asym_bi_cs_fuse_reduce_pallas.2} parent=11 // pred_fallthru
        _
    $region12: #{asym_bi_cs_fuse_reduce_pallas.2} parent=5 // pred_fallthru
      _
    %p152 = scmp.lt.s32.totalorder %s11, 2
    // Predicated region
    $region21: #{asym_bi_cs_fuse_reduce_pallas.2} parent=5 // pred_check
      %p153 = pneg %p152
    $region22: #{asym_bi_cs_fuse_reduce_pallas.2} parent=5 // pred_check_branch
      %155 = sbr.rel (%p153) target = $region24
    $region23: #{asym_bi_cs_fuse_reduce_pallas.2} parent=5 // pred_region
      // Predicated region
      $region25: #{asym_bi_cs_fuse_reduce_pallas.2} parent=23 // pred_check
        %p156 = pneg %p31
      $region26: #{asym_bi_cs_fuse_reduce_pallas.2} parent=23 // pred_check_branch
        %158 = sbr.rel (%p156) target = $region28
      $region27: #{asym_bi_cs_fuse_reduce_pallas.2} parent=23 // pred_region
        %p159 = scmp.lt.s32.totalorder %s11, 1
        %s160 = scalar_select %p159, %s11, 1
        %s161 = smul.addr %s160, 2
        %s162 = smul.addr %s161, 8
        %s163 = scalar_lea.vmem %s0, %s162
      $region28: #{asym_bi_cs_fuse_reduce_pallas.2} parent=23 // pred_fallthru
        _
    $region24: #{asym_bi_cs_fuse_reduce_pallas.2} parent=5 // pred_fallthru
      _
    %p164 = scmp.le.s32.totalorder 1, %s11
    %p165 = scmp.lt.s32.totalorder %s11, 3
    %p166 = pnand %p164, %p165
    %p167 = pneg %p166
    // Predicated region
    $region29: #{asym_bi_cs_fuse_reduce_pallas.2} parent=5 // pred_check
      _
    $region30: #{asym_bi_cs_fuse_reduce_pallas.2} parent=5 // pred_check_branch
      %169 = sbr.rel (%p166) target = $region32
    $region31: #{asym_bi_cs_fuse_reduce_pallas.2} parent=5 // pred_region
      %s170 = ssub.s32 %s11, 1
      %p171 = scmp.lt.s32.totalorder %s16, 1
      %s172 = scalar_select %p171, %s16, 1
      %s173 = smul.addr %s172, 2
      %s174 = smul.addr %s173, 8
      %s175 = scalar_lea.vmem %s0, %s174
      %p176 = pneg %p37
      %p177 = pneg %p34
      %p178 = pneg %p58
      %p179 = pneg %p55
      %p180 = pneg %p79
      %p181 = pneg %p76
      %p182 = pneg %p105
      %p183 = pneg %p102
      %p184 = scmp.lt.s32.totalorder %s16, 1
      %s185 = scalar_select %p184, %s16, 1
      %s186 = smul.addr %s185, 4
      %s187 = smul.addr %s186, 8
      %s188 = scalar_lea.vmem %s3, %s187
      %p189 = pneg %p131
      %p190 = pneg %p128
      %p191 = scmp.lt.s32.totalorder %s16, 1
      %s192 = scalar_select %p191, %s16, 1
      %s193 = smul.addr %s192, 2
      %s194 = smul.addr %s193, 8
      %s195 = scalar_lea.vmem %s4, %s194
      %p196 = scmp.lt.s32.totalorder %s16, 1
      %s197 = scalar_select %p196, %s16, 1
      %s198 = smul.addr %s197, 2
      %s199 = smul.addr %s198, 8
      %s200 = scalar_lea.vmem %s0, %s199
      %p201 = scmp.lt.s32.totalorder %s16, 1
      %s202 = scalar_select %p201, %s16, 1
      %s203 = smul.addr %s202, 4
      %s204 = smul.addr %s203, 8
      %s205 = scalar_lea.vmem %s3, %s204
      %p206 = scmp.lt.s32.totalorder %s16, 1
      %s207 = scalar_select %p206, %s16, 1
      %s208 = smul.addr %s207, 2
      %s209 = smul.addr %s208, 8
      %s210 = scalar_lea.vmem %s4, %s209
      %v211 = vld [vmem:[%s200] sm:$0xff]
      %v212 = vld [vmem:[%s200 + $0x8] sm:$0xff]
      %v213 = vld [vmem:[%s1] sm:$0xff]
      %v214 = vld [vmem:[%s1 + $0x8] sm:$0xff]
      %v215 = vld [vmem:[%s2] sm:$0xff]
      %v216 = vld [vmem:[%s2 + $0x8] sm:$0xff]
      %218 = vset.pattern.permute.xlu0 0
      %219 = vperm.xlu0 %218, %v215
      %v220 = vpop.permute.xlu0 %219
      %223 = vset.pattern.permute.xlu0 0
      %224 = vperm.xlu0 %223, %v216
      %v225 = vpop.permute.xlu0 %224
      %vm227 = vcmask 64512
      %v229 = vsel %vm227, %v213, 0
      %v232 = vsel %vm227, %v214, 0
      %234 = vmatprep.subr.mxu0 0.0
      %235 = vmatpush1.msra.mxu0 0.0
      %236 = vmatprep.subr.mxu0 0.0
      %237 = vmatpush1.msra.mxu0 0.0
      %238 = vmatprep.subr.mxu0 0.0
      %239 = vmatpush1.msra.mxu0 0.0
      %240 = vmatprep.subr.mxu0 0.0
      %241 = vmatpush1.msra.mxu0 0.0
      %242 = vmatprep.subr.mxu0 0.0
      %243 = vmatpush1.msra.mxu0 0.0
      %244 = vmatprep.subr.mxu0 0.0
      %245 = vmatpush1.msra.mxu0 0.0
      %246 = vmatprep.subr.mxu0 0.0
      %247 = vmatpush1.msra.mxu0 0.0
      %248 = vmatprep.subr.mxu0 0.0
      %249 = vmatpush1.msra.mxu0 0.0
      %250 = vmatprep.subr.mxu0 0.0
      %251 = vmatpush1.msra.mxu0 0.0
      %252 = vmatprep.subr.mxu0 0.0
      %253 = vmatpush1.msra.mxu0 0.0
      %254 = vmatprep.subr.mxu0 0.0
      %255 = vmatpush1.msra.mxu0 0.0
      %256 = vmatprep.subr.mxu0 0.0
      %257 = vmatpush1.msra.mxu0 0.0
      %258 = vmatprep.subr.mxu0 0.0
      %259 = vmatpush1.msra.mxu0 0.0
      %260 = vmatprep.subr.mxu0 0.0
      %261 = vmatpush1.msra.mxu0 0.0
      %262 = vmatprep.subr.mxu0 0.0
      %263 = vmatpush1.msra.mxu0 0.0
      %264 = vmatprep.subr.mxu0 %v212
      %265 = vmatpush1.msra.mxu0 %v211
      %266 = vmatprep.subr.mxu0 0.0
      %267 = vmatpush2.msra.mxu0 0.0
      %268 = vmatprep.subr.mxu0 0.0
      %269 = vmatpush2.msra.mxu0 0.0
      %270 = vmatprep.subr.mxu0 0.0
      %271 = vmatpush2.msra.mxu0 0.0
      %272 = vmatprep.subr.mxu0 0.0
      %273 = vmatpush2.msra.mxu0 0.0
      %274 = vmatprep.subr.mxu0 0.0
      %275 = vmatpush2.msra.mxu0 0.0
      %276 = vmatprep.subr.mxu0 0.0
      %277 = vmatpush2.msra.mxu0 0.0
      %278 = vmatprep.subr.mxu0 0.0
      %279 = vmatpush2.msra.mxu0 0.0
      %280 = vmatprep.subr.mxu0 0.0
      %281 = vmatpush2.msra.mxu0 0.0
      %282 = vmatprep.subr.mxu0 0.0
      %283 = vmatpush2.msra.mxu0 0.0
      %284 = vmatprep.subr.mxu0 0.0
      %285 = vmatpush2.msra.mxu0 0.0
      %286 = vmatprep.subr.mxu0 0.0
      %287 = vmatpush2.msra.mxu0 0.0
      %288 = vmatprep.subr.mxu0 0.0
      %289 = vmatpush2.msra.mxu0 0.0
      %290 = vmatprep.subr.mxu0 0.0
      %291 = vmatpush2.msra.mxu0 0.0
      %292 = vmatprep.subr.mxu0 0.0
      %293 = vmatpush2.msra.mxu0 0.0
      %294 = vmatprep.subr.mxu0 0.0
      %295 = vmatpush2.msra.mxu0 0.0
      %296 = vmatprep.subr.mxu0 0.0
      %297 = vmatpush2.msra.mxu0 0.0
      %298 = vmatprep.mubr.f32.mxu0 0.0
      %299 = vmatmul.mubr.f32.gmra.mxu0 %v229
      %v300 = vpop.f32.mrf.mxu0
      %v301 = vadd.f32 %v220, %v300
      %v302 = vpop.f32.mrf.mxu0
      %v303 = vadd.f32 %v220, %v302
      %304 = vmatprep.mubr.f32.mxu0 0.0
      %305 = vmatmul.mubr.f32.gmra.mxu0 %v232
      %v306 = vpop.f32.mrf.mxu0
      %v307 = vadd.f32 %v225, %v306
      %v308 = vpop.f32.mrf.mxu0
      %v309 = vadd.f32 %v225, %v308
      %310 = vdwg.mxu0
      %v311 = vmax.f32 %v301, 0.0
      %v312 = vmax.f32 %v303, 0.0
      %v313 = vmax.f32 %v307, 0.0
      %v314 = vmax.f32 %v309, 0.0
      %315 = vst [vmem:[%s205] sm:$0xff] %v311
      %316 = vst [vmem:[%s205 + $0x8] sm:$0xff] %v312
      %317 = vst [vmem:[%s205 + $0x10] sm:$0xff] %v313
      %318 = vst [vmem:[%s205 + $0x18] sm:$0xff] %v314
      %v319 = vadd.f32 %v311, %v312
      %320 = vadd.xlane.f32.xlu0 %v319
      %v321 = vpop.xlane.xlu0 %320
      %v322 = vadd.f32 %v313, %v314
      %323 = vadd.xlane.f32.xlu0 %v322
      %v324 = vpop.xlane.xlu0 %323
      %v325 = vmul.f32 %v321, 0.00390625
      %v326 = vmul.f32 %v324, 0.00390625
      %vm327 = vcmask 7168
      %328 = vst.msk [vmem:[%s210] sm:$0xff] %vm327, %v325
      %329 = vst.msk [vmem:[%s210 + $0x8] sm:$0xff] %vm327, %v326
      %p330 = scmp.lt.s32.totalorder %s16, 1
      %s331 = scalar_select %p330, %s16, 1
      %s332 = smul.addr %s331, 4
      %s333 = smul.addr %s332, 8
      %s334 = scalar_lea.vmem %s3, %s333
      %p335 = scmp.lt.s32.totalorder %s16, 1
      %s336 = scalar_select %p335, %s16, 1
      %s337 = smul.addr %s336, 2
      %s338 = smul.addr %s337, 8
      %s339 = scalar_lea.vmem %s4, %s338
      // Predicated region
      $region33: #{asym_bi_cs_fuse_reduce_pallas.2} parent=31 // pred_check
        %p340 = pneg %p102
      $region34: #{asym_bi_cs_fuse_reduce_pallas.2} parent=31 // pred_check_branch
        %342 = sbr.rel (%p340) target = $region36
      $region35: #{asym_bi_cs_fuse_reduce_pallas.2} parent=31 // pred_region
        _
      $region36: #{asym_bi_cs_fuse_reduce_pallas.2} parent=31 // pred_fallthru
        _
      // Predicated region
      $region37: #{asym_bi_cs_fuse_reduce_pallas.2} parent=31 // pred_check
        %p343 = pneg %p128
      $region38: #{asym_bi_cs_fuse_reduce_pallas.2} parent=31 // pred_check_branch
        %345 = sbr.rel (%p343) target = $region40
      $region39: #{asym_bi_cs_fuse_reduce_pallas.2} parent=31 // pred_region
        _
      $region40: #{asym_bi_cs_fuse_reduce_pallas.2} parent=31 // pred_fallthru
        _
    $region32: #{asym_bi_cs_fuse_reduce_pallas.2} parent=5 // pred_fallthru
      _
    %p346 = scmp.le.s32.totalorder 2, %s11
    // Predicated region
    $region41: #{asym_bi_cs_fuse_reduce_pallas.2} parent=5 // pred_check
      %p347 = pneg %p346
    $region42: #{asym_bi_cs_fuse_reduce_pallas.2} parent=5 // pred_check_branch
      %349 = sbr.rel (%p347) target = $region44
    $region43: #{asym_bi_cs_fuse_reduce_pallas.2} parent=5 // pred_region
      %s350 = ssub.s32 %s11, 2
      // Predicated region
      $region45: #{asym_bi_cs_fuse_reduce_pallas.2} parent=43 // pred_check
        %p351 = pneg %p108
      $region46: #{asym_bi_cs_fuse_reduce_pallas.2} parent=43 // pred_check_branch
        %353 = sbr.rel (%p351) target = $region48
      $region47: #{asym_bi_cs_fuse_reduce_pallas.2} parent=43 // pred_region
        %p354 = scmp.lt.s32.totalorder %s17, 1
        %s355 = scalar_select %p354, %s17, 1
        %s356 = smul.addr %s355, 4
        %s357 = smul.addr %s356, 8
        %s358 = scalar_lea.vmem %s3, %s357
      $region48: #{asym_bi_cs_fuse_reduce_pallas.2} parent=43 // pred_fallthru
        _
      // Predicated region
      $region49: #{asym_bi_cs_fuse_reduce_pallas.2} parent=43 // pred_check
        %p359 = pneg %p134
      $region50: #{asym_bi_cs_fuse_reduce_pallas.2} parent=43 // pred_check_branch
        %361 = sbr.rel (%p359) target = $region52
      $region51: #{asym_bi_cs_fuse_reduce_pallas.2} parent=43 // pred_region
        %p362 = scmp.lt.s32.totalorder %s17, 1
        %s363 = scalar_select %p362, %s17, 1
        %s364 = smul.addr %s363, 2
        %s365 = smul.addr %s364, 8
        %s366 = scalar_lea.vmem %s4, %s365
      $region52: #{asym_bi_cs_fuse_reduce_pallas.2} parent=43 // pred_fallthru
        _
    $region44: #{asym_bi_cs_fuse_reduce_pallas.2} parent=5 // pred_fallthru
      _
  $region6: #{asym_bi_cs_fuse_reduce_pallas.2} parent=0 // loop_footer
    %s15 = sadd.s32 1, %s11
  $region7: #{asym_bi_cs_fuse_reduce_pallas.2} parent=0 // loop_footer_branch
    %10 = sbr.rel target = $region3
  $region8: #{asym_bi_cs_fuse_reduce_pallas.2} parent=0 // loop_exit
    _

// kernel: asym_bi_cs_fuse_reduce_pallas.3
$region0: #{asym_bi_cs_fuse_reduce_pallas.3}
  #allocation0 [shape = 'u32[]', space=smem, size = 0x4, offset = 0x4, fixed_abs, tag = 'smem constant byte address 0x4 - core index']
  #allocation1 [shape = 'u32[144,128]{1,0:T(1,128)}', space=vmem, size = 0x12000, scoped, tag = 'internal scratch']
  %s0 = inlined_call_operand.vmem [shape: f32[2,16,256], index: 0, kind: input, shape index: {}]
  %s1 = inlined_call_operand.vmem [shape: f32[2,16,256], index: 1, kind: input, shape index: {}]
  %s2 = inlined_call_operand.vmem [shape: f32[2,16,1], index: 2, kind: input, shape index: {}]
  %s3 = inlined_call_operand.vmem [shape: f32[2,49], index: 3, kind: input, shape index: {}]
  %s4 = inlined_call_operand.vmem [shape: f32[16,144], index: 4, kind: input, shape index: {}]
  %s5 = inlined_call_operand.vmem [shape: f32[16,1], index: 5, kind: input, shape index: {}]
  %s6 = inlined_call_operand.vmem [shape: f32[2,16,256], index: 6, kind: output, shape index: {}]
  %s7 = sld [smem:[#allocation0]]
  $region61: #{asym_bi_cs_fuse_reduce_pallas.3} parent=0
    _
  %s9 = ssub.s32 1, %s7
  %s10 = scalar_select 0, %s9, %s7
  $region1: #{asym_bi_cs_fuse_reduce_pallas.3} parent=0
    #allocation2 [shape = 'u8[1024]{0}', space=smem, size = 0x400, scoped, tag = 'input window, operand 3, single buffered']
    #allocation3 [shape = 's32[2]{0}', space=sflag, size = 0x8, scoped, tag = 'scoped memory for asym_bi_cs_fuse_reduce_pallas.3']
    %11 = vsyncpa [#allocation3], 0
    loop: start=0, step=1, limit=4
    $region2: #{asym_bi_cs_fuse_reduce_pallas.3} parent=1 // loop_pre_header
      _
    $region3: #{asym_bi_cs_fuse_reduce_pallas.3} parent=1 // loop_header
      %s13 = sphi 0, %s17
      %p14 = scmp.ge.s32.totalorder %s13, 4
      %s23 = sphi 0, %s25
      %s26 = sphi 0, %s23
      %s27 = sphi 0, %s26
      %s43 = sphi 0, %s27
      %s49 = sphi 0, %s51
      %s52 = sphi 0, %s49
      %s53 = sphi 0, %s52
      %s69 = sphi 0, %s53
      %s75 = sphi 0, %s77
      %s78 = sphi 0, %s75
      %s79 = sphi 0, %s78
      %s95 = sphi 0, %s79
      %s99 = sphi 0, %s99
      %s101 = sphi 0, %s99
      %s102 = sphi 0, %s101
      %s116 = sphi 0, %s102
      %s120 = sphi 0, %s120
      %s122 = sphi 0, %s120
      %s123 = sphi 0, %s122
      %s137 = sphi 0, %s123
      %s141 = sphi 0, %s141
      %s143 = sphi 0, %s141
      %s144 = sphi 0, %s143
      %s158 = sphi 0, %s144
      %s164 = sphi 0, %s166
      %s167 = sphi 0, %s164
      %s168 = sphi 0, %s167
      %s184 = sphi 0, %s168
    $region4: #{asym_bi_cs_fuse_reduce_pallas.3} parent=1 // loop_header_branch
      %16 = sbr.rel (%p14) target = $region8
    $region5: #{asym_bi_cs_fuse_reduce_pallas.3} parent=1 // loop_body
      %s18 = ssub.s32 %s13, 1
      %s19 = ssub.s32 %s13, 2
      %s20 = sadd.s32 %s13, 1
      %s21 = ssub.s32 %s13, %s20
      %p22 = scmp.eq.s32.totalorder %s21, 0
      %s24 = sadd.s32 %s23, 1
      %s25 = scalar_select %p22, %s23, %s24
      %p28 = pneg %p22
      %p29 = scmp.eq.s32.totalorder %s13, 1
      %p30 = por %p28, %p29
      %p31 = scmp.ne.s32.totalorder %s23, %s26
      %p32 = scmp.eq.s32.totalorder %s13, 0
      %p33 = por %p31, %p32
      %p34 = scmp.ne.s32.totalorder %s23, %s26
      %p35 = scmp.eq.s32.totalorder %s18, 1
      %p36 = por %p34, %p35
      %p37 = scmp.ne.s32.totalorder %s26, %s27
      %p38 = scmp.eq.s32.totalorder %s18, 0
      %p39 = por %p37, %p38
      %p40 = scmp.ne.s32.totalorder %s26, %s27
      %p41 = scmp.eq.s32.totalorder %s19, 1
      %p42 = por %p40, %p41
      %p44 = scmp.ne.s32.totalorder %s27, %s43
      %p45 = scmp.eq.s32.totalorder %s19, 0
      %p46 = por %p44, %p45
      %s47 = ssub.s32 %s13, %s20
      %p48 = scmp.eq.s32.totalorder %s47, 0
      %s50 = sadd.s32 %s49, 1
      %s51 = scalar_select %p48, %s49, %s50
      %p54 = pneg %p48
      %p55 = scmp.eq.s32.totalorder %s13, 1
      %p56 = por %p54, %p55
      %p57 = scmp.ne.s32.totalorder %s49, %s52
      %p58 = scmp.eq.s32.totalorder %s13, 0
      %p59 = por %p57, %p58
      %p60 = scmp.ne.s32.totalorder %s49, %s52
      %p61 = scmp.eq.s32.totalorder %s18, 1
      %p62 = por %p60, %p61
      %p63 = scmp.ne.s32.totalorder %s52, %s53
      %p64 = scmp.eq.s32.totalorder %s18, 0
      %p65 = por %p63, %p64
      %p66 = scmp.ne.s32.totalorder %s52, %s53
      %p67 = scmp.eq.s32.totalorder %s19, 1
      %p68 = por %p66, %p67
      %p70 = scmp.ne.s32.totalorder %s53, %s69
      %p71 = scmp.eq.s32.totalorder %s19, 0
      %p72 = por %p70, %p71
      %s73 = ssub.s32 %s13, %s20
      %p74 = scmp.eq.s32.totalorder %s73, 0
      %s76 = sadd.s32 %s75, 1
      %s77 = scalar_select %p74, %s75, %s76
      %p80 = pneg %p74
      %p81 = scmp.eq.s32.totalorder %s13, 1
      %p82 = por %p80, %p81
      %p83 = scmp.ne.s32.totalorder %s75, %s78
      %p84 = scmp.eq.s32.totalorder %s13, 0
      %p85 = por %p83, %p84
      %p86 = scmp.ne.s32.totalorder %s75, %s78
      %p87 = scmp.eq.s32.totalorder %s18, 1
      %p88 = por %p86, %p87
      %p89 = scmp.ne.s32.totalorder %s78, %s79
      %p90 = scmp.eq.s32.totalorder %s18, 0
      %p91 = por %p89, %p90
      %p92 = scmp.ne.s32.totalorder %s78, %s79
      %p93 = scmp.eq.s32.totalorder %s19, 1
      %p94 = por %p92, %p93
      %p96 = scmp.ne.s32.totalorder %s79, %s95
      %p97 = scmp.eq.s32.totalorder %s19, 0
      %p98 = por %p96, %p97
      %s100 = sadd.s32 %s99, 1
      %p103 = scmp.eq.s32.totalorder %s13, 1
      %p104 = scmp.ne.s32.totalorder %s99, %s101
      %p105 = scmp.eq.s32.totalorder %s13, 0
      %p106 = por %p104, %p105
      %p107 = scmp.ne.s32.totalorder %s99, %s101
      %p108 = scmp.eq.s32.totalorder %s18, 1
      %p109 = por %p107, %p108
      %p110 = scmp.ne.s32.totalorder %s101, %s102
      %p111 = scmp.eq.s32.totalorder %s18, 0
      %p112 = por %p110, %p111
      %p113 = scmp.ne.s32.totalorder %s101, %s102
      %p114 = scmp.eq.s32.totalorder %s19, 1
      %p115 = por %p113, %p114
      %p117 = scmp.ne.s32.totalorder %s102, %s116
      %p118 = scmp.eq.s32.totalorder %s19, 0
      %p119 = por %p117, %p118
      %s121 = sadd.s32 %s120, 1
      %p124 = scmp.eq.s32.totalorder %s13, 1
      %p125 = scmp.ne.s32.totalorder %s120, %s122
      %p126 = scmp.eq.s32.totalorder %s13, 0
      %p127 = por %p125, %p126
      %p128 = scmp.ne.s32.totalorder %s120, %s122
      %p129 = scmp.eq.s32.totalorder %s18, 1
      %p130 = por %p128, %p129
      %p131 = scmp.ne.s32.totalorder %s122, %s123
      %p132 = scmp.eq.s32.totalorder %s18, 0
      %p133 = por %p131, %p132
      %p134 = scmp.ne.s32.totalorder %s122, %s123
      %p135 = scmp.eq.s32.totalorder %s19, 1
      %p136 = por %p134, %p135
      %p138 = scmp.ne.s32.totalorder %s123, %s137
      %p139 = scmp.eq.s32.totalorder %s19, 0
      %p140 = por %p138, %p139
      %s142 = sadd.s32 %s141, 1
      %p145 = scmp.eq.s32.totalorder %s13, 1
      %p146 = scmp.ne.s32.totalorder %s141, %s143
      %p147 = scmp.eq.s32.totalorder %s13, 0
      %p148 = por %p146, %p147
      %p149 = scmp.ne.s32.totalorder %s141, %s143
      %p150 = scmp.eq.s32.totalorder %s18, 1
      %p151 = por %p149, %p150
      %p152 = scmp.ne.s32.totalorder %s143, %s144
      %p153 = scmp.eq.s32.totalorder %s18, 0
      %p154 = por %p152, %p153
      %p155 = scmp.ne.s32.totalorder %s143, %s144
      %p156 = scmp.eq.s32.totalorder %s19, 1
      %p157 = por %p155, %p156
      %p159 = scmp.ne.s32.totalorder %s144, %s158
      %p160 = scmp.eq.s32.totalorder %s19, 0
      %p161 = por %p159, %p160
      %s162 = ssub.s32 %s13, %s20
      %p163 = scmp.eq.s32.totalorder %s162, 0
      %s165 = sadd.s32 %s164, 1
      %s166 = scalar_select %p163, %s164, %s165
      %p169 = pneg %p163
      %p170 = scmp.eq.s32.totalorder %s13, 1
      %p171 = por %p169, %p170
      %p172 = scmp.ne.s32.totalorder %s164, %s167
      %p173 = scmp.eq.s32.totalorder %s13, 0
      %p174 = por %p172, %p173
      %p175 = scmp.ne.s32.totalorder %s164, %s167
      %p176 = scmp.eq.s32.totalorder %s18, 1
      %p177 = por %p175, %p176
      %p178 = scmp.ne.s32.totalorder %s167, %s168
      %p179 = scmp.eq.s32.totalorder %s18, 0
      %p180 = por %p178, %p179
      %p181 = scmp.ne.s32.totalorder %s167, %s168
      %p182 = scmp.eq.s32.totalorder %s19, 1
      %p183 = por %p181, %p182
      %p185 = scmp.ne.s32.totalorder %s168, %s184
      %p186 = scmp.eq.s32.totalorder %s19, 0
      %p187 = por %p185, %p186
      %p188 = scmp.le.s32.totalorder 1, %s13
      %p189 = scmp.lt.s32.totalorder %s13, 3
      %p190 = pnand %p188, %p189
      %p191 = pneg %p190
      // Predicated region
      $region9: #{asym_bi_cs_fuse_reduce_pallas.3} parent=5 // pred_check
        _
      $region10: #{asym_bi_cs_fuse_reduce_pallas.3} parent=5 // pred_check_branch
        %193 = sbr.rel (%p190) target = $region12
      $region11: #{asym_bi_cs_fuse_reduce_pallas.3} parent=5 // pred_region
        %s194 = ssub.s32 %s13, 1
        // Predicated region
        $region13: #{asym_bi_cs_fuse_reduce_pallas.3} parent=11 // pred_check
          %p195 = pneg %p112
        $region14: #{asym_bi_cs_fuse_reduce_pallas.3} parent=11 // pred_check_branch
          %197 = sbr.rel (%p195) target = $region16
        $region15: #{asym_bi_cs_fuse_reduce_pallas.3} parent=11 // pred_region
          %s199 = ssub.s32 32, 32
          %200 = vsyncadd [#allocation3], %s199
          %s202 = sshll.u32 %s3, 4
          %s203 = int_to_ptr.vmem [resolvable:$true] %s202
          %205 = dma.vmem_to_smem %s203, 32, [#allocation2], [#allocation3]
        $region16: #{asym_bi_cs_fuse_reduce_pallas.3} parent=11 // pred_fallthru
          _
        // Predicated region
        $region17: #{asym_bi_cs_fuse_reduce_pallas.3} parent=11 // pred_check
          %p206 = pneg %p133
        $region18: #{asym_bi_cs_fuse_reduce_pallas.3} parent=11 // pred_check_branch
          %208 = sbr.rel (%p206) target = $region20
        $region19: #{asym_bi_cs_fuse_reduce_pallas.3} parent=11 // pred_region
          _
        $region20: #{asym_bi_cs_fuse_reduce_pallas.3} parent=11 // pred_fallthru
          _
        // Predicated region
        $region21: #{asym_bi_cs_fuse_reduce_pallas.3} parent=11 // pred_check
          %p209 = pneg %p154
        $region22: #{asym_bi_cs_fuse_reduce_pallas.3} parent=11 // pred_check_branch
          %211 = sbr.rel (%p209) target = $region24
        $region23: #{asym_bi_cs_fuse_reduce_pallas.3} parent=11 // pred_region
          _
        $region24: #{asym_bi_cs_fuse_reduce_pallas.3} parent=11 // pred_fallthru
          _
      $region12: #{asym_bi_cs_fuse_reduce_pallas.3} parent=5 // pred_fallthru
        _
      %p212 = scmp.lt.s32.totalorder %s13, 2
      // Predicated region
      $region25: #{asym_bi_cs_fuse_reduce_pallas.3} parent=5 // pred_check
        %p213 = pneg %p212
      $region26: #{asym_bi_cs_fuse_reduce_pallas.3} parent=5 // pred_check_branch
        %215 = sbr.rel (%p213) target = $region28
      $region27: #{asym_bi_cs_fuse_reduce_pallas.3} parent=5 // pred_region
        // Predicated region
        $region29: #{asym_bi_cs_fuse_reduce_pallas.3} parent=27 // pred_check
          %p216 = pneg %p33
        $region30: #{asym_bi_cs_fuse_reduce_pallas.3} parent=27 // pred_check_branch
          %218 = sbr.rel (%p216) target = $region32
        $region31: #{asym_bi_cs_fuse_reduce_pallas.3} parent=27 // pred_region
          %p219 = scmp.lt.s32.totalorder %s13, 1
          %s220 = scalar_select %p219, %s13, 1
          %s221 = smul.addr %s220, 4
          %s222 = smul.addr %s221, 8
          %s223 = scalar_lea.vmem %s0, %s222
        $region32: #{asym_bi_cs_fuse_reduce_pallas.3} parent=27 // pred_fallthru
          _
        // Predicated region
        $region33: #{asym_bi_cs_fuse_reduce_pallas.3} parent=27 // pred_check
          %p224 = pneg %p59
        $region34: #{asym_bi_cs_fuse_reduce_pallas.3} parent=27 // pred_check_branch
          %226 = sbr.rel (%p224) target = $region36
        $region35: #{asym_bi_cs_fuse_reduce_pallas.3} parent=27 // pred_region
          %p227 = scmp.lt.s32.totalorder %s13, 1
          %s228 = scalar_select %p227, %s13, 1
          %s229 = smul.addr %s228, 4
          %s230 = smul.addr %s229, 8
          %s231 = scalar_lea.vmem %s1, %s230
        $region36: #{asym_bi_cs_fuse_reduce_pallas.3} parent=27 // pred_fallthru
          _
        // Predicated region
        $region37: #{asym_bi_cs_fuse_reduce_pallas.3} parent=27 // pred_check
          %p232 = pneg %p85
        $region38: #{asym_bi_cs_fuse_reduce_pallas.3} parent=27 // pred_check_branch
          %234 = sbr.rel (%p232) target = $region40
        $region39: #{asym_bi_cs_fuse_reduce_pallas.3} parent=27 // pred_region
          %p235 = scmp.lt.s32.totalorder %s13, 1
          %s236 = scalar_select %p235, %s13, 1
          %s237 = smul.addr %s236, 2
          %s238 = smul.addr %s237, 8
          %s239 = scalar_lea.vmem %s2, %s238
        $region40: #{asym_bi_cs_fuse_reduce_pallas.3} parent=27 // pred_fallthru
          _
      $region28: #{asym_bi_cs_fuse_reduce_pallas.3} parent=5 // pred_fallthru
        _
      %p240 = scmp.le.s32.totalorder 1, %s13
      %p241 = scmp.lt.s32.totalorder %s13, 3
      %p242 = pnand %p240, %p241
      %p243 = pneg %p242
      // Predicated region
      $region41: #{asym_bi_cs_fuse_reduce_pallas.3} parent=5 // pred_check
        _
      $region42: #{asym_bi_cs_fuse_reduce_pallas.3} parent=5 // pred_check_branch
        %245 = sbr.rel (%p242) target = $region44
      $region43: #{asym_bi_cs_fuse_reduce_pallas.3} parent=5 // pred_region
        %s246 = ssub.s32 %s13, 1
        // Predicated region
        $region45: #{asym_bi_cs_fuse_reduce_pallas.3} parent=43 // pred_check
          %p247 = pneg %p112
        $region46: #{asym_bi_cs_fuse_reduce_pallas.3} parent=43 // pred_check_branch
          %249 = sbr.rel (%p247) target = $region48
        $region47: #{asym_bi_cs_fuse_reduce_pallas.3} parent=43 // pred_region
          %250 = dma.done [#allocation3], 32
        $region48: #{asym_bi_cs_fuse_reduce_pallas.3} parent=43 // pred_fallthru
          _
        %251 = sfence
        %p252 = scmp.lt.s32.totalorder %s18, 1
        %s253 = scalar_select %p252, %s18, 1
        %s254 = smul.addr %s253, 4
        %s255 = smul.addr %s254, 8
        %s256 = scalar_lea.vmem %s0, %s255
        %p257 = pneg %p39
        %p258 = pneg %p36
        %p259 = scmp.lt.s32.totalorder %s18, 1
        %s260 = scalar_select %p259, %s18, 1
        %s261 = smul.addr %s260, 4
        %s262 = smul.addr %s261, 8
        %s263 = scalar_lea.vmem %s1, %s262
        %p264 = pneg %p65
        %p265 = pneg %p62
        %p266 = scmp.lt.s32.totalorder %s18, 1
        %s267 = scalar_select %p266, %s18, 1
        %s268 = smul.addr %s267, 2
        %s269 = smul.addr %s268, 8
        %s270 = scalar_lea.vmem %s2, %s269
        %p271 = pneg %p91
        %p272 = pneg %p88
        %p273 = pneg %p112
        %p274 = pneg %p109
        %p275 = pneg %p133
        %p276 = pneg %p130
        %p277 = pneg %p154
        %p278 = pneg %p151
        %p279 = pneg %p180
        %p280 = pneg %p177
        %p281 = scmp.lt.s32.totalorder %s18, 1
        %s282 = scalar_select %p281, %s18, 1
        %s283 = smul.addr %s282, 4
        %s284 = smul.addr %s283, 8
        %s285 = scalar_lea.vmem %s6, %s284
        %p286 = scmp.lt.s32.totalorder %s18, 1
        %s287 = scalar_select %p286, %s18, 1
        %s288 = smul.addr %s287, 4
        %s289 = smul.addr %s288, 8
        %s290 = scalar_lea.vmem %s0, %s289
        %p291 = scmp.lt.s32.totalorder %s18, 1
        %s292 = scalar_select %p291, %s18, 1
        %s293 = smul.addr %s292, 4
        %s294 = smul.addr %s293, 8
        %s295 = scalar_lea.vmem %s1, %s294
        %p296 = scmp.lt.s32.totalorder %s18, 1
        %s297 = scalar_select %p296, %s18, 1
        %s298 = smul.addr %s297, 2
        %s299 = smul.addr %s298, 8
        %s300 = scalar_lea.vmem %s2, %s299
        %p301 = scmp.lt.s32.totalorder %s18, 1
        %s302 = scalar_select %p301, %s18, 1
        %s303 = smul.addr %s302, 4
        %s304 = smul.addr %s303, 8
        %s305 = scalar_lea.vmem %s6, %s304
        %v306 = vld [vmem:[%s290] sm:$0xff]
        %v307 = vld [vmem:[%s290 + $0x8] sm:$0xff]
        %v308 = vld [vmem:[%s290 + $0x10] sm:$0xff]
        %v309 = vld [vmem:[%s290 + $0x18] sm:$0xff]
        %v310 = vld [vmem:[%s295] sm:$0xff]
        %v311 = vld [vmem:[%s295 + $0x8] sm:$0xff]
        %v312 = vld [vmem:[%s295 + $0x10] sm:$0xff]
        %v313 = vld [vmem:[%s295 + $0x18] sm:$0xff]
        %v314 = vld [vmem:[%s300] sm:$0xff]
        %v315 = vld [vmem:[%s300 + $0x8] sm:$0xff]
        %v316 = vlaneseq
        %v317 = vand.u32 %v316, 127
        %v318 = vadd.s32 %v317, 128
        %vm319 = vcmp.lt.s32.totalorder %v317, 0
        %v320 = vsub.s32 0, %v317
        %v321 = vsel %vm319, %v320, %v317
        %v322 = vshrl.u32 %v321, 4
        %v323 = vand.u32 %v321, 15
        %v324 = vsub.s32 0, %v323
        %v325 = vsel %vm319, %v324, %v323
        %vm326 = vcmp.lt.s32.totalorder %v318, 0
        %v327 = vsub.s32 0, %v318
        %v328 = vsel %vm326, %v327, %v318
        %v329 = vshrl.u32 %v328, 4
        %v330 = vand.u32 %v328, 15
        %v331 = vsub.s32 0, %v330
        %v332 = vsel %vm326, %v331, %v330
        %vm333 = vcmp.ne.s32.totalorder %v325, 0
        %vm334 = vcmp.ne.s32.totalorder %v332, 0
        %vm335 = vcmp.lt.s32.totalorder %v325, 0
        %vm336 = vcmp.lt.s32.totalorder %v332, 0
        %vm337 = vmand %vm335, %vm333
        %vm338 = vmand %vm336, %vm334
        %v339 = vadd.s32 %v325, 16
        %v340 = vadd.s32 %v332, 16
        %v341 = vsel %vm337, %v339, %v325
        %v342 = vsel %vm338, %v340, %v332
        %v343 = vadd.s32 %v341, 4294967293
        %v344 = vadd.s32 %v342, 4294967293
        %vm345 = vcmp.ge.s32.totalorder %v343, 0
        %vm346 = vcmp.ge.s32.totalorder %v344, 0
        %vm347 = vcmp.lt.s32.totalorder %v343, 16
        %vm348 = vcmp.lt.s32.totalorder %v344, 16
        %vm349 = vmand %vm345, %vm347
        %vm350 = vmand %vm346, %vm348
        %v351 = vsel %vm349, 1.0, 0.0
        %v352 = vsel %vm350, 1.0, 0.0
        %v353 = vadd.s32 %v341, 4294967294
        %v354 = vadd.s32 %v342, 4294967294
        %vm355 = vcmp.ge.s32.totalorder %v353, 0
        %vm356 = vcmp.ge.s32.totalorder %v354, 0
        %vm357 = vcmp.lt.s32.totalorder %v353, 16
        %vm358 = vcmp.lt.s32.totalorder %v354, 16
        %vm359 = vmand %vm355, %vm357
        %vm360 = vmand %vm356, %vm358
        %v361 = vsel %vm359, 1.0, 0.0
        %v362 = vsel %vm360, 1.0, 0.0
        %v363 = vadd.s32 %v341, 4294967295
        %v364 = vadd.s32 %v342, 4294967295
        %vm365 = vcmp.ge.s32.totalorder %v363, 0
        %vm366 = vcmp.ge.s32.totalorder %v364, 0
        %vm367 = vcmp.lt.s32.totalorder %v363, 16
        %vm368 = vcmp.lt.s32.totalorder %v364, 16
        %vm369 = vmand %vm365, %vm367
        %vm370 = vmand %vm366, %vm368
        %v371 = vsel %vm369, 1.0, 0.0
        %v372 = vsel %vm370, 1.0, 0.0
        %vm373 = vcmp.ge.s32.totalorder %v341, 0
        %vm374 = vcmp.ge.s32.totalorder %v342, 0
        %vm375 = vcmp.lt.s32.totalorder %v341, 16
        %vm376 = vcmp.lt.s32.totalorder %v342, 16
        %vm377 = vmand %vm373, %vm375
        %vm378 = vmand %vm374, %vm376
        %v379 = vsel %vm377, 1.0, 0.0
        %v380 = vsel %vm378, 1.0, 0.0
        %v381 = vadd.s32 %v341, 1
        %v382 = vadd.s32 %v342, 1
        %vm383 = vcmp.ge.s32.totalorder %v381, 0
        %vm384 = vcmp.ge.s32.totalorder %v382, 0
        %vm385 = vcmp.lt.s32.totalorder %v381, 16
        %vm386 = vcmp.lt.s32.totalorder %v382, 16
        %vm387 = vmand %vm383, %vm385
        %vm388 = vmand %vm384, %vm386
        %v389 = vsel %vm387, 1.0, 0.0
        %v390 = vsel %vm388, 1.0, 0.0
        %v391 = vadd.s32 %v341, 2
        %v392 = vadd.s32 %v342, 2
        %vm393 = vcmp.ge.s32.totalorder %v391, 0
        %vm394 = vcmp.ge.s32.totalorder %v392, 0
        %vm395 = vcmp.lt.s32.totalorder %v391, 16
        %vm396 = vcmp.lt.s32.totalorder %v392, 16
        %vm397 = vmand %vm393, %vm395
        %vm398 = vmand %vm394, %vm396
        %v399 = vsel %vm397, 1.0, 0.0
        %v400 = vsel %vm398, 1.0, 0.0
        %v401 = vadd.s32 %v341, 3
        %v402 = vadd.s32 %v342, 3
        %vm403 = vcmp.ge.s32.totalorder %v401, 0
        %vm404 = vcmp.ge.s32.totalorder %v402, 0
        %vm405 = vcmp.lt.s32.totalorder %v401, 16
        %vm406 = vcmp.lt.s32.totalorder %v402, 16
        %vm407 = vmand %vm403, %vm405
        %vm408 = vmand %vm404, %vm406
        %v409 = vsel %vm407, 1.0, 0.0
        %v410 = vsel %vm408, 1.0, 0.0
        %v411 = vadd.f32 %v306, %v308
        %v412 = vrot.slane %v411, 4
        %v413 = vadd.f32 %v411, %v412
        %v414 = vrot.slane %v413, 2
        %v415 = vadd.f32 %v413, %v414
        %v416 = vrot.slane %v415, 1
        %v417 = vadd.f32 %v415, %v416
        %v418 = vadd.f32 %v307, %v309
        %v419 = vrot.slane %v418, 4
        %v420 = vadd.f32 %v418, %v419
        %v421 = vrot.slane %v420, 2
        %v422 = vadd.f32 %v420, %v421
        %v423 = vrot.slane %v422, 1
        %v424 = vadd.f32 %v422, %v423
        %v425 = vrcp.pop 16.0
        %v426 = vmul.f32 %v417, %v425
        %v427 = vmul.f32 %v424, %v425
        %v428 = vmax.f32 %v306, %v308
        %v429 = vrot.slane %v428, 4
        %v430 = vmax.f32 %v428, %v429
        %v431 = vrot.slane %v430, 2
        %v432 = vmax.f32 %v430, %v431
        %v433 = vrot.slane %v432, 1
        %v434 = vmax.f32 %v432, %v433
        %v435 = vmax.f32 %v307, %v309
        %v436 = vrot.slane %v435, 4
        %v437 = vmax.f32 %v435, %v436
        %v438 = vrot.slane %v437, 2
        %v439 = vmax.f32 %v437, %v438
        %v440 = vrot.slane %v439, 1
        %v441 = vmax.f32 %v439, %v440
        %s442 = sld [smem:[#allocation2]]
        %v443 = vstv %s442
        %v444 = vmul.f32 %v443, 0.0
        %v445 = vmul.f32 %v443, %v426
        %v446 = vmul.f32 %v443, %v427
        %s447 = sld [smem:[#allocation2 + $0x80]]
        %v448 = vstv %s447
        %v449 = vmul.f32 %v448, 0.0
        %v450 = vmul.f32 %v448, %v434
        %v451 = vmul.f32 %v448, %v441
        %v452 = vadd.f32 %v444, %v449
        %v453 = vadd.f32 %v445, %v450
        %v454 = vadd.f32 %v446, %v451
        %457 = vrot.lane.b32.xlu0 %v351, 77
        %v458 = vpop.permute.xlu0 %457
        %459 = vrot.lane.b32.xlu0 %v352, 77
        %v460 = vpop.permute.xlu0 %459
        %vm461 = vcmask 629760
        %v462 = vsel %vm461, %v458, %v460
        %v466 = vmul.f32 %v452, %v458
        %v467 = vmul.f32 %v453, %v462
        %v468 = vmul.f32 %v454, %v460
        %v469 = vadd.f32 %v466, 0.0
        %v470 = vadd.f32 %v467, 0.0
        %v471 = vadd.f32 %v468, 0.0
        %s472 = sld [smem:[#allocation2 + $0x1]]
        %v473 = vstv %s472
        %v474 = vmul.f32 %v473, 0.0
        %v475 = vmul.f32 %v473, %v426
        %v476 = vmul.f32 %v473, %v427
        %s477 = sld [smem:[#allocation2 + $0x81]]
        %v478 = vstv %s477
        %v479 = vmul.f32 %v478, 0.0
        %v480 = vmul.f32 %v478, %v434
        %v481 = vmul.f32 %v478, %v441
        %v482 = vadd.f32 %v474, %v479
        %v483 = vadd.f32 %v475, %v480
        %v484 = vadd.f32 %v476, %v481
        %487 = vrot.lane.b32.xlu0 %v361, 78
        %v488 = vpop.permute.xlu0 %487
        %489 = vrot.lane.b32.xlu0 %v362, 78
        %v490 = vpop.permute.xlu0 %489
        %vm491 = vcmask 637952
        %v492 = vsel %vm491, %v488, %v490
        %v496 = vmul.f32 %v482, %v488
        %v497 = vmul.f32 %v483, %v492
        %v498 = vmul.f32 %v484, %v490
        %502 = vrot.lane.b32.xlu0 %v496, 127
        %v503 = vpop.permute.xlu0 %502
        %504 = vrot.lane.b32.xlu0 %v497, 127
        %v505 = vpop.permute.xlu0 %504
        %506 = vrot.lane.b32.xlu0 %v498, 127
        %v507 = vpop.permute.xlu0 %506
        %vm508 = vcmask 1039360
        %v509 = vsel %vm508, %v503, %v505
        %v510 = vsel %vm508, %v505, %v507
        %v514 = vadd.f32 %v469, %v509
        %v515 = vadd.f32 %v470, %v510
        %v516 = vadd.f32 %v471, %v507
        %s517 = sld [smem:[#allocation2 + $0x2]]
        %v518 = vstv %s517
        %v519 = vmul.f32 %v518, 0.0
        %v520 = vmul.f32 %v518, %v426
        %v521 = vmul.f32 %v518, %v427
        %s522 = sld [smem:[#allocation2 + $0x82]]
        %v523 = vstv %s522
        %v524 = vmul.f32 %v523, 0.0
        %v525 = vmul.f32 %v523, %v434
        %v526 = vmul.f32 %v523, %v441
        %v527 = vadd.f32 %v519, %v524
        %v528 = vadd.f32 %v520, %v525
        %v529 = vadd.f32 %v521, %v526
        %532 = vrot.lane.b32.xlu0 %v371, 79
        %v533 = vpop.permute.xlu0 %532
        %534 = vrot.lane.b32.xlu0 %v372, 79
        %v535 = vpop.permute.xlu0 %534
        %vm536 = vcmask 646144
        %v537 = vsel %vm536, %v533, %v535
        %v541 = vmul.f32 %v527, %v533
        %v542 = vmul.f32 %v528, %v537
        %v543 = vmul.f32 %v529, %v535
        %547 = vrot.lane.b32.xlu0 %v541, 126
        %v548 = vpop.permute.xlu0 %547
        %549 = vrot.lane.b32.xlu0 %v542, 126
        %v550 = vpop.permute.xlu0 %549
        %551 = vrot.lane.b32.xlu0 %v543, 126
        %v552 = vpop.permute.xlu0 %551
        %vm553 = vcmask 1031168
        %v554 = vsel %vm553, %v548, %v550
        %v555 = vsel %vm553, %v550, %v552
        %v559 = vadd.f32 %v514, %v554
        %v560 = vadd.f32 %v515, %v555
        %v561 = vadd.f32 %v516, %v552
        %s562 = sld [smem:[#allocation2 + $0x3]]
        %v563 = vstv %s562
        %v564 = vmul.f32 %v563, 0.0
        %v565 = vmul.f32 %v563, %v426
        %v566 = vmul.f32 %v563, %v427
        %s567 = sld [smem:[#allocation2 + $0x83]]
        %v568 = vstv %s567
        %v569 = vmul.f32 %v568, 0.0
        %v570 = vmul.f32 %v568, %v434
        %v571 = vmul.f32 %v568, %v441
        %v572 = vadd.f32 %v564, %v569
        %v573 = vadd.f32 %v565, %v570
        %v574 = vadd.f32 %v566, %v571
        %577 = vrot.lane.b32.xlu0 %v379, 80
        %v578 = vpop.permute.xlu0 %577
        %579 = vrot.lane.b32.xlu0 %v380, 80
        %v580 = vpop.permute.xlu0 %579
        %vm581 = vcmask 654336
        %v582 = vsel %vm581, %v578, %v580
        %v586 = vmul.f32 %v572, %v578
        %v587 = vmul.f32 %v573, %v582
        %v588 = vmul.f32 %v574, %v580
        %592 = vrot.lane.b32.xlu0 %v586, 125
        %v593 = vpop.permute.xlu0 %592
        %594 = vrot.lane.b32.xlu0 %v587, 125
        %v595 = vpop.permute.xlu0 %594
        %596 = vrot.lane.b32.xlu0 %v588, 125
        %v597 = vpop.permute.xlu0 %596
        %vm598 = vcmask 1022976
        %v599 = vsel %vm598, %v593, %v595
        %v600 = vsel %vm598, %v595, %v597
        %v604 = vadd.f32 %v559, %v599
        %v605 = vadd.f32 %v560, %v600
        %v606 = vadd.f32 %v561, %v597
        %s607 = sld [smem:[#allocation2 + $0x4]]
        %v608 = vstv %s607
        %v609 = vmul.f32 %v608, 0.0
        %v610 = vmul.f32 %v608, %v426
        %v611 = vmul.f32 %v608, %v427
        %s612 = sld [smem:[#allocation2 + $0x84]]
        %v613 = vstv %s612
        %v614 = vmul.f32 %v613, 0.0
        %v615 = vmul.f32 %v613, %v434
        %v616 = vmul.f32 %v613, %v441
        %v617 = vadd.f32 %v609, %v614
        %v618 = vadd.f32 %v610, %v615
        %v619 = vadd.f32 %v611, %v616
        %622 = vrot.lane.b32.xlu0 %v389, 81
        %v623 = vpop.permute.xlu0 %622
        %624 = vrot.lane.b32.xlu0 %v390, 81
        %v625 = vpop.permute.xlu0 %624
        %vm626 = vcmask 662528
        %v627 = vsel %vm626, %v623, %v625
        %v631 = vmul.f32 %v617, %v623
        %v632 = vmul.f32 %v618, %v627
        %v633 = vmul.f32 %v619, %v625
        %637 = vrot.lane.b32.xlu0 %v631, 124
        %v638 = vpop.permute.xlu0 %637
        %639 = vrot.lane.b32.xlu0 %v632, 124
        %v640 = vpop.permute.xlu0 %639
        %641 = vrot.lane.b32.xlu0 %v633, 124
        %v642 = vpop.permute.xlu0 %641
        %vm643 = vcmask 1014784
        %v644 = vsel %vm643, %v638, %v640
        %v645 = vsel %vm643, %v640, %v642
        %v649 = vadd.f32 %v604, %v644
        %v650 = vadd.f32 %v605, %v645
        %v651 = vadd.f32 %v606, %v642
        %s652 = sld [smem:[#allocation2 + $0x5]]
        %v653 = vstv %s652
        %v654 = vmul.f32 %v653, 0.0
        %v655 = vmul.f32 %v653, %v426
        %v656 = vmul.f32 %v653, %v427
        %s657 = sld [smem:[#allocation2 + $0x85]]
        %v658 = vstv %s657
        %v659 = vmul.f32 %v658, 0.0
        %v660 = vmul.f32 %v658, %v434
        %v661 = vmul.f32 %v658, %v441
        %v662 = vadd.f32 %v654, %v659
        %v663 = vadd.f32 %v655, %v660
        %v664 = vadd.f32 %v656, %v661
        %667 = vrot.lane.b32.xlu0 %v399, 82
        %v668 = vpop.permute.xlu0 %667
        %669 = vrot.lane.b32.xlu0 %v400, 82
        %v670 = vpop.permute.xlu0 %669
        %vm671 = vcmask 670720
        %v672 = vsel %vm671, %v668, %v670
        %v676 = vmul.f32 %v662, %v668
        %v677 = vmul.f32 %v663, %v672
        %v678 = vmul.f32 %v664, %v670
        %682 = vrot.lane.b32.xlu0 %v676, 123
        %v683 = vpop.permute.xlu0 %682
        %684 = vrot.lane.b32.xlu0 %v677, 123
        %v685 = vpop.permute.xlu0 %684
        %686 = vrot.lane.b32.xlu0 %v678, 123
        %v687 = vpop.permute.xlu0 %686
        %vm688 = vcmask 1006592
        %v689 = vsel %vm688, %v683, %v685
        %v690 = vsel %vm688, %v685, %v687
        %v694 = vadd.f32 %v649, %v689
        %v695 = vadd.f32 %v650, %v690
        %v696 = vadd.f32 %v651, %v687
        %s697 = sld [smem:[#allocation2 + $0x6]]
        %v698 = vstv %s697
        %v699 = vmul.f32 %v698, 0.0
        %v700 = vmul.f32 %v698, %v426
        %v701 = vmul.f32 %v698, %v427
        %s702 = sld [smem:[#allocation2 + $0x86]]
        %v703 = vstv %s702
        %v704 = vmul.f32 %v703, 0.0
        %v705 = vmul.f32 %v703, %v434
        %v706 = vmul.f32 %v703, %v441
        %v707 = vadd.f32 %v699, %v704
        %v708 = vadd.f32 %v700, %v705
        %v709 = vadd.f32 %v701, %v706
        %712 = vrot.lane.b32.xlu0 %v409, 83
        %v713 = vpop.permute.xlu0 %712
        %714 = vrot.lane.b32.xlu0 %v410, 83
        %v715 = vpop.permute.xlu0 %714
        %vm716 = vcmask 678912
        %v717 = vsel %vm716, %v713, %v715
        %v721 = vmul.f32 %v707, %v713
        %v722 = vmul.f32 %v708, %v717
        %v723 = vmul.f32 %v709, %v715
        %727 = vrot.lane.b32.xlu0 %v721, 122
        %v728 = vpop.permute.xlu0 %727
        %729 = vrot.lane.b32.xlu0 %v722, 122
        %v730 = vpop.permute.xlu0 %729
        %731 = vrot.lane.b32.xlu0 %v723, 122
        %v732 = vpop.permute.xlu0 %731
        %vm733 = vcmask 998400
        %v734 = vsel %vm733, %v728, %v730
        %v735 = vsel %vm733, %v730, %v732
        %v739 = vadd.f32 %v694, %v734
        %v740 = vadd.f32 %v695, %v735
        %v741 = vadd.f32 %v696, %v732
        %s742 = sld [smem:[#allocation2 + $0x7]]
        %v743 = vstv %s742
        %v744 = vmul.f32 %v743, 0.0
        %v745 = vmul.f32 %v743, %v426
        %v746 = vmul.f32 %v743, %v427
        %s747 = sld [smem:[#allocation2 + $0x87]]
        %v748 = vstv %s747
        %v749 = vmul.f32 %v748, 0.0
        %v750 = vmul.f32 %v748, %v434
        %v751 = vmul.f32 %v748, %v441
        %v752 = vadd.f32 %v744, %v749
        %v753 = vadd.f32 %v745, %v750
        %v754 = vadd.f32 %v746, %v751
        %755 = vrot.lane.b32.xlu0 %v351, 93
        %v756 = vpop.permute.xlu0 %755
        %757 = vrot.lane.b32.xlu0 %v352, 93
        %v758 = vpop.permute.xlu0 %757
        %vm759 = vcmask 760832
        %v760 = vsel %vm759, %v756, %v758
        %v764 = vmul.f32 %v752, %v756
        %v765 = vmul.f32 %v753, %v760
        %v766 = vmul.f32 %v754, %v758
        %770 = vrot.lane.b32.xlu0 %v764, 112
        %v771 = vpop.permute.xlu0 %770
        %772 = vrot.lane.b32.xlu0 %v765, 112
        %v773 = vpop.permute.xlu0 %772
        %774 = vrot.lane.b32.xlu0 %v766, 112
        %v775 = vpop.permute.xlu0 %774
        %vm776 = vcmask 916480
        %v777 = vsel %vm776, %v771, %v773
        %v778 = vsel %vm776, %v773, %v775
        %v782 = vadd.f32 %v739, %v777
        %v783 = vadd.f32 %v740, %v778
        %v784 = vadd.f32 %v741, %v775
        %s785 = sld [smem:[#allocation2 + $0x8]]
        %v786 = vstv %s785
        %v787 = vmul.f32 %v786, 0.0
        %v788 = vmul.f32 %v786, %v426
        %v789 = vmul.f32 %v786, %v427
        %s790 = sld [smem:[#allocation2 + $0x88]]
        %v791 = vstv %s790
        %v792 = vmul.f32 %v791, 0.0
        %v793 = vmul.f32 %v791, %v434
        %v794 = vmul.f32 %v791, %v441
        %v795 = vadd.f32 %v787, %v792
        %v796 = vadd.f32 %v788, %v793
        %v797 = vadd.f32 %v789, %v794
        %798 = vrot.lane.b32.xlu0 %v361, 94
        %v799 = vpop.permute.xlu0 %798
        %800 = vrot.lane.b32.xlu0 %v362, 94
        %v801 = vpop.permute.xlu0 %800
        %vm802 = vcmask 769024
        %v803 = vsel %vm802, %v799, %v801
        %v807 = vmul.f32 %v795, %v799
        %v808 = vmul.f32 %v796, %v803
        %v809 = vmul.f32 %v797, %v801
        %813 = vrot.lane.b32.xlu0 %v807, 111
        %v814 = vpop.permute.xlu0 %813
        %815 = vrot.lane.b32.xlu0 %v808, 111
        %v816 = vpop.permute.xlu0 %815
        %817 = vrot.lane.b32.xlu0 %v809, 111
        %v818 = vpop.permute.xlu0 %817
        %vm819 = vcmask 908288
        %v820 = vsel %vm819, %v814, %v816
        %v821 = vsel %vm819, %v816, %v818
        %v825 = vadd.f32 %v782, %v820
        %v826 = vadd.f32 %v783, %v821
        %v827 = vadd.f32 %v784, %v818
        %s828 = sld [smem:[#allocation2 + $0x9]]
        %v829 = vstv %s828
        %v830 = vmul.f32 %v829, 0.0
        %v831 = vmul.f32 %v829, %v426
        %v832 = vmul.f32 %v829, %v427
        %s833 = sld [smem:[#allocation2 + $0x89]]
        %v834 = vstv %s833
        %v835 = vmul.f32 %v834, 0.0
        %v836 = vmul.f32 %v834, %v434
        %v837 = vmul.f32 %v834, %v441
        %v838 = vadd.f32 %v830, %v835
        %v839 = vadd.f32 %v831, %v836
        %v840 = vadd.f32 %v832, %v837
        %841 = vrot.lane.b32.xlu0 %v371, 95
        %v842 = vpop.permute.xlu0 %841
        %843 = vrot.lane.b32.xlu0 %v372, 95
        %v844 = vpop.permute.xlu0 %843
        %vm845 = vcmask 777216
        %v846 = vsel %vm845, %v842, %v844
        %v850 = vmul.f32 %v838, %v842
        %v851 = vmul.f32 %v839, %v846
        %v852 = vmul.f32 %v840, %v844
        %856 = vrot.lane.b32.xlu0 %v850, 110
        %v857 = vpop.permute.xlu0 %856
        %858 = vrot.lane.b32.xlu0 %v851, 110
        %v859 = vpop.permute.xlu0 %858
        %860 = vrot.lane.b32.xlu0 %v852, 110
        %v861 = vpop.permute.xlu0 %860
        %vm862 = vcmask 900096
        %v863 = vsel %vm862, %v857, %v859
        %v864 = vsel %vm862, %v859, %v861
        %v868 = vadd.f32 %v825, %v863
        %v869 = vadd.f32 %v826, %v864
        %v870 = vadd.f32 %v827, %v861
        %s871 = sld [smem:[#allocation2 + $0xa]]
        %v872 = vstv %s871
        %v873 = vmul.f32 %v872, 0.0
        %v874 = vmul.f32 %v872, %v426
        %v875 = vmul.f32 %v872, %v427
        %s876 = sld [smem:[#allocation2 + $0x8a]]
        %v877 = vstv %s876
        %v878 = vmul.f32 %v877, 0.0
        %v879 = vmul.f32 %v877, %v434
        %v880 = vmul.f32 %v877, %v441
        %v881 = vadd.f32 %v873, %v878
        %v882 = vadd.f32 %v874, %v879
        %v883 = vadd.f32 %v875, %v880
        %884 = vrot.lane.b32.xlu0 %v379, 96
        %v885 = vpop.permute.xlu0 %884
        %886 = vrot.lane.b32.xlu0 %v380, 96
        %v887 = vpop.permute.xlu0 %886
        %vm888 = vcmask 785408
        %v889 = vsel %vm888, %v885, %v887
        %v893 = vmul.f32 %v881, %v885
        %v894 = vmul.f32 %v882, %v889
        %v895 = vmul.f32 %v883, %v887
        %899 = vrot.lane.b32.xlu0 %v893, 109
        %v900 = vpop.permute.xlu0 %899
        %901 = vrot.lane.b32.xlu0 %v894, 109
        %v902 = vpop.permute.xlu0 %901
        %903 = vrot.lane.b32.xlu0 %v895, 109
        %v904 = vpop.permute.xlu0 %903
        %vm905 = vcmask 891904
        %v906 = vsel %vm905, %v900, %v902
        %v907 = vsel %vm905, %v902, %v904
        %v911 = vadd.f32 %v868, %v906
        %v912 = vadd.f32 %v869, %v907
        %v913 = vadd.f32 %v870, %v904
        %s914 = sld [smem:[#allocation2 + $0xb]]
        %v915 = vstv %s914
        %v916 = vmul.f32 %v915, 0.0
        %v917 = vmul.f32 %v915, %v426
        %v918 = vmul.f32 %v915, %v427
        %s919 = sld [smem:[#allocation2 + $0x8b]]
        %v920 = vstv %s919
        %v921 = vmul.f32 %v920, 0.0
        %v922 = vmul.f32 %v920, %v434
        %v923 = vmul.f32 %v920, %v441
        %v924 = vadd.f32 %v916, %v921
        %v925 = vadd.f32 %v917, %v922
        %v926 = vadd.f32 %v918, %v923
        %927 = vrot.lane.b32.xlu0 %v389, 97
        %v928 = vpop.permute.xlu0 %927
        %929 = vrot.lane.b32.xlu0 %v390, 97
        %v930 = vpop.permute.xlu0 %929
        %vm931 = vcmask 793600
        %v932 = vsel %vm931, %v928, %v930
        %v936 = vmul.f32 %v924, %v928
        %v937 = vmul.f32 %v925, %v932
        %v938 = vmul.f32 %v926, %v930
        %942 = vrot.lane.b32.xlu0 %v936, 108
        %v943 = vpop.permute.xlu0 %942
        %944 = vrot.lane.b32.xlu0 %v937, 108
        %v945 = vpop.permute.xlu0 %944
        %946 = vrot.lane.b32.xlu0 %v938, 108
        %v947 = vpop.permute.xlu0 %946
        %vm948 = vcmask 883712
        %v949 = vsel %vm948, %v943, %v945
        %v950 = vsel %vm948, %v945, %v947
        %v954 = vadd.f32 %v911, %v949
        %v955 = vadd.f32 %v912, %v950
        %v956 = vadd.f32 %v913, %v947
        %s957 = sld [smem:[#allocation2 + $0xc]]
        %v958 = vstv %s957
        %v959 = vmul.f32 %v958, 0.0
        %v960 = vmul.f32 %v958, %v426
        %v961 = vmul.f32 %v958, %v427
        %s962 = sld [smem:[#allocation2 + $0x8c]]
        %v963 = vstv %s962
        %v964 = vmul.f32 %v963, 0.0
        %v965 = vmul.f32 %v963, %v434
        %v966 = vmul.f32 %v963, %v441
        %v967 = vadd.f32 %v959, %v964
        %v968 = vadd.f32 %v960, %v965
        %v969 = vadd.f32 %v961, %v966
        %970 = vrot.lane.b32.xlu0 %v399, 98
        %v971 = vpop.permute.xlu0 %970
        %972 = vrot.lane.b32.xlu0 %v400, 98
        %v973 = vpop.permute.xlu0 %972
        %vm974 = vcmask 801792
        %v975 = vsel %vm974, %v971, %v973
        %v979 = vmul.f32 %v967, %v971
        %v980 = vmul.f32 %v968, %v975
        %v981 = vmul.f32 %v969, %v973
        %985 = vrot.lane.b32.xlu0 %v979, 107
        %v986 = vpop.permute.xlu0 %985
        %987 = vrot.lane.b32.xlu0 %v980, 107
        %v988 = vpop.permute.xlu0 %987
        %989 = vrot.lane.b32.xlu0 %v981, 107
        %v990 = vpop.permute.xlu0 %989
        %vm991 = vcmask 875520
        %v992 = vsel %vm991, %v986, %v988
        %v993 = vsel %vm991, %v988, %v990
        %v997 = vadd.f32 %v954, %v992
        %v998 = vadd.f32 %v955, %v993
        %v999 = vadd.f32 %v956, %v990
        %s1000 = sld [smem:[#allocation2 + $0xd]]
        %v1001 = vstv %s1000
        %v1002 = vmul.f32 %v1001, 0.0
        %v1003 = vmul.f32 %v1001, %v426
        %v1004 = vmul.f32 %v1001, %v427
        %s1005 = sld [smem:[#allocation2 + $0x8d]]
        %v1006 = vstv %s1005
        %v1007 = vmul.f32 %v1006, 0.0
        %v1008 = vmul.f32 %v1006, %v434
        %v1009 = vmul.f32 %v1006, %v441
        %v1010 = vadd.f32 %v1002, %v1007
        %v1011 = vadd.f32 %v1003, %v1008
        %v1012 = vadd.f32 %v1004, %v1009
        %1013 = vrot.lane.b32.xlu0 %v409, 99
        %v1014 = vpop.permute.xlu0 %1013
        %1015 = vrot.lane.b32.xlu0 %v410, 99
        %v1016 = vpop.permute.xlu0 %1015
        %vm1017 = vcmask 809984
        %v1018 = vsel %vm1017, %v1014, %v1016
        %v1022 = vmul.f32 %v1010, %v1014
        %v1023 = vmul.f32 %v1011, %v1018
        %v1024 = vmul.f32 %v1012, %v1016
        %1028 = vrot.lane.b32.xlu0 %v1022, 106
        %v1029 = vpop.permute.xlu0 %1028
        %1030 = vrot.lane.b32.xlu0 %v1023, 106
        %v1031 = vpop.permute.xlu0 %1030
        %1032 = vrot.lane.b32.xlu0 %v1024, 106
        %v1033 = vpop.permute.xlu0 %1032
        %vm1034 = vcmask 867328
        %v1035 = vsel %vm1034, %v1029, %v1031
        %v1036 = vsel %vm1034, %v1031, %v1033
        %v1040 = vadd.f32 %v997, %v1035
        %v1041 = vadd.f32 %v998, %v1036
        %v1042 = vadd.f32 %v999, %v1033
        %s1043 = sld [smem:[#allocation2 + $0xe]]
        %v1044 = vstv %s1043
        %v1045 = vmul.f32 %v1044, 0.0
        %v1046 = vmul.f32 %v1044, %v426
        %v1047 = vmul.f32 %v1044, %v427
        %s1048 = sld [smem:[#allocation2 + $0x8e]]
        %v1049 = vstv %s1048
        %v1050 = vmul.f32 %v1049, 0.0
        %v1051 = vmul.f32 %v1049, %v434
        %v1052 = vmul.f32 %v1049, %v441
        %v1053 = vadd.f32 %v1045, %v1050
        %v1054 = vadd.f32 %v1046, %v1051
        %v1055 = vadd.f32 %v1047, %v1052
        %1056 = vrot.lane.b32.xlu0 %v351, 109
        %v1057 = vpop.permute.xlu0 %1056
        %1058 = vrot.lane.b32.xlu0 %v352, 109
        %v1059 = vpop.permute.xlu0 %1058
        %v1060 = vsel %vm905, %v1057, %v1059
        %v1064 = vmul.f32 %v1053, %v1057
        %v1065 = vmul.f32 %v1054, %v1060
        %v1066 = vmul.f32 %v1055, %v1059
        %1070 = vrot.lane.b32.xlu0 %v1064, 96
        %v1071 = vpop.permute.xlu0 %1070
        %1072 = vrot.lane.b32.xlu0 %v1065, 96
        %v1073 = vpop.permute.xlu0 %1072
        %1074 = vrot.lane.b32.xlu0 %v1066, 96
        %v1075 = vpop.permute.xlu0 %1074
        %v1076 = vsel %vm888, %v1071, %v1073
        %v1077 = vsel %vm888, %v1073, %v1075
        %v1081 = vadd.f32 %v1040, %v1076
        %v1082 = vadd.f32 %v1041, %v1077
        %v1083 = vadd.f32 %v1042, %v1075
        %s1084 = sld [smem:[#allocation2 + $0xf]]
        %v1085 = vstv %s1084
        %v1086 = vmul.f32 %v1085, 0.0
        %v1087 = vmul.f32 %v1085, %v426
        %v1088 = vmul.f32 %v1085, %v427
        %s1089 = sld [smem:[#allocation2 + $0x8f]]
        %v1090 = vstv %s1089
        %v1091 = vmul.f32 %v1090, 0.0
        %v1092 = vmul.f32 %v1090, %v434
        %v1093 = vmul.f32 %v1090, %v441
        %v1094 = vadd.f32 %v1086, %v1091
        %v1095 = vadd.f32 %v1087, %v1092
        %v1096 = vadd.f32 %v1088, %v1093
        %1097 = vrot.lane.b32.xlu0 %v361, 110
        %v1098 = vpop.permute.xlu0 %1097
        %1099 = vrot.lane.b32.xlu0 %v362, 110
        %v1100 = vpop.permute.xlu0 %1099
        %v1101 = vsel %vm862, %v1098, %v1100
        %v1105 = vmul.f32 %v1094, %v1098
        %v1106 = vmul.f32 %v1095, %v1101
        %v1107 = vmul.f32 %v1096, %v1100
        %1111 = vrot.lane.b32.xlu0 %v1105, 95
        %v1112 = vpop.permute.xlu0 %1111
        %1113 = vrot.lane.b32.xlu0 %v1106, 95
        %v1114 = vpop.permute.xlu0 %1113
        %1115 = vrot.lane.b32.xlu0 %v1107, 95
        %v1116 = vpop.permute.xlu0 %1115
        %v1117 = vsel %vm845, %v1112, %v1114
        %v1118 = vsel %vm845, %v1114, %v1116
        %v1122 = vadd.f32 %v1081, %v1117
        %v1123 = vadd.f32 %v1082, %v1118
        %v1124 = vadd.f32 %v1083, %v1116
        %s1125 = sld [smem:[#allocation2 + $0x10]]
        %v1126 = vstv %s1125
        %v1127 = vmul.f32 %v1126, 0.0
        %v1128 = vmul.f32 %v1126, %v426
        %v1129 = vmul.f32 %v1126, %v427
        %s1130 = sld [smem:[#allocation2 + $0x90]]
        %v1131 = vstv %s1130
        %v1132 = vmul.f32 %v1131, 0.0
        %v1133 = vmul.f32 %v1131, %v434
        %v1134 = vmul.f32 %v1131, %v441
        %v1135 = vadd.f32 %v1127, %v1132
        %v1136 = vadd.f32 %v1128, %v1133
        %v1137 = vadd.f32 %v1129, %v1134
        %1138 = vrot.lane.b32.xlu0 %v371, 111
        %v1139 = vpop.permute.xlu0 %1138
        %1140 = vrot.lane.b32.xlu0 %v372, 111
        %v1141 = vpop.permute.xlu0 %1140
        %v1142 = vsel %vm819, %v1139, %v1141
        %v1146 = vmul.f32 %v1135, %v1139
        %v1147 = vmul.f32 %v1136, %v1142
        %v1148 = vmul.f32 %v1137, %v1141
        %1152 = vrot.lane.b32.xlu0 %v1146, 94
        %v1153 = vpop.permute.xlu0 %1152
        %1154 = vrot.lane.b32.xlu0 %v1147, 94
        %v1155 = vpop.permute.xlu0 %1154
        %1156 = vrot.lane.b32.xlu0 %v1148, 94
        %v1157 = vpop.permute.xlu0 %1156
        %v1158 = vsel %vm802, %v1153, %v1155
        %v1159 = vsel %vm802, %v1155, %v1157
        %v1163 = vadd.f32 %v1122, %v1158
        %v1164 = vadd.f32 %v1123, %v1159
        %v1165 = vadd.f32 %v1124, %v1157
        %s1166 = sld [smem:[#allocation2 + $0x11]]
        %v1167 = vstv %s1166
        %v1168 = vmul.f32 %v1167, 0.0
        %v1169 = vmul.f32 %v1167, %v426
        %v1170 = vmul.f32 %v1167, %v427
        %s1171 = sld [smem:[#allocation2 + $0x91]]
        %v1172 = vstv %s1171
        %v1173 = vmul.f32 %v1172, 0.0
        %v1174 = vmul.f32 %v1172, %v434
        %v1175 = vmul.f32 %v1172, %v441
        %v1176 = vadd.f32 %v1168, %v1173
        %v1177 = vadd.f32 %v1169, %v1174
        %v1178 = vadd.f32 %v1170, %v1175
        %1179 = vrot.lane.b32.xlu0 %v379, 112
        %v1180 = vpop.permute.xlu0 %1179
        %1181 = vrot.lane.b32.xlu0 %v380, 112
        %v1182 = vpop.permute.xlu0 %1181
        %v1183 = vsel %vm776, %v1180, %v1182
        %v1187 = vmul.f32 %v1176, %v1180
        %v1188 = vmul.f32 %v1177, %v1183
        %v1189 = vmul.f32 %v1178, %v1182
        %1193 = vrot.lane.b32.xlu0 %v1187, 93
        %v1194 = vpop.permute.xlu0 %1193
        %1195 = vrot.lane.b32.xlu0 %v1188, 93
        %v1196 = vpop.permute.xlu0 %1195
        %1197 = vrot.lane.b32.xlu0 %v1189, 93
        %v1198 = vpop.permute.xlu0 %1197
        %v1199 = vsel %vm759, %v1194, %v1196
        %v1200 = vsel %vm759, %v1196, %v1198
        %v1204 = vadd.f32 %v1163, %v1199
        %v1205 = vadd.f32 %v1164, %v1200
        %v1206 = vadd.f32 %v1165, %v1198
        %s1207 = sld [smem:[#allocation2 + $0x12]]
        %v1208 = vstv %s1207
        %v1209 = vmul.f32 %v1208, 0.0
        %v1210 = vmul.f32 %v1208, %v426
        %v1211 = vmul.f32 %v1208, %v427
        %s1212 = sld [smem:[#allocation2 + $0x92]]
        %v1213 = vstv %s1212
        %v1214 = vmul.f32 %v1213, 0.0
        %v1215 = vmul.f32 %v1213, %v434
        %v1216 = vmul.f32 %v1213, %v441
        %v1217 = vadd.f32 %v1209, %v1214
        %v1218 = vadd.f32 %v1210, %v1215
        %v1219 = vadd.f32 %v1211, %v1216
        %1220 = vrot.lane.b32.xlu0 %v389, 113
        %v1221 = vpop.permute.xlu0 %1220
        %1222 = vrot.lane.b32.xlu0 %v390, 113
        %v1223 = vpop.permute.xlu0 %1222
        %vm1224 = vcmask 924672
        %v1225 = vsel %vm1224, %v1221, %v1223
        %v1229 = vmul.f32 %v1217, %v1221
        %v1230 = vmul.f32 %v1218, %v1225
        %v1231 = vmul.f32 %v1219, %v1223
        %1235 = vrot.lane.b32.xlu0 %v1229, 92
        %v1236 = vpop.permute.xlu0 %1235
        %1237 = vrot.lane.b32.xlu0 %v1230, 92
        %v1238 = vpop.permute.xlu0 %1237
        %1239 = vrot.lane.b32.xlu0 %v1231, 92
        %v1240 = vpop.permute.xlu0 %1239
        %vm1241 = vcmask 752640
        %v1242 = vsel %vm1241, %v1236, %v1238
        %v1243 = vsel %vm1241, %v1238, %v1240
        %v1247 = vadd.f32 %v1204, %v1242
        %v1248 = vadd.f32 %v1205, %v1243
        %v1249 = vadd.f32 %v1206, %v1240
        %s1250 = sld [smem:[#allocation2 + $0x13]]
        %v1251 = vstv %s1250
        %v1252 = vmul.f32 %v1251, 0.0
        %v1253 = vmul.f32 %v1251, %v426
        %v1254 = vmul.f32 %v1251, %v427
        %s1255 = sld [smem:[#allocation2 + $0x93]]
        %v1256 = vstv %s1255
        %v1257 = vmul.f32 %v1256, 0.0
        %v1258 = vmul.f32 %v1256, %v434
        %v1259 = vmul.f32 %v1256, %v441
        %v1260 = vadd.f32 %v1252, %v1257
        %v1261 = vadd.f32 %v1253, %v1258
        %v1262 = vadd.f32 %v1254, %v1259
        %1263 = vrot.lane.b32.xlu0 %v399, 114
        %v1264 = vpop.permute.xlu0 %1263
        %1265 = vrot.lane.b32.xlu0 %v400, 114
        %v1266 = vpop.permute.xlu0 %1265
        %vm1267 = vcmask 932864
        %v1268 = vsel %vm1267, %v1264, %v1266
        %v1272 = vmul.f32 %v1260, %v1264
        %v1273 = vmul.f32 %v1261, %v1268
        %v1274 = vmul.f32 %v1262, %v1266
        %1278 = vrot.lane.b32.xlu0 %v1272, 91
        %v1279 = vpop.permute.xlu0 %1278
        %1280 = vrot.lane.b32.xlu0 %v1273, 91
        %v1281 = vpop.permute.xlu0 %1280
        %1282 = vrot.lane.b32.xlu0 %v1274, 91
        %v1283 = vpop.permute.xlu0 %1282
        %vm1284 = vcmask 744448
        %v1285 = vsel %vm1284, %v1279, %v1281
        %v1286 = vsel %vm1284, %v1281, %v1283
        %v1290 = vadd.f32 %v1247, %v1285
        %v1291 = vadd.f32 %v1248, %v1286
        %v1292 = vadd.f32 %v1249, %v1283
        %s1293 = sld [smem:[#allocation2 + $0x14]]
        %v1294 = vstv %s1293
        %v1295 = vmul.f32 %v1294, 0.0
        %v1296 = vmul.f32 %v1294, %v426
        %v1297 = vmul.f32 %v1294, %v427
        %s1298 = sld [smem:[#allocation2 + $0x94]]
        %v1299 = vstv %s1298
        %v1300 = vmul.f32 %v1299, 0.0
        %v1301 = vmul.f32 %v1299, %v434
        %v1302 = vmul.f32 %v1299, %v441
        %v1303 = vadd.f32 %v1295, %v1300
        %v1304 = vadd.f32 %v1296, %v1301
        %v1305 = vadd.f32 %v1297, %v1302
        %1306 = vrot.lane.b32.xlu0 %v409, 115
        %v1307 = vpop.permute.xlu0 %1306
        %1308 = vrot.lane.b32.xlu0 %v410, 115
        %v1309 = vpop.permute.xlu0 %1308
        %vm1310 = vcmask 941056
        %v1311 = vsel %vm1310, %v1307, %v1309
        %v1315 = vmul.f32 %v1303, %v1307
        %v1316 = vmul.f32 %v1304, %v1311
        %v1317 = vmul.f32 %v1305, %v1309
        %1321 = vrot.lane.b32.xlu0 %v1315, 90
        %v1322 = vpop.permute.xlu0 %1321
        %1323 = vrot.lane.b32.xlu0 %v1316, 90
        %v1324 = vpop.permute.xlu0 %1323
        %1325 = vrot.lane.b32.xlu0 %v1317, 90
        %v1326 = vpop.permute.xlu0 %1325
        %vm1327 = vcmask 736256
        %v1328 = vsel %vm1327, %v1322, %v1324
        %v1329 = vsel %vm1327, %v1324, %v1326
        %v1333 = vadd.f32 %v1290, %v1328
        %v1334 = vadd.f32 %v1291, %v1329
        %v1335 = vadd.f32 %v1292, %v1326
        %s1336 = sld [smem:[#allocation2 + $0x15]]
        %v1337 = vstv %s1336
        %v1338 = vmul.f32 %v1337, 0.0
        %v1339 = vmul.f32 %v1337, %v426
        %v1340 = vmul.f32 %v1337, %v427
        %s1341 = sld [smem:[#allocation2 + $0x95]]
        %v1342 = vstv %s1341
        %v1343 = vmul.f32 %v1342, 0.0
        %v1344 = vmul.f32 %v1342, %v434
        %v1345 = vmul.f32 %v1342, %v441
        %v1346 = vadd.f32 %v1338, %v1343
        %v1347 = vadd.f32 %v1339, %v1344
        %v1348 = vadd.f32 %v1340, %v1345
        %1349 = vrot.lane.b32.xlu0 %v351, 125
        %v1350 = vpop.permute.xlu0 %1349
        %1351 = vrot.lane.b32.xlu0 %v352, 125
        %v1352 = vpop.permute.xlu0 %1351
        %v1353 = vsel %vm598, %v1350, %v1352
        %v1357 = vmul.f32 %v1346, %v1350
        %v1358 = vmul.f32 %v1347, %v1353
        %v1359 = vmul.f32 %v1348, %v1352
        %1363 = vrot.lane.b32.xlu0 %v1357, 80
        %v1364 = vpop.permute.xlu0 %1363
        %1365 = vrot.lane.b32.xlu0 %v1358, 80
        %v1366 = vpop.permute.xlu0 %1365
        %1367 = vrot.lane.b32.xlu0 %v1359, 80
        %v1368 = vpop.permute.xlu0 %1367
        %v1369 = vsel %vm581, %v1364, %v1366
        %v1370 = vsel %vm581, %v1366, %v1368
        %v1374 = vadd.f32 %v1333, %v1369
        %v1375 = vadd.f32 %v1334, %v1370
        %v1376 = vadd.f32 %v1335, %v1368
        %s1377 = sld [smem:[#allocation2 + $0x16]]
        %v1378 = vstv %s1377
        %v1379 = vmul.f32 %v1378, 0.0
        %v1380 = vmul.f32 %v1378, %v426
        %v1381 = vmul.f32 %v1378, %v427
        %s1382 = sld [smem:[#allocation2 + $0x96]]
        %v1383 = vstv %s1382
        %v1384 = vmul.f32 %v1383, 0.0
        %v1385 = vmul.f32 %v1383, %v434
        %v1386 = vmul.f32 %v1383, %v441
        %v1387 = vadd.f32 %v1379, %v1384
        %v1388 = vadd.f32 %v1380, %v1385
        %v1389 = vadd.f32 %v1381, %v1386
        %1390 = vrot.lane.b32.xlu0 %v361, 126
        %v1391 = vpop.permute.xlu0 %1390
        %1392 = vrot.lane.b32.xlu0 %v362, 126
        %v1393 = vpop.permute.xlu0 %1392
        %v1394 = vsel %vm553, %v1391, %v1393
        %v1398 = vmul.f32 %v1387, %v1391
        %v1399 = vmul.f32 %v1388, %v1394
        %v1400 = vmul.f32 %v1389, %v1393
        %1404 = vrot.lane.b32.xlu0 %v1398, 79
        %v1405 = vpop.permute.xlu0 %1404
        %1406 = vrot.lane.b32.xlu0 %v1399, 79
        %v1407 = vpop.permute.xlu0 %1406
        %1408 = vrot.lane.b32.xlu0 %v1400, 79
        %v1409 = vpop.permute.xlu0 %1408
        %v1410 = vsel %vm536, %v1405, %v1407
        %v1411 = vsel %vm536, %v1407, %v1409
        %v1415 = vadd.f32 %v1374, %v1410
        %v1416 = vadd.f32 %v1375, %v1411
        %v1417 = vadd.f32 %v1376, %v1409
        %s1418 = sld [smem:[#allocation2 + $0x17]]
        %v1419 = vstv %s1418
        %v1420 = vmul.f32 %v1419, 0.0
        %v1421 = vmul.f32 %v1419, %v426
        %v1422 = vmul.f32 %v1419, %v427
        %s1423 = sld [smem:[#allocation2 + $0x97]]
        %v1424 = vstv %s1423
        %v1425 = vmul.f32 %v1424, 0.0
        %v1426 = vmul.f32 %v1424, %v434
        %v1427 = vmul.f32 %v1424, %v441
        %v1428 = vadd.f32 %v1420, %v1425
        %v1429 = vadd.f32 %v1421, %v1426
        %v1430 = vadd.f32 %v1422, %v1427
        %1431 = vrot.lane.b32.xlu0 %v371, 127
        %v1432 = vpop.permute.xlu0 %1431
        %1433 = vrot.lane.b32.xlu0 %v372, 127
        %v1434 = vpop.permute.xlu0 %1433
        %v1435 = vsel %vm508, %v1432, %v1434
        %v1439 = vmul.f32 %v1428, %v1432
        %v1440 = vmul.f32 %v1429, %v1435
        %v1441 = vmul.f32 %v1430, %v1434
        %1445 = vrot.lane.b32.xlu0 %v1439, 78
        %v1446 = vpop.permute.xlu0 %1445
        %1447 = vrot.lane.b32.xlu0 %v1440, 78
        %v1448 = vpop.permute.xlu0 %1447
        %1449 = vrot.lane.b32.xlu0 %v1441, 78
        %v1450 = vpop.permute.xlu0 %1449
        %v1451 = vsel %vm491, %v1446, %v1448
        %v1452 = vsel %vm491, %v1448, %v1450
        %v1456 = vadd.f32 %v1415, %v1451
        %v1457 = vadd.f32 %v1416, %v1452
        %v1458 = vadd.f32 %v1417, %v1450
        %s1459 = sld [smem:[#allocation2 + $0x18]]
        %v1460 = vstv %s1459
        %v1461 = vmul.f32 %v1460, %v426
        %v1462 = vmul.f32 %v1460, %v427
        %s1463 = sld [smem:[#allocation2 + $0x98]]
        %v1464 = vstv %s1463
        %v1465 = vmul.f32 %v1464, %v434
        %v1466 = vmul.f32 %v1464, %v441
        %v1467 = vadd.f32 %v1461, %v1465
        %v1468 = vadd.f32 %v1462, %v1466
        %v1469 = vmul.f32 %v1467, %v379
        %v1470 = vmul.f32 %v1468, %v380
        %1473 = vrot.lane.b32.xlu0 %v1469, 77
        %v1474 = vpop.permute.xlu0 %1473
        %1475 = vrot.lane.b32.xlu0 %v1470, 77
        %v1476 = vpop.permute.xlu0 %1475
        %v1477 = vsel %vm461, %v1474, %v1476
        %v1481 = vadd.f32 %v1456, %v1474
        %v1482 = vadd.f32 %v1457, %v1477
        %v1483 = vadd.f32 %v1458, %v1476
        %s1484 = sld [smem:[#allocation2 + $0x19]]
        %v1485 = vstv %s1484
        %v1486 = vmul.f32 %v1485, %v426
        %v1487 = vmul.f32 %v1485, %v427
        %v1488 = vmul.f32 %v1485, 0.0
        %s1489 = sld [smem:[#allocation2 + $0x99]]
        %v1490 = vstv %s1489
        %v1491 = vmul.f32 %v1490, %v434
        %v1492 = vmul.f32 %v1490, %v441
        %v1493 = vmul.f32 %v1490, 0.0
        %v1494 = vadd.f32 %v1486, %v1491
        %v1495 = vadd.f32 %v1487, %v1492
        %v1496 = vadd.f32 %v1488, %v1493
        %1497 = vrot.lane.b32.xlu0 %v389, 1
        %v1498 = vpop.permute.xlu0 %1497
        %1499 = vrot.lane.b32.xlu0 %v390, 1
        %v1500 = vpop.permute.xlu0 %1499
        %vm1501 = vcmask 7168
        %v1502 = vsel %vm1501, %v1498, %v1500
        %v1506 = vmul.f32 %v1494, %v1498
        %v1507 = vmul.f32 %v1495, %v1502
        %v1508 = vmul.f32 %v1496, %v1500
        %1512 = vrot.lane.b32.xlu0 %v1506, 76
        %v1513 = vpop.permute.xlu0 %1512
        %1514 = vrot.lane.b32.xlu0 %v1507, 76
        %v1515 = vpop.permute.xlu0 %1514
        %1516 = vrot.lane.b32.xlu0 %v1508, 76
        %v1517 = vpop.permute.xlu0 %1516
        %vm1518 = vcmask 621568
        %v1519 = vsel %vm1518, %v1513, %v1515
        %v1520 = vsel %vm1518, %v1515, %v1517
        %v1524 = vadd.f32 %v1481, %v1513
        %v1525 = vadd.f32 %v1482, %v1519
        %v1526 = vadd.f32 %v1483, %v1520
        %s1527 = sld [smem:[#allocation2 + $0x1a]]
        %v1528 = vstv %s1527
        %v1529 = vmul.f32 %v1528, %v426
        %v1530 = vmul.f32 %v1528, %v427
        %v1531 = vmul.f32 %v1528, 0.0
        %s1532 = sld [smem:[#allocation2 + $0x9a]]
        %v1533 = vstv %s1532
        %v1534 = vmul.f32 %v1533, %v434
        %v1535 = vmul.f32 %v1533, %v441
        %v1536 = vmul.f32 %v1533, 0.0
        %v1537 = vadd.f32 %v1529, %v1534
        %v1538 = vadd.f32 %v1530, %v1535
        %v1539 = vadd.f32 %v1531, %v1536
        %1540 = vrot.lane.b32.xlu0 %v399, 2
        %v1541 = vpop.permute.xlu0 %1540
        %1542 = vrot.lane.b32.xlu0 %v400, 2
        %v1543 = vpop.permute.xlu0 %1542
        %vm1544 = vcmask 15360
        %v1545 = vsel %vm1544, %v1541, %v1543
        %v1549 = vmul.f32 %v1537, %v1541
        %v1550 = vmul.f32 %v1538, %v1545
        %v1551 = vmul.f32 %v1539, %v1543
        %1555 = vrot.lane.b32.xlu0 %v1549, 75
        %v1556 = vpop.permute.xlu0 %1555
        %1557 = vrot.lane.b32.xlu0 %v1550, 75
        %v1558 = vpop.permute.xlu0 %1557
        %1559 = vrot.lane.b32.xlu0 %v1551, 75
        %v1560 = vpop.permute.xlu0 %1559
        %vm1561 = vcmask 613376
        %v1562 = vsel %vm1561, %v1556, %v1558
        %v1563 = vsel %vm1561, %v1558, %v1560
        %v1567 = vadd.f32 %v1524, %v1556
        %v1568 = vadd.f32 %v1525, %v1562
        %v1569 = vadd.f32 %v1526, %v1563
        %s1570 = sld [smem:[#allocation2 + $0x1b]]
        %v1571 = vstv %s1570
        %v1572 = vmul.f32 %v1571, %v426
        %v1573 = vmul.f32 %v1571, %v427
        %v1574 = vmul.f32 %v1571, 0.0
        %s1575 = sld [smem:[#allocation2 + $0x9b]]
        %v1576 = vstv %s1575
        %v1577 = vmul.f32 %v1576, %v434
        %v1578 = vmul.f32 %v1576, %v441
        %v1579 = vmul.f32 %v1576, 0.0
        %v1580 = vadd.f32 %v1572, %v1577
        %v1581 = vadd.f32 %v1573, %v1578
        %v1582 = vadd.f32 %v1574, %v1579
        %1583 = vrot.lane.b32.xlu0 %v409, 3
        %v1584 = vpop.permute.xlu0 %1583
        %1585 = vrot.lane.b32.xlu0 %v410, 3
        %v1586 = vpop.permute.xlu0 %1585
        %vm1587 = vcmask 23552
        %v1588 = vsel %vm1587, %v1584, %v1586
        %v1592 = vmul.f32 %v1580, %v1584
        %v1593 = vmul.f32 %v1581, %v1588
        %v1594 = vmul.f32 %v1582, %v1586
        %1598 = vrot.lane.b32.xlu0 %v1592, 74
        %v1599 = vpop.permute.xlu0 %1598
        %1600 = vrot.lane.b32.xlu0 %v1593, 74
        %v1601 = vpop.permute.xlu0 %1600
        %1602 = vrot.lane.b32.xlu0 %v1594, 74
        %v1603 = vpop.permute.xlu0 %1602
        %vm1604 = vcmask 605184
        %v1605 = vsel %vm1604, %v1599, %v1601
        %v1606 = vsel %vm1604, %v1601, %v1603
        %v1610 = vadd.f32 %v1567, %v1599
        %v1611 = vadd.f32 %v1568, %v1605
        %v1612 = vadd.f32 %v1569, %v1606
        %s1613 = sld [smem:[#allocation2 + $0x1c]]
        %v1614 = vstv %s1613
        %v1615 = vmul.f32 %v1614, %v426
        %v1616 = vmul.f32 %v1614, %v427
        %v1617 = vmul.f32 %v1614, 0.0
        %s1618 = sld [smem:[#allocation2 + $0x9c]]
        %v1619 = vstv %s1618
        %v1620 = vmul.f32 %v1619, %v434
        %v1621 = vmul.f32 %v1619, %v441
        %v1622 = vmul.f32 %v1619, 0.0
        %v1623 = vadd.f32 %v1615, %v1620
        %v1624 = vadd.f32 %v1616, %v1621
        %v1625 = vadd.f32 %v1617, %v1622
        %1626 = vrot.lane.b32.xlu0 %v351, 13
        %v1627 = vpop.permute.xlu0 %1626
        %1628 = vrot.lane.b32.xlu0 %v352, 13
        %v1629 = vpop.permute.xlu0 %1628
        %vm1630 = vcmask 105472
        %v1631 = vsel %vm1630, %v1627, %v1629
        %v1635 = vmul.f32 %v1623, %v1627
        %v1636 = vmul.f32 %v1624, %v1631
        %v1637 = vmul.f32 %v1625, %v1629
        %1641 = vrot.lane.b32.xlu0 %v1635, 64
        %v1642 = vpop.permute.xlu0 %1641
        %1643 = vrot.lane.b32.xlu0 %v1636, 64
        %v1644 = vpop.permute.xlu0 %1643
        %1645 = vrot.lane.b32.xlu0 %v1637, 64
        %v1646 = vpop.permute.xlu0 %1645
        %vm1647 = vcmask 523264
        %v1648 = vsel %vm1647, %v1642, %v1644
        %v1649 = vsel %vm1647, %v1644, %v1646
        %v1653 = vadd.f32 %v1610, %v1642
        %v1654 = vadd.f32 %v1611, %v1648
        %v1655 = vadd.f32 %v1612, %v1649
        %s1656 = sld [smem:[#allocation2 + $0x1d]]
        %v1657 = vstv %s1656
        %v1658 = vmul.f32 %v1657, %v426
        %v1659 = vmul.f32 %v1657, %v427
        %v1660 = vmul.f32 %v1657, 0.0
        %s1661 = sld [smem:[#allocation2 + $0x9d]]
        %v1662 = vstv %s1661
        %v1663 = vmul.f32 %v1662, %v434
        %v1664 = vmul.f32 %v1662, %v441
        %v1665 = vmul.f32 %v1662, 0.0
        %v1666 = vadd.f32 %v1658, %v1663
        %v1667 = vadd.f32 %v1659, %v1664
        %v1668 = vadd.f32 %v1660, %v1665
        %1669 = vrot.lane.b32.xlu0 %v361, 14
        %v1670 = vpop.permute.xlu0 %1669
        %1671 = vrot.lane.b32.xlu0 %v362, 14
        %v1672 = vpop.permute.xlu0 %1671
        %vm1673 = vcmask 113664
        %v1674 = vsel %vm1673, %v1670, %v1672
        %v1678 = vmul.f32 %v1666, %v1670
        %v1679 = vmul.f32 %v1667, %v1674
        %v1680 = vmul.f32 %v1668, %v1672
        %1684 = vrot.lane.b32.xlu0 %v1678, 63
        %v1685 = vpop.permute.xlu0 %1684
        %1686 = vrot.lane.b32.xlu0 %v1679, 63
        %v1687 = vpop.permute.xlu0 %1686
        %1688 = vrot.lane.b32.xlu0 %v1680, 63
        %v1689 = vpop.permute.xlu0 %1688
        %vm1690 = vcmask 515072
        %v1691 = vsel %vm1690, %v1685, %v1687
        %v1692 = vsel %vm1690, %v1687, %v1689
        %v1696 = vadd.f32 %v1653, %v1685
        %v1697 = vadd.f32 %v1654, %v1691
        %v1698 = vadd.f32 %v1655, %v1692
        %s1699 = sld [smem:[#allocation2 + $0x1e]]
        %v1700 = vstv %s1699
        %v1701 = vmul.f32 %v1700, %v426
        %v1702 = vmul.f32 %v1700, %v427
        %v1703 = vmul.f32 %v1700, 0.0
        %s1704 = sld [smem:[#allocation2 + $0x9e]]
        %v1705 = vstv %s1704
        %v1706 = vmul.f32 %v1705, %v434
        %v1707 = vmul.f32 %v1705, %v441
        %v1708 = vmul.f32 %v1705, 0.0
        %v1709 = vadd.f32 %v1701, %v1706
        %v1710 = vadd.f32 %v1702, %v1707
        %v1711 = vadd.f32 %v1703, %v1708
        %1712 = vrot.lane.b32.xlu0 %v371, 15
        %v1713 = vpop.permute.xlu0 %1712
        %1714 = vrot.lane.b32.xlu0 %v372, 15
        %v1715 = vpop.permute.xlu0 %1714
        %vm1716 = vcmask 121856
        %v1717 = vsel %vm1716, %v1713, %v1715
        %v1721 = vmul.f32 %v1709, %v1713
        %v1722 = vmul.f32 %v1710, %v1717
        %v1723 = vmul.f32 %v1711, %v1715
        %1727 = vrot.lane.b32.xlu0 %v1721, 62
        %v1728 = vpop.permute.xlu0 %1727
        %1729 = vrot.lane.b32.xlu0 %v1722, 62
        %v1730 = vpop.permute.xlu0 %1729
        %1731 = vrot.lane.b32.xlu0 %v1723, 62
        %v1732 = vpop.permute.xlu0 %1731
        %vm1733 = vcmask 506880
        %v1734 = vsel %vm1733, %v1728, %v1730
        %v1735 = vsel %vm1733, %v1730, %v1732
        %v1739 = vadd.f32 %v1696, %v1728
        %v1740 = vadd.f32 %v1697, %v1734
        %v1741 = vadd.f32 %v1698, %v1735
        %s1742 = sld [smem:[#allocation2 + $0x1f]]
        %v1743 = vstv %s1742
        %v1744 = vmul.f32 %v1743, %v426
        %v1745 = vmul.f32 %v1743, %v427
        %v1746 = vmul.f32 %v1743, 0.0
        %s1747 = sld [smem:[#allocation2 + $0x9f]]
        %v1748 = vstv %s1747
        %v1749 = vmul.f32 %v1748, %v434
        %v1750 = vmul.f32 %v1748, %v441
        %v1751 = vmul.f32 %v1748, 0.0
        %v1752 = vadd.f32 %v1744, %v1749
        %v1753 = vadd.f32 %v1745, %v1750
        %v1754 = vadd.f32 %v1746, %v1751
        %1755 = vrot.lane.b32.xlu0 %v379, 16
        %v1756 = vpop.permute.xlu0 %1755
        %1757 = vrot.lane.b32.xlu0 %v380, 16
        %v1758 = vpop.permute.xlu0 %1757
        %vm1759 = vcmask 130048
        %v1760 = vsel %vm1759, %v1756, %v1758
        %v1764 = vmul.f32 %v1752, %v1756
        %v1765 = vmul.f32 %v1753, %v1760
        %v1766 = vmul.f32 %v1754, %v1758
        %1770 = vrot.lane.b32.xlu0 %v1764, 61
        %v1771 = vpop.permute.xlu0 %1770
        %1772 = vrot.lane.b32.xlu0 %v1765, 61
        %v1773 = vpop.permute.xlu0 %1772
        %1774 = vrot.lane.b32.xlu0 %v1766, 61
        %v1775 = vpop.permute.xlu0 %1774
        %vm1776 = vcmask 498688
        %v1777 = vsel %vm1776, %v1771, %v1773
        %v1778 = vsel %vm1776, %v1773, %v1775
        %v1782 = vadd.f32 %v1739, %v1771
        %v1783 = vadd.f32 %v1740, %v1777
        %v1784 = vadd.f32 %v1741, %v1778
        %s1785 = sld [smem:[#allocation2 + $0x20]]
        %v1786 = vstv %s1785
        %v1787 = vmul.f32 %v1786, %v426
        %v1788 = vmul.f32 %v1786, %v427
        %v1789 = vmul.f32 %v1786, 0.0
        %s1790 = sld [smem:[#allocation2 + $0xa0]]
        %v1791 = vstv %s1790
        %v1792 = vmul.f32 %v1791, %v434
        %v1793 = vmul.f32 %v1791, %v441
        %v1794 = vmul.f32 %v1791, 0.0
        %v1795 = vadd.f32 %v1787, %v1792
        %v1796 = vadd.f32 %v1788, %v1793
        %v1797 = vadd.f32 %v1789, %v1794
        %1798 = vrot.lane.b32.xlu0 %v389, 17
        %v1799 = vpop.permute.xlu0 %1798
        %1800 = vrot.lane.b32.xlu0 %v390, 17
        %v1801 = vpop.permute.xlu0 %1800
        %vm1802 = vcmask 138240
        %v1803 = vsel %vm1802, %v1799, %v1801
        %v1807 = vmul.f32 %v1795, %v1799
        %v1808 = vmul.f32 %v1796, %v1803
        %v1809 = vmul.f32 %v1797, %v1801
        %1813 = vrot.lane.b32.xlu0 %v1807, 60
        %v1814 = vpop.permute.xlu0 %1813
        %1815 = vrot.lane.b32.xlu0 %v1808, 60
        %v1816 = vpop.permute.xlu0 %1815
        %1817 = vrot.lane.b32.xlu0 %v1809, 60
        %v1818 = vpop.permute.xlu0 %1817
        %vm1819 = vcmask 490496
        %v1820 = vsel %vm1819, %v1814, %v1816
        %v1821 = vsel %vm1819, %v1816, %v1818
        %v1825 = vadd.f32 %v1782, %v1814
        %v1826 = vadd.f32 %v1783, %v1820
        %v1827 = vadd.f32 %v1784, %v1821
        %s1828 = sld [smem:[#allocation2 + $0x21]]
        %v1829 = vstv %s1828
        %v1830 = vmul.f32 %v1829, %v426
        %v1831 = vmul.f32 %v1829, %v427
        %v1832 = vmul.f32 %v1829, 0.0
        %s1833 = sld [smem:[#allocation2 + $0xa1]]
        %v1834 = vstv %s1833
        %v1835 = vmul.f32 %v1834, %v434
        %v1836 = vmul.f32 %v1834, %v441
        %v1837 = vmul.f32 %v1834, 0.0
        %v1838 = vadd.f32 %v1830, %v1835
        %v1839 = vadd.f32 %v1831, %v1836
        %v1840 = vadd.f32 %v1832, %v1837
        %1841 = vrot.lane.b32.xlu0 %v399, 18
        %v1842 = vpop.permute.xlu0 %1841
        %1843 = vrot.lane.b32.xlu0 %v400, 18
        %v1844 = vpop.permute.xlu0 %1843
        %vm1845 = vcmask 146432
        %v1846 = vsel %vm1845, %v1842, %v1844
        %v1850 = vmul.f32 %v1838, %v1842
        %v1851 = vmul.f32 %v1839, %v1846
        %v1852 = vmul.f32 %v1840, %v1844
        %1856 = vrot.lane.b32.xlu0 %v1850, 59
        %v1857 = vpop.permute.xlu0 %1856
        %1858 = vrot.lane.b32.xlu0 %v1851, 59
        %v1859 = vpop.permute.xlu0 %1858
        %1860 = vrot.lane.b32.xlu0 %v1852, 59
        %v1861 = vpop.permute.xlu0 %1860
        %vm1862 = vcmask 482304
        %v1863 = vsel %vm1862, %v1857, %v1859
        %v1864 = vsel %vm1862, %v1859, %v1861
        %v1868 = vadd.f32 %v1825, %v1857
        %v1869 = vadd.f32 %v1826, %v1863
        %v1870 = vadd.f32 %v1827, %v1864
        %s1871 = sld [smem:[#allocation2 + $0x22]]
        %v1872 = vstv %s1871
        %v1873 = vmul.f32 %v1872, %v426
        %v1874 = vmul.f32 %v1872, %v427
        %v1875 = vmul.f32 %v1872, 0.0
        %s1876 = sld [smem:[#allocation2 + $0xa2]]
        %v1877 = vstv %s1876
        %v1878 = vmul.f32 %v1877, %v434
        %v1879 = vmul.f32 %v1877, %v441
        %v1880 = vmul.f32 %v1877, 0.0
        %v1881 = vadd.f32 %v1873, %v1878
        %v1882 = vadd.f32 %v1874, %v1879
        %v1883 = vadd.f32 %v1875, %v1880
        %1884 = vrot.lane.b32.xlu0 %v409, 19
        %v1885 = vpop.permute.xlu0 %1884
        %1886 = vrot.lane.b32.xlu0 %v410, 19
        %v1887 = vpop.permute.xlu0 %1886
        %vm1888 = vcmask 154624
        %v1889 = vsel %vm1888, %v1885, %v1887
        %v1893 = vmul.f32 %v1881, %v1885
        %v1894 = vmul.f32 %v1882, %v1889
        %v1895 = vmul.f32 %v1883, %v1887
        %1899 = vrot.lane.b32.xlu0 %v1893, 58
        %v1900 = vpop.permute.xlu0 %1899
        %1901 = vrot.lane.b32.xlu0 %v1894, 58
        %v1902 = vpop.permute.xlu0 %1901
        %1903 = vrot.lane.b32.xlu0 %v1895, 58
        %v1904 = vpop.permute.xlu0 %1903
        %vm1905 = vcmask 474112
        %v1906 = vsel %vm1905, %v1900, %v1902
        %v1907 = vsel %vm1905, %v1902, %v1904
        %v1911 = vadd.f32 %v1868, %v1900
        %v1912 = vadd.f32 %v1869, %v1906
        %v1913 = vadd.f32 %v1870, %v1907
        %s1914 = sld [smem:[#allocation2 + $0x23]]
        %v1915 = vstv %s1914
        %v1916 = vmul.f32 %v1915, %v426
        %v1917 = vmul.f32 %v1915, %v427
        %v1918 = vmul.f32 %v1915, 0.0
        %s1919 = sld [smem:[#allocation2 + $0xa3]]
        %v1920 = vstv %s1919
        %v1921 = vmul.f32 %v1920, %v434
        %v1922 = vmul.f32 %v1920, %v441
        %v1923 = vmul.f32 %v1920, 0.0
        %v1924 = vadd.f32 %v1916, %v1921
        %v1925 = vadd.f32 %v1917, %v1922
        %v1926 = vadd.f32 %v1918, %v1923
        %1927 = vrot.lane.b32.xlu0 %v351, 29
        %v1928 = vpop.permute.xlu0 %1927
        %1929 = vrot.lane.b32.xlu0 %v352, 29
        %v1930 = vpop.permute.xlu0 %1929
        %vm1931 = vcmask 236544
        %v1932 = vsel %vm1931, %v1928, %v1930
        %v1936 = vmul.f32 %v1924, %v1928
        %v1937 = vmul.f32 %v1925, %v1932
        %v1938 = vmul.f32 %v1926, %v1930
        %1942 = vrot.lane.b32.xlu0 %v1936, 48
        %v1943 = vpop.permute.xlu0 %1942
        %1944 = vrot.lane.b32.xlu0 %v1937, 48
        %v1945 = vpop.permute.xlu0 %1944
        %1946 = vrot.lane.b32.xlu0 %v1938, 48
        %v1947 = vpop.permute.xlu0 %1946
        %vm1948 = vcmask 392192
        %v1949 = vsel %vm1948, %v1943, %v1945
        %v1950 = vsel %vm1948, %v1945, %v1947
        %v1954 = vadd.f32 %v1911, %v1943
        %v1955 = vadd.f32 %v1912, %v1949
        %v1956 = vadd.f32 %v1913, %v1950
        %s1957 = sld [smem:[#allocation2 + $0x24]]
        %v1958 = vstv %s1957
        %v1959 = vmul.f32 %v1958, %v426
        %v1960 = vmul.f32 %v1958, %v427
        %v1961 = vmul.f32 %v1958, 0.0
        %s1962 = sld [smem:[#allocation2 + $0xa4]]
        %v1963 = vstv %s1962
        %v1964 = vmul.f32 %v1963, %v434
        %v1965 = vmul.f32 %v1963, %v441
        %v1966 = vmul.f32 %v1963, 0.0
        %v1967 = vadd.f32 %v1959, %v1964
        %v1968 = vadd.f32 %v1960, %v1965
        %v1969 = vadd.f32 %v1961, %v1966
        %1970 = vrot.lane.b32.xlu0 %v361, 30
        %v1971 = vpop.permute.xlu0 %1970
        %1972 = vrot.lane.b32.xlu0 %v362, 30
        %v1973 = vpop.permute.xlu0 %1972
        %vm1974 = vcmask 244736
        %v1975 = vsel %vm1974, %v1971, %v1973
        %v1979 = vmul.f32 %v1967, %v1971
        %v1980 = vmul.f32 %v1968, %v1975
        %v1981 = vmul.f32 %v1969, %v1973
        %1985 = vrot.lane.b32.xlu0 %v1979, 47
        %v1986 = vpop.permute.xlu0 %1985
        %1987 = vrot.lane.b32.xlu0 %v1980, 47
        %v1988 = vpop.permute.xlu0 %1987
        %1989 = vrot.lane.b32.xlu0 %v1981, 47
        %v1990 = vpop.permute.xlu0 %1989
        %vm1991 = vcmask 384000
        %v1992 = vsel %vm1991, %v1986, %v1988
        %v1993 = vsel %vm1991, %v1988, %v1990
        %v1997 = vadd.f32 %v1954, %v1986
        %v1998 = vadd.f32 %v1955, %v1992
        %v1999 = vadd.f32 %v1956, %v1993
        %s2000 = sld [smem:[#allocation2 + $0x25]]
        %v2001 = vstv %s2000
        %v2002 = vmul.f32 %v2001, %v426
        %v2003 = vmul.f32 %v2001, %v427
        %v2004 = vmul.f32 %v2001, 0.0
        %s2005 = sld [smem:[#allocation2 + $0xa5]]
        %v2006 = vstv %s2005
        %v2007 = vmul.f32 %v2006, %v434
        %v2008 = vmul.f32 %v2006, %v441
        %v2009 = vmul.f32 %v2006, 0.0
        %v2010 = vadd.f32 %v2002, %v2007
        %v2011 = vadd.f32 %v2003, %v2008
        %v2012 = vadd.f32 %v2004, %v2009
        %2013 = vrot.lane.b32.xlu0 %v371, 31
        %v2014 = vpop.permute.xlu0 %2013
        %2015 = vrot.lane.b32.xlu0 %v372, 31
        %v2016 = vpop.permute.xlu0 %2015
        %vm2017 = vcmask 252928
        %v2018 = vsel %vm2017, %v2014, %v2016
        %v2022 = vmul.f32 %v2010, %v2014
        %v2023 = vmul.f32 %v2011, %v2018
        %v2024 = vmul.f32 %v2012, %v2016
        %2028 = vrot.lane.b32.xlu0 %v2022, 46
        %v2029 = vpop.permute.xlu0 %2028
        %2030 = vrot.lane.b32.xlu0 %v2023, 46
        %v2031 = vpop.permute.xlu0 %2030
        %2032 = vrot.lane.b32.xlu0 %v2024, 46
        %v2033 = vpop.permute.xlu0 %2032
        %vm2034 = vcmask 375808
        %v2035 = vsel %vm2034, %v2029, %v2031
        %v2036 = vsel %vm2034, %v2031, %v2033
        %v2040 = vadd.f32 %v1997, %v2029
        %v2041 = vadd.f32 %v1998, %v2035
        %v2042 = vadd.f32 %v1999, %v2036
        %s2043 = sld [smem:[#allocation2 + $0x26]]
        %v2044 = vstv %s2043
        %v2045 = vmul.f32 %v2044, %v426
        %v2046 = vmul.f32 %v2044, %v427
        %v2047 = vmul.f32 %v2044, 0.0
        %s2048 = sld [smem:[#allocation2 + $0xa6]]
        %v2049 = vstv %s2048
        %v2050 = vmul.f32 %v2049, %v434
        %v2051 = vmul.f32 %v2049, %v441
        %v2052 = vmul.f32 %v2049, 0.0
        %v2053 = vadd.f32 %v2045, %v2050
        %v2054 = vadd.f32 %v2046, %v2051
        %v2055 = vadd.f32 %v2047, %v2052
        %2056 = vrot.lane.b32.xlu0 %v379, 32
        %v2057 = vpop.permute.xlu0 %2056
        %2058 = vrot.lane.b32.xlu0 %v380, 32
        %v2059 = vpop.permute.xlu0 %2058
        %vm2060 = vcmask 261120
        %v2061 = vsel %vm2060, %v2057, %v2059
        %v2065 = vmul.f32 %v2053, %v2057
        %v2066 = vmul.f32 %v2054, %v2061
        %v2067 = vmul.f32 %v2055, %v2059
        %2071 = vrot.lane.b32.xlu0 %v2065, 45
        %v2072 = vpop.permute.xlu0 %2071
        %2073 = vrot.lane.b32.xlu0 %v2066, 45
        %v2074 = vpop.permute.xlu0 %2073
        %2075 = vrot.lane.b32.xlu0 %v2067, 45
        %v2076 = vpop.permute.xlu0 %2075
        %vm2077 = vcmask 367616
        %v2078 = vsel %vm2077, %v2072, %v2074
        %v2079 = vsel %vm2077, %v2074, %v2076
        %v2083 = vadd.f32 %v2040, %v2072
        %v2084 = vadd.f32 %v2041, %v2078
        %v2085 = vadd.f32 %v2042, %v2079
        %s2086 = sld [smem:[#allocation2 + $0x27]]
        %v2087 = vstv %s2086
        %v2088 = vmul.f32 %v2087, %v426
        %v2089 = vmul.f32 %v2087, %v427
        %v2090 = vmul.f32 %v2087, 0.0
        %s2091 = sld [smem:[#allocation2 + $0xa7]]
        %v2092 = vstv %s2091
        %v2093 = vmul.f32 %v2092, %v434
        %v2094 = vmul.f32 %v2092, %v441
        %v2095 = vmul.f32 %v2092, 0.0
        %v2096 = vadd.f32 %v2088, %v2093
        %v2097 = vadd.f32 %v2089, %v2094
        %v2098 = vadd.f32 %v2090, %v2095
        %2099 = vrot.lane.b32.xlu0 %v389, 33
        %v2100 = vpop.permute.xlu0 %2099
        %2101 = vrot.lane.b32.xlu0 %v390, 33
        %v2102 = vpop.permute.xlu0 %2101
        %vm2103 = vcmask 269312
        %v2104 = vsel %vm2103, %v2100, %v2102
        %v2108 = vmul.f32 %v2096, %v2100
        %v2109 = vmul.f32 %v2097, %v2104
        %v2110 = vmul.f32 %v2098, %v2102
        %2114 = vrot.lane.b32.xlu0 %v2108, 44
        %v2115 = vpop.permute.xlu0 %2114
        %2116 = vrot.lane.b32.xlu0 %v2109, 44
        %v2117 = vpop.permute.xlu0 %2116
        %2118 = vrot.lane.b32.xlu0 %v2110, 44
        %v2119 = vpop.permute.xlu0 %2118
        %vm2120 = vcmask 359424
        %v2121 = vsel %vm2120, %v2115, %v2117
        %v2122 = vsel %vm2120, %v2117, %v2119
        %v2126 = vadd.f32 %v2083, %v2115
        %v2127 = vadd.f32 %v2084, %v2121
        %v2128 = vadd.f32 %v2085, %v2122
        %s2129 = sld [smem:[#allocation2 + $0x28]]
        %v2130 = vstv %s2129
        %v2131 = vmul.f32 %v2130, %v426
        %v2132 = vmul.f32 %v2130, %v427
        %v2133 = vmul.f32 %v2130, 0.0
        %s2134 = sld [smem:[#allocation2 + $0xa8]]
        %v2135 = vstv %s2134
        %v2136 = vmul.f32 %v2135, %v434
        %v2137 = vmul.f32 %v2135, %v441
        %v2138 = vmul.f32 %v2135, 0.0
        %v2139 = vadd.f32 %v2131, %v2136
        %v2140 = vadd.f32 %v2132, %v2137
        %v2141 = vadd.f32 %v2133, %v2138
        %2142 = vrot.lane.b32.xlu0 %v399, 34
        %v2143 = vpop.permute.xlu0 %2142
        %2144 = vrot.lane.b32.xlu0 %v400, 34
        %v2145 = vpop.permute.xlu0 %2144
        %vm2146 = vcmask 277504
        %v2147 = vsel %vm2146, %v2143, %v2145
        %v2151 = vmul.f32 %v2139, %v2143
        %v2152 = vmul.f32 %v2140, %v2147
        %v2153 = vmul.f32 %v2141, %v2145
        %2157 = vrot.lane.b32.xlu0 %v2151, 43
        %v2158 = vpop.permute.xlu0 %2157
        %2159 = vrot.lane.b32.xlu0 %v2152, 43
        %v2160 = vpop.permute.xlu0 %2159
        %2161 = vrot.lane.b32.xlu0 %v2153, 43
        %v2162 = vpop.permute.xlu0 %2161
        %vm2163 = vcmask 351232
        %v2164 = vsel %vm2163, %v2158, %v2160
        %v2165 = vsel %vm2163, %v2160, %v2162
        %v2169 = vadd.f32 %v2126, %v2158
        %v2170 = vadd.f32 %v2127, %v2164
        %v2171 = vadd.f32 %v2128, %v2165
        %s2172 = sld [smem:[#allocation2 + $0x29]]
        %v2173 = vstv %s2172
        %v2174 = vmul.f32 %v2173, %v426
        %v2175 = vmul.f32 %v2173, %v427
        %v2176 = vmul.f32 %v2173, 0.0
        %s2177 = sld [smem:[#allocation2 + $0xa9]]
        %v2178 = vstv %s2177
        %v2179 = vmul.f32 %v2178, %v434
        %v2180 = vmul.f32 %v2178, %v441
        %v2181 = vmul.f32 %v2178, 0.0
        %v2182 = vadd.f32 %v2174, %v2179
        %v2183 = vadd.f32 %v2175, %v2180
        %v2184 = vadd.f32 %v2176, %v2181
        %2185 = vrot.lane.b32.xlu0 %v409, 35
        %v2186 = vpop.permute.xlu0 %2185
        %2187 = vrot.lane.b32.xlu0 %v410, 35
        %v2188 = vpop.permute.xlu0 %2187
        %vm2189 = vcmask 285696
        %v2190 = vsel %vm2189, %v2186, %v2188
        %v2194 = vmul.f32 %v2182, %v2186
        %v2195 = vmul.f32 %v2183, %v2190
        %v2196 = vmul.f32 %v2184, %v2188
        %2200 = vrot.lane.b32.xlu0 %v2194, 42
        %v2201 = vpop.permute.xlu0 %2200
        %2202 = vrot.lane.b32.xlu0 %v2195, 42
        %v2203 = vpop.permute.xlu0 %2202
        %2204 = vrot.lane.b32.xlu0 %v2196, 42
        %v2205 = vpop.permute.xlu0 %2204
        %vm2206 = vcmask 343040
        %v2207 = vsel %vm2206, %v2201, %v2203
        %v2208 = vsel %vm2206, %v2203, %v2205
        %v2212 = vadd.f32 %v2169, %v2201
        %v2213 = vadd.f32 %v2170, %v2207
        %v2214 = vadd.f32 %v2171, %v2208
        %s2215 = sld [smem:[#allocation2 + $0x2a]]
        %v2216 = vstv %s2215
        %v2217 = vmul.f32 %v2216, %v426
        %v2218 = vmul.f32 %v2216, %v427
        %v2219 = vmul.f32 %v2216, 0.0
        %s2220 = sld [smem:[#allocation2 + $0xaa]]
        %v2221 = vstv %s2220
        %v2222 = vmul.f32 %v2221, %v434
        %v2223 = vmul.f32 %v2221, %v441
        %v2224 = vmul.f32 %v2221, 0.0
        %v2225 = vadd.f32 %v2217, %v2222
        %v2226 = vadd.f32 %v2218, %v2223
        %v2227 = vadd.f32 %v2219, %v2224
        %2228 = vrot.lane.b32.xlu0 %v351, 45
        %v2229 = vpop.permute.xlu0 %2228
        %2230 = vrot.lane.b32.xlu0 %v352, 45
        %v2231 = vpop.permute.xlu0 %2230
        %v2232 = vsel %vm2077, %v2229, %v2231
        %v2236 = vmul.f32 %v2225, %v2229
        %v2237 = vmul.f32 %v2226, %v2232
        %v2238 = vmul.f32 %v2227, %v2231
        %2242 = vrot.lane.b32.xlu0 %v2236, 32
        %v2243 = vpop.permute.xlu0 %2242
        %2244 = vrot.lane.b32.xlu0 %v2237, 32
        %v2245 = vpop.permute.xlu0 %2244
        %2246 = vrot.lane.b32.xlu0 %v2238, 32
        %v2247 = vpop.permute.xlu0 %2246
        %v2248 = vsel %vm2060, %v2243, %v2245
        %v2249 = vsel %vm2060, %v2245, %v2247
        %v2253 = vadd.f32 %v2212, %v2243
        %v2254 = vadd.f32 %v2213, %v2248
        %v2255 = vadd.f32 %v2214, %v2249
        %s2256 = sld [smem:[#allocation2 + $0x2b]]
        %v2257 = vstv %s2256
        %v2258 = vmul.f32 %v2257, %v426
        %v2259 = vmul.f32 %v2257, %v427
        %v2260 = vmul.f32 %v2257, 0.0
        %s2261 = sld [smem:[#allocation2 + $0xab]]
        %v2262 = vstv %s2261
        %v2263 = vmul.f32 %v2262, %v434
        %v2264 = vmul.f32 %v2262, %v441
        %v2265 = vmul.f32 %v2262, 0.0
        %v2266 = vadd.f32 %v2258, %v2263
        %v2267 = vadd.f32 %v2259, %v2264
        %v2268 = vadd.f32 %v2260, %v2265
        %2269 = vrot.lane.b32.xlu0 %v361, 46
        %v2270 = vpop.permute.xlu0 %2269
        %2271 = vrot.lane.b32.xlu0 %v362, 46
        %v2272 = vpop.permute.xlu0 %2271
        %v2273 = vsel %vm2034, %v2270, %v2272
        %v2277 = vmul.f32 %v2266, %v2270
        %v2278 = vmul.f32 %v2267, %v2273
        %v2279 = vmul.f32 %v2268, %v2272
        %2283 = vrot.lane.b32.xlu0 %v2277, 31
        %v2284 = vpop.permute.xlu0 %2283
        %2285 = vrot.lane.b32.xlu0 %v2278, 31
        %v2286 = vpop.permute.xlu0 %2285
        %2287 = vrot.lane.b32.xlu0 %v2279, 31
        %v2288 = vpop.permute.xlu0 %2287
        %v2289 = vsel %vm2017, %v2284, %v2286
        %v2290 = vsel %vm2017, %v2286, %v2288
        %v2294 = vadd.f32 %v2253, %v2284
        %v2295 = vadd.f32 %v2254, %v2289
        %v2296 = vadd.f32 %v2255, %v2290
        %s2297 = sld [smem:[#allocation2 + $0x2c]]
        %v2298 = vstv %s2297
        %v2299 = vmul.f32 %v2298, %v426
        %v2300 = vmul.f32 %v2298, %v427
        %v2301 = vmul.f32 %v2298, 0.0
        %s2302 = sld [smem:[#allocation2 + $0xac]]
        %v2303 = vstv %s2302
        %v2304 = vmul.f32 %v2303, %v434
        %v2305 = vmul.f32 %v2303, %v441
        %v2306 = vmul.f32 %v2303, 0.0
        %v2307 = vadd.f32 %v2299, %v2304
        %v2308 = vadd.f32 %v2300, %v2305
        %v2309 = vadd.f32 %v2301, %v2306
        %2310 = vrot.lane.b32.xlu0 %v371, 47
        %v2311 = vpop.permute.xlu0 %2310
        %2312 = vrot.lane.b32.xlu0 %v372, 47
        %v2313 = vpop.permute.xlu0 %2312
        %v2314 = vsel %vm1991, %v2311, %v2313
        %v2318 = vmul.f32 %v2307, %v2311
        %v2319 = vmul.f32 %v2308, %v2314
        %v2320 = vmul.f32 %v2309, %v2313
        %2324 = vrot.lane.b32.xlu0 %v2318, 30
        %v2325 = vpop.permute.xlu0 %2324
        %2326 = vrot.lane.b32.xlu0 %v2319, 30
        %v2327 = vpop.permute.xlu0 %2326
        %2328 = vrot.lane.b32.xlu0 %v2320, 30
        %v2329 = vpop.permute.xlu0 %2328
        %v2330 = vsel %vm1974, %v2325, %v2327
        %v2331 = vsel %vm1974, %v2327, %v2329
        %v2335 = vadd.f32 %v2294, %v2325
        %v2336 = vadd.f32 %v2295, %v2330
        %v2337 = vadd.f32 %v2296, %v2331
        %s2338 = sld [smem:[#allocation2 + $0x2d]]
        %v2339 = vstv %s2338
        %v2340 = vmul.f32 %v2339, %v426
        %v2341 = vmul.f32 %v2339, %v427
        %v2342 = vmul.f32 %v2339, 0.0
        %s2343 = sld [smem:[#allocation2 + $0xad]]
        %v2344 = vstv %s2343
        %v2345 = vmul.f32 %v2344, %v434
        %v2346 = vmul.f32 %v2344, %v441
        %v2347 = vmul.f32 %v2344, 0.0
        %v2348 = vadd.f32 %v2340, %v2345
        %v2349 = vadd.f32 %v2341, %v2346
        %v2350 = vadd.f32 %v2342, %v2347
        %2351 = vrot.lane.b32.xlu0 %v379, 48
        %v2352 = vpop.permute.xlu0 %2351
        %2353 = vrot.lane.b32.xlu0 %v380, 48
        %v2354 = vpop.permute.xlu0 %2353
        %v2355 = vsel %vm1948, %v2352, %v2354
        %v2359 = vmul.f32 %v2348, %v2352
        %v2360 = vmul.f32 %v2349, %v2355
        %v2361 = vmul.f32 %v2350, %v2354
        %2365 = vrot.lane.b32.xlu0 %v2359, 29
        %v2366 = vpop.permute.xlu0 %2365
        %2367 = vrot.lane.b32.xlu0 %v2360, 29
        %v2368 = vpop.permute.xlu0 %2367
        %2369 = vrot.lane.b32.xlu0 %v2361, 29
        %v2370 = vpop.permute.xlu0 %2369
        %v2371 = vsel %vm1931, %v2366, %v2368
        %v2372 = vsel %vm1931, %v2368, %v2370
        %v2376 = vadd.f32 %v2335, %v2366
        %v2377 = vadd.f32 %v2336, %v2371
        %v2378 = vadd.f32 %v2337, %v2372
        %s2379 = sld [smem:[#allocation2 + $0x2e]]
        %v2380 = vstv %s2379
        %v2381 = vmul.f32 %v2380, %v426
        %v2382 = vmul.f32 %v2380, %v427
        %v2383 = vmul.f32 %v2380, 0.0
        %s2384 = sld [smem:[#allocation2 + $0xae]]
        %v2385 = vstv %s2384
        %v2386 = vmul.f32 %v2385, %v434
        %v2387 = vmul.f32 %v2385, %v441
        %v2388 = vmul.f32 %v2385, 0.0
        %v2389 = vadd.f32 %v2381, %v2386
        %v2390 = vadd.f32 %v2382, %v2387
        %v2391 = vadd.f32 %v2383, %v2388
        %2392 = vrot.lane.b32.xlu0 %v389, 49
        %v2393 = vpop.permute.xlu0 %2392
        %2394 = vrot.lane.b32.xlu0 %v390, 49
        %v2395 = vpop.permute.xlu0 %2394
        %vm2396 = vcmask 400384
        %v2397 = vsel %vm2396, %v2393, %v2395
        %v2401 = vmul.f32 %v2389, %v2393
        %v2402 = vmul.f32 %v2390, %v2397
        %v2403 = vmul.f32 %v2391, %v2395
        %2407 = vrot.lane.b32.xlu0 %v2401, 28
        %v2408 = vpop.permute.xlu0 %2407
        %2409 = vrot.lane.b32.xlu0 %v2402, 28
        %v2410 = vpop.permute.xlu0 %2409
        %2411 = vrot.lane.b32.xlu0 %v2403, 28
        %v2412 = vpop.permute.xlu0 %2411
        %vm2413 = vcmask 228352
        %v2414 = vsel %vm2413, %v2408, %v2410
        %v2415 = vsel %vm2413, %v2410, %v2412
        %v2419 = vadd.f32 %v2376, %v2408
        %v2420 = vadd.f32 %v2377, %v2414
        %v2421 = vadd.f32 %v2378, %v2415
        %s2422 = sld [smem:[#allocation2 + $0x2f]]
        %v2423 = vstv %s2422
        %v2424 = vmul.f32 %v2423, %v426
        %v2425 = vmul.f32 %v2423, %v427
        %v2426 = vmul.f32 %v2423, 0.0
        %s2427 = sld [smem:[#allocation2 + $0xaf]]
        %v2428 = vstv %s2427
        %v2429 = vmul.f32 %v2428, %v434
        %v2430 = vmul.f32 %v2428, %v441
        %v2431 = vmul.f32 %v2428, 0.0
        %v2432 = vadd.f32 %v2424, %v2429
        %v2433 = vadd.f32 %v2425, %v2430
        %v2434 = vadd.f32 %v2426, %v2431
        %2435 = vrot.lane.b32.xlu0 %v399, 50
        %v2436 = vpop.permute.xlu0 %2435
        %2437 = vrot.lane.b32.xlu0 %v400, 50
        %v2438 = vpop.permute.xlu0 %2437
        %vm2439 = vcmask 408576
        %v2440 = vsel %vm2439, %v2436, %v2438
        %v2444 = vmul.f32 %v2432, %v2436
        %v2445 = vmul.f32 %v2433, %v2440
        %v2446 = vmul.f32 %v2434, %v2438
        %2450 = vrot.lane.b32.xlu0 %v2444, 27
        %v2451 = vpop.permute.xlu0 %2450
        %2452 = vrot.lane.b32.xlu0 %v2445, 27
        %v2453 = vpop.permute.xlu0 %2452
        %2454 = vrot.lane.b32.xlu0 %v2446, 27
        %v2455 = vpop.permute.xlu0 %2454
        %vm2456 = vcmask 220160
        %v2457 = vsel %vm2456, %v2451, %v2453
        %v2458 = vsel %vm2456, %v2453, %v2455
        %v2462 = vadd.f32 %v2419, %v2451
        %v2463 = vadd.f32 %v2420, %v2457
        %v2464 = vadd.f32 %v2421, %v2458
        %s2465 = sld [smem:[#allocation2 + $0x30]]
        %v2466 = vstv %s2465
        %v2467 = vmul.f32 %v2466, %v426
        %v2468 = vmul.f32 %v2466, %v427
        %v2469 = vmul.f32 %v2466, 0.0
        %s2470 = sld [smem:[#allocation2 + $0xb0]]
        %v2471 = vstv %s2470
        %v2472 = vmul.f32 %v2471, %v434
        %v2473 = vmul.f32 %v2471, %v441
        %v2474 = vmul.f32 %v2471, 0.0
        %v2475 = vadd.f32 %v2467, %v2472
        %v2476 = vadd.f32 %v2468, %v2473
        %v2477 = vadd.f32 %v2469, %v2474
        %2478 = vrot.lane.b32.xlu0 %v409, 51
        %v2479 = vpop.permute.xlu0 %2478
        %2480 = vrot.lane.b32.xlu0 %v410, 51
        %v2481 = vpop.permute.xlu0 %2480
        %vm2482 = vcmask 416768
        %v2483 = vsel %vm2482, %v2479, %v2481
        %v2487 = vmul.f32 %v2475, %v2479
        %v2488 = vmul.f32 %v2476, %v2483
        %v2489 = vmul.f32 %v2477, %v2481
        %2493 = vrot.lane.b32.xlu0 %v2487, 26
        %v2494 = vpop.permute.xlu0 %2493
        %2495 = vrot.lane.b32.xlu0 %v2488, 26
        %v2496 = vpop.permute.xlu0 %2495
        %2497 = vrot.lane.b32.xlu0 %v2489, 26
        %v2498 = vpop.permute.xlu0 %2497
        %vm2499 = vcmask 211968
        %v2500 = vsel %vm2499, %v2494, %v2496
        %v2501 = vsel %vm2499, %v2496, %v2498
        %v2505 = vadd.f32 %v2462, %v2494
        %v2506 = vadd.f32 %v2463, %v2500
        %v2507 = vadd.f32 %v2464, %v2501
        %v2508 = vxor.u32 %v2505, 2147483648
        %v2509 = vxor.u32 %v2506, 2147483648
        %v2510 = vxor.u32 %v2507, 2147483648
        %v2511 = vmul.f32 %v2508, 1.442695
        %v2512 = vpow.pop %v2511
        %v2513 = vmul.f32 %v2509, 1.442695
        %v2514 = vpow.pop %v2513
        %v2515 = vmul.f32 %v2510, 1.442695
        %v2516 = vpow.pop %v2515
        %v2517 = vadd.f32 %v2512, 1.0
        %v2518 = vadd.f32 %v2514, 1.0
        %v2519 = vadd.f32 %v2516, 1.0
        %v2520 = vrcp.pop %v2517
        %v2521 = vmul.f32 1.0, %v2520
        %v2522 = vrcp.pop %v2518
        %v2523 = vmul.f32 1.0, %v2522
        %v2524 = vrcp.pop %v2519
        %v2525 = vmul.f32 1.0, %v2524
        %v2526 = vmul.f32 %v306, 2.0
        %v2527 = vmul.f32 %v307, 2.0
        %v2528 = vmul.f32 %v308, 2.0
        %v2529 = vmul.f32 %v309, 2.0
        %2531 = vset.pattern.permute.xlu0 0
        %2532 = vperm.xlu0 %2531, %v314
        %v2533 = vpop.permute.xlu0 %2532
        %2536 = vset.pattern.permute.xlu0 0
        %2537 = vperm.xlu0 %2536, %v315
        %v2538 = vpop.permute.xlu0 %2537
        %v2540 = vmul.f32 %v2526, %v2533
        %v2541 = vmul.f32 %v2527, %v2533
        %v2542 = vmul.f32 %v2528, %v2538
        %v2543 = vmul.f32 %v2529, %v2538
        %v2544 = vmul.f32 %v310, 2.0
        %v2545 = vmul.f32 %v311, 2.0
        %v2546 = vmul.f32 %v312, 2.0
        %v2547 = vmul.f32 %v313, 2.0
        %v2548 = vlaneseq
        %v2549 = vshrl.u32 %v2548, 7
        %v2550 = vsub.s32 0, %v2549
        %v2551 = vrot.slane %v2521, %v2550
        %v2552 = vlaneseq
        %v2553 = vshrl.u32 %v2552, 7
        %v2554 = vsub.s32 0, %v2553
        %v2555 = vrot.slane %v2523, %v2554
        %v2556 = vlaneseq
        %v2557 = vshrl.u32 %v2556, 7
        %v2558 = vsub.s32 0, %v2557
        %v2559 = vrot.slane %v2525, %v2558
        %2563 = vrot.lane.b32.xlu0 %v2551, 51
        %v2564 = vpop.permute.xlu0 %2563
        %2565 = vrot.lane.b32.xlu0 %v2555, 51
        %v2566 = vpop.permute.xlu0 %2565
        %2567 = vrot.lane.b32.xlu0 %v2559, 51
        %v2568 = vpop.permute.xlu0 %2567
        %v2569 = vsel %vm2482, %v2564, %v2566
        %v2570 = vsel %vm2482, %v2566, %v2568
        %v2573 = vmul.f32 %v2544, %v2569
        %v2574 = vmul.f32 %v2545, %v2570
        %v2575 = vmul.f32 %v2546, %v2569
        %v2576 = vmul.f32 %v2547, %v2570
        %v2577 = vadd.f32 %v2540, %v2573
        %v2578 = vadd.f32 %v2541, %v2574
        %v2579 = vadd.f32 %v2542, %v2575
        %v2580 = vadd.f32 %v2543, %v2576
        %v2581 = vmul.f32 %v1139, 0.0
        %v2582 = vmul.f32 %v2577, %v1142
        %v2583 = vmul.f32 %v2578, %v1141
        %v2584 = vmul.f32 %v2579, %v1142
        %v2585 = vmul.f32 %v2580, %v1141
        %v2586 = vmul.f32 %v1180, 0.0
        %v2587 = vmul.f32 %v2577, %v1183
        %v2588 = vmul.f32 %v2578, %v1182
        %v2589 = vmul.f32 %v2579, %v1183
        %v2590 = vmul.f32 %v2580, %v1182
        %v2591 = vmul.f32 %v1221, 0.0
        %v2592 = vmul.f32 %v2577, %v1225
        %v2593 = vmul.f32 %v2578, %v1223
        %v2594 = vmul.f32 %v2579, %v1225
        %v2595 = vmul.f32 %v2580, %v1223
        %v2596 = vmul.f32 %v1432, 0.0
        %v2597 = vmul.f32 %v2577, %v1435
        %v2598 = vmul.f32 %v2578, %v1434
        %v2599 = vmul.f32 %v2579, %v1435
        %v2600 = vmul.f32 %v2580, %v1434
        %v2601 = vmul.f32 %v2577, %v379
        %v2602 = vmul.f32 %v2578, %v380
        %v2603 = vmul.f32 %v2579, %v379
        %v2604 = vmul.f32 %v2580, %v380
        %v2605 = vmul.f32 %v2577, %v1498
        %v2606 = vmul.f32 %v2578, %v1502
        %v2607 = vmul.f32 %v1500, 0.0
        %v2608 = vmul.f32 %v2579, %v1498
        %v2609 = vmul.f32 %v2580, %v1502
        %v2610 = vmul.f32 %v2577, %v1713
        %v2611 = vmul.f32 %v2578, %v1717
        %v2612 = vmul.f32 %v1715, 0.0
        %v2613 = vmul.f32 %v2579, %v1713
        %v2614 = vmul.f32 %v2580, %v1717
        %v2615 = vmul.f32 %v2577, %v1756
        %v2616 = vmul.f32 %v2578, %v1760
        %v2617 = vmul.f32 %v1758, 0.0
        %v2618 = vmul.f32 %v2579, %v1756
        %v2619 = vmul.f32 %v2580, %v1760
        %v2620 = vmul.f32 %v2577, %v1799
        %v2621 = vmul.f32 %v2578, %v1803
        %v2622 = vmul.f32 %v1801, 0.0
        %v2623 = vmul.f32 %v2579, %v1799
        %v2624 = vmul.f32 %v2580, %v1803
        %2630 = vrot.lane.b32.xlu0 %v2586, 127
        %v2631 = vpop.permute.xlu0 %2630
        %2632 = vrot.lane.b32.xlu0 %v2587, 127
        %v2633 = vpop.permute.xlu0 %2632
        %2634 = vrot.lane.b32.xlu0 %v2588, 127
        %v2635 = vpop.permute.xlu0 %2634
        %2636 = vrot.lane.b32.xlu0 %v2589, 127
        %v2637 = vpop.permute.xlu0 %2636
        %2638 = vrot.lane.b32.xlu0 %v2590, 127
        %v2639 = vpop.permute.xlu0 %2638
        %v2640 = vsel %vm508, %v2631, %v2633
        %v2641 = vsel %vm508, %v2633, %v2635
        %v2642 = vsel %vm508, %v2631, %v2637
        %v2643 = vsel %vm508, %v2637, %v2639
        %2649 = vrot.lane.b32.xlu0 %v2591, 126
        %v2650 = vpop.permute.xlu0 %2649
        %2651 = vrot.lane.b32.xlu0 %v2592, 126
        %v2652 = vpop.permute.xlu0 %2651
        %2653 = vrot.lane.b32.xlu0 %v2593, 126
        %v2654 = vpop.permute.xlu0 %2653
        %2655 = vrot.lane.b32.xlu0 %v2594, 126
        %v2656 = vpop.permute.xlu0 %2655
        %2657 = vrot.lane.b32.xlu0 %v2595, 126
        %v2658 = vpop.permute.xlu0 %2657
        %v2659 = vsel %vm553, %v2650, %v2652
        %v2660 = vsel %vm553, %v2652, %v2654
        %v2661 = vsel %vm553, %v2650, %v2656
        %v2662 = vsel %vm553, %v2656, %v2658
        %2668 = vrot.lane.b32.xlu0 %v2596, 112
        %v2669 = vpop.permute.xlu0 %2668
        %2670 = vrot.lane.b32.xlu0 %v2597, 112
        %v2671 = vpop.permute.xlu0 %2670
        %2672 = vrot.lane.b32.xlu0 %v2598, 112
        %v2673 = vpop.permute.xlu0 %2672
        %2674 = vrot.lane.b32.xlu0 %v2599, 112
        %v2675 = vpop.permute.xlu0 %2674
        %2676 = vrot.lane.b32.xlu0 %v2600, 112
        %v2677 = vpop.permute.xlu0 %2676
        %v2678 = vsel %vm776, %v2669, %v2671
        %v2679 = vsel %vm776, %v2671, %v2673
        %v2680 = vsel %vm776, %v2669, %v2675
        %v2681 = vsel %vm776, %v2675, %v2677
        %2686 = vrot.lane.b32.xlu0 %v2601, 111
        %v2687 = vpop.permute.xlu0 %2686
        %2688 = vrot.lane.b32.xlu0 %v2602, 111
        %v2689 = vpop.permute.xlu0 %2688
        %2690 = vrot.lane.b32.xlu0 %v2603, 111
        %v2691 = vpop.permute.xlu0 %2690
        %2692 = vrot.lane.b32.xlu0 %v2604, 111
        %v2693 = vpop.permute.xlu0 %2692
        %v2694 = vsel %vm819, %v2687, %v2689
        %v2695 = vsel %vm819, %v2691, %v2693
        %2701 = vrot.lane.b32.xlu0 %v2605, 110
        %v2702 = vpop.permute.xlu0 %2701
        %2703 = vrot.lane.b32.xlu0 %v2606, 110
        %v2704 = vpop.permute.xlu0 %2703
        %2705 = vrot.lane.b32.xlu0 %v2607, 110
        %v2706 = vpop.permute.xlu0 %2705
        %2707 = vrot.lane.b32.xlu0 %v2608, 110
        %v2708 = vpop.permute.xlu0 %2707
        %2709 = vrot.lane.b32.xlu0 %v2609, 110
        %v2710 = vpop.permute.xlu0 %2709
        %v2711 = vsel %vm862, %v2702, %v2704
        %v2712 = vsel %vm862, %v2704, %v2706
        %v2713 = vsel %vm862, %v2708, %v2710
        %v2714 = vsel %vm862, %v2710, %v2706
        %2720 = vrot.lane.b32.xlu0 %v2610, 96
        %v2721 = vpop.permute.xlu0 %2720
        %2722 = vrot.lane.b32.xlu0 %v2611, 96
        %v2723 = vpop.permute.xlu0 %2722
        %2724 = vrot.lane.b32.xlu0 %v2612, 96
        %v2725 = vpop.permute.xlu0 %2724
        %2726 = vrot.lane.b32.xlu0 %v2613, 96
        %v2727 = vpop.permute.xlu0 %2726
        %2728 = vrot.lane.b32.xlu0 %v2614, 96
        %v2729 = vpop.permute.xlu0 %2728
        %v2730 = vsel %vm888, %v2721, %v2723
        %v2731 = vsel %vm888, %v2723, %v2725
        %v2732 = vsel %vm888, %v2727, %v2729
        %v2733 = vsel %vm888, %v2729, %v2725
        %2739 = vrot.lane.b32.xlu0 %v2615, 95
        %v2740 = vpop.permute.xlu0 %2739
        %2741 = vrot.lane.b32.xlu0 %v2616, 95
        %v2742 = vpop.permute.xlu0 %2741
        %2743 = vrot.lane.b32.xlu0 %v2617, 95
        %v2744 = vpop.permute.xlu0 %2743
        %2745 = vrot.lane.b32.xlu0 %v2618, 95
        %v2746 = vpop.permute.xlu0 %2745
        %2747 = vrot.lane.b32.xlu0 %v2619, 95
        %v2748 = vpop.permute.xlu0 %2747
        %v2749 = vsel %vm845, %v2740, %v2742
        %v2750 = vsel %vm845, %v2742, %v2744
        %v2751 = vsel %vm845, %v2746, %v2748
        %v2752 = vsel %vm845, %v2748, %v2744
        %2758 = vrot.lane.b32.xlu0 %v2620, 94
        %v2759 = vpop.permute.xlu0 %2758
        %2760 = vrot.lane.b32.xlu0 %v2621, 94
        %v2761 = vpop.permute.xlu0 %2760
        %2762 = vrot.lane.b32.xlu0 %v2622, 94
        %v2763 = vpop.permute.xlu0 %2762
        %2764 = vrot.lane.b32.xlu0 %v2623, 94
        %v2765 = vpop.permute.xlu0 %2764
        %2766 = vrot.lane.b32.xlu0 %v2624, 94
        %v2767 = vpop.permute.xlu0 %2766
        %v2768 = vsel %vm802, %v2759, %v2761
        %v2769 = vsel %vm802, %v2761, %v2763
        %v2770 = vsel %vm802, %v2765, %v2767
        %v2771 = vsel %vm802, %v2767, %v2763
        %v2772 = vld [vmem:[%s4] sm:$0xff]
        %v2773 = vld [vmem:[%s4 + $0x8] sm:$0xff]
        %v2774 = vld [vmem:[%s4 + $0x10] sm:$0xff]
        %v2775 = vld [vmem:[%s4 + $0x18] sm:$0xff]
        %v2776 = vld [vmem:[%s5] sm:$0xff]
        %v2777 = vld [vmem:[%s5 + $0x8] sm:$0xff]
        %2779 = vset.pattern.permute.xlu0 0
        %2780 = vperm.xlu0 %2779, %v2776
        %v2781 = vpop.permute.xlu0 %2780
        %2784 = vset.pattern.permute.xlu0 0
        %2785 = vperm.xlu0 %2784, %v2777
        %v2786 = vpop.permute.xlu0 %2785
        %2793 = vrot.lane.b32.xlu0 %v2581, 17
        %v2794 = vpop.permute.xlu0 %2793
        %2795 = vrot.lane.b32.xlu0 %v2582, 17
        %v2796 = vpop.permute.xlu0 %2795
        %2797 = vrot.lane.b32.xlu0 %v2583, 17
        %v2798 = vpop.permute.xlu0 %2797
        %2799 = vrot.lane.b32.xlu0 %v2584, 17
        %v2800 = vpop.permute.xlu0 %2799
        %2801 = vrot.lane.b32.xlu0 %v2585, 17
        %v2802 = vpop.permute.xlu0 %2801
        %2803 = vrot.lane.b32.xlu0 %v2640, 17
        %v2804 = vpop.permute.xlu0 %2803
        %2805 = vrot.lane.b32.xlu0 %v2641, 17
        %v2806 = vpop.permute.xlu0 %2805
        %2807 = vrot.lane.b32.xlu0 %v2635, 17
        %v2808 = vpop.permute.xlu0 %2807
        %2809 = vrot.lane.b32.xlu0 %v2642, 17
        %v2810 = vpop.permute.xlu0 %2809
        %2811 = vrot.lane.b32.xlu0 %v2643, 17
        %v2812 = vpop.permute.xlu0 %2811
        %2813 = vrot.lane.b32.xlu0 %v2639, 17
        %v2814 = vpop.permute.xlu0 %2813
        %2815 = vrot.lane.b32.xlu0 %v2659, 17
        %v2816 = vpop.permute.xlu0 %2815
        %2817 = vrot.lane.b32.xlu0 %v2660, 17
        %v2818 = vpop.permute.xlu0 %2817
        %2819 = vrot.lane.b32.xlu0 %v2654, 17
        %v2820 = vpop.permute.xlu0 %2819
        %2821 = vrot.lane.b32.xlu0 %v2661, 17
        %v2822 = vpop.permute.xlu0 %2821
        %2823 = vrot.lane.b32.xlu0 %v2662, 17
        %v2824 = vpop.permute.xlu0 %2823
        %2825 = vrot.lane.b32.xlu0 %v2658, 17
        %v2826 = vpop.permute.xlu0 %2825
        %2827 = vrot.lane.b32.xlu0 %v2678, 17
        %v2828 = vpop.permute.xlu0 %2827
        %2829 = vrot.lane.b32.xlu0 %v2679, 17
        %v2830 = vpop.permute.xlu0 %2829
        %2831 = vrot.lane.b32.xlu0 %v2673, 17
        %v2832 = vpop.permute.xlu0 %2831
        %2833 = vrot.lane.b32.xlu0 %v2680, 17
        %v2834 = vpop.permute.xlu0 %2833
        %2835 = vrot.lane.b32.xlu0 %v2681, 17
        %v2836 = vpop.permute.xlu0 %2835
        %2837 = vrot.lane.b32.xlu0 %v2677, 17
        %v2838 = vpop.permute.xlu0 %2837
        %2839 = vrot.lane.b32.xlu0 %v2687, 17
        %v2840 = vpop.permute.xlu0 %2839
        %2841 = vrot.lane.b32.xlu0 %v2694, 17
        %v2842 = vpop.permute.xlu0 %2841
        %2843 = vrot.lane.b32.xlu0 %v2689, 17
        %v2844 = vpop.permute.xlu0 %2843
        %2845 = vrot.lane.b32.xlu0 %v2691, 17
        %v2846 = vpop.permute.xlu0 %2845
        %2847 = vrot.lane.b32.xlu0 %v2695, 17
        %v2848 = vpop.permute.xlu0 %2847
        %2849 = vrot.lane.b32.xlu0 %v2693, 17
        %v2850 = vpop.permute.xlu0 %2849
        %2851 = vrot.lane.b32.xlu0 %v2702, 17
        %v2852 = vpop.permute.xlu0 %2851
        %2853 = vrot.lane.b32.xlu0 %v2711, 17
        %v2854 = vpop.permute.xlu0 %2853
        %2855 = vrot.lane.b32.xlu0 %v2712, 17
        %v2856 = vpop.permute.xlu0 %2855
        %2857 = vrot.lane.b32.xlu0 %v2708, 17
        %v2858 = vpop.permute.xlu0 %2857
        %2859 = vrot.lane.b32.xlu0 %v2713, 17
        %v2860 = vpop.permute.xlu0 %2859
        %2861 = vrot.lane.b32.xlu0 %v2714, 17
        %v2862 = vpop.permute.xlu0 %2861
        %2863 = vrot.lane.b32.xlu0 %v2721, 17
        %v2864 = vpop.permute.xlu0 %2863
        %2865 = vrot.lane.b32.xlu0 %v2730, 17
        %v2866 = vpop.permute.xlu0 %2865
        %2867 = vrot.lane.b32.xlu0 %v2731, 17
        %v2868 = vpop.permute.xlu0 %2867
        %2869 = vrot.lane.b32.xlu0 %v2727, 17
        %v2870 = vpop.permute.xlu0 %2869
        %2871 = vrot.lane.b32.xlu0 %v2732, 17
        %v2872 = vpop.permute.xlu0 %2871
        %2873 = vrot.lane.b32.xlu0 %v2733, 17
        %v2874 = vpop.permute.xlu0 %2873
        %2875 = vrot.lane.b32.xlu0 %v2740, 17
        %v2876 = vpop.permute.xlu0 %2875
        %2877 = vrot.lane.b32.xlu0 %v2749, 17
        %v2878 = vpop.permute.xlu0 %2877
        %2879 = vrot.lane.b32.xlu0 %v2750, 17
        %v2880 = vpop.permute.xlu0 %2879
        %2881 = vrot.lane.b32.xlu0 %v2746, 17
        %v2882 = vpop.permute.xlu0 %2881
        %2883 = vrot.lane.b32.xlu0 %v2751, 17
        %v2884 = vpop.permute.xlu0 %2883
        %2885 = vrot.lane.b32.xlu0 %v2752, 17
        %v2886 = vpop.permute.xlu0 %2885
        %2887 = vrot.lane.b32.xlu0 %v2759, 17
        %v2888 = vpop.permute.xlu0 %2887
        %2889 = vrot.lane.b32.xlu0 %v2768, 17
        %v2890 = vpop.permute.xlu0 %2889
        %2891 = vrot.lane.b32.xlu0 %v2769, 17
        %v2892 = vpop.permute.xlu0 %2891
        %2893 = vrot.lane.b32.xlu0 %v2765, 17
        %v2894 = vpop.permute.xlu0 %2893
        %2895 = vrot.lane.b32.xlu0 %v2770, 17
        %v2896 = vpop.permute.xlu0 %2895
        %2897 = vrot.lane.b32.xlu0 %v2771, 17
        %v2898 = vpop.permute.xlu0 %2897
        %v2899 = vsel %vm1802, %v2794, %v2796
        %v2900 = vsel %vm1802, %v2796, %v2798
        %v2901 = vsel %vm1802, %v2794, %v2800
        %v2902 = vsel %vm1802, %v2800, %v2802
        %v2903 = vsel %vm1802, %v2804, %v2806
        %v2904 = vsel %vm1802, %v2806, %v2808
        %v2905 = vsel %vm1802, %v2810, %v2812
        %v2906 = vsel %vm1802, %v2812, %v2814
        %v2907 = vsel %vm1802, %v2816, %v2818
        %v2908 = vsel %vm1802, %v2818, %v2820
        %v2909 = vsel %vm1802, %v2822, %v2824
        %v2910 = vsel %vm1802, %v2824, %v2826
        %v2911 = vsel %vm1802, %v2828, %v2830
        %v2912 = vsel %vm1802, %v2830, %v2832
        %v2913 = vsel %vm1802, %v2834, %v2836
        %v2914 = vsel %vm1802, %v2836, %v2838
        %v2915 = vsel %vm1802, %v2840, %v2842
        %v2916 = vsel %vm1802, %v2842, %v2844
        %v2917 = vsel %vm1802, %v2846, %v2848
        %v2918 = vsel %vm1802, %v2848, %v2850
        %v2919 = vsel %vm1802, %v2852, %v2854
        %v2920 = vsel %vm1802, %v2854, %v2856
        %v2921 = vsel %vm1802, %v2858, %v2860
        %v2922 = vsel %vm1802, %v2860, %v2862
        %v2923 = vsel %vm1802, %v2864, %v2866
        %v2924 = vsel %vm1802, %v2866, %v2868
        %v2925 = vsel %vm1802, %v2870, %v2872
        %v2926 = vsel %vm1802, %v2872, %v2874
        %v2927 = vsel %vm1802, %v2876, %v2878
        %v2928 = vsel %vm1802, %v2878, %v2880
        %v2929 = vsel %vm1802, %v2882, %v2884
        %v2930 = vsel %vm1802, %v2884, %v2886
        %v2931 = vsel %vm1802, %v2888, %v2890
        %v2932 = vsel %vm1802, %v2890, %v2892
        %v2933 = vsel %vm1802, %v2894, %v2896
        %v2934 = vsel %vm1802, %v2896, %v2898
        %v2972 = vsel %vm1759, %v2773, 0
        %v2975 = vsel %vm1759, %v2775, 0
        %2977 = vmatprep.subr.mxu0 %v2930
        %2978 = vmatpush1.msra.mxu0 %v2929
        %2979 = vmatprep.subr.mxu0 %v2928
        %2980 = vmatpush1.msra.mxu0 %v2927
        %2981 = vmatprep.subr.mxu0 %v2926
        %2982 = vmatpush1.msra.mxu0 %v2925
        %2983 = vmatprep.subr.mxu0 %v2924
        %2984 = vmatpush1.msra.mxu0 %v2923
        %2985 = vmatprep.subr.mxu0 %v2922
        %2986 = vmatpush1.msra.mxu0 %v2921
        %2987 = vmatprep.subr.mxu0 %v2920
        %2988 = vmatpush1.msra.mxu0 %v2919
        %2989 = vmatprep.subr.mxu0 %v2918
        %2990 = vmatpush1.msra.mxu0 %v2917
        %2991 = vmatprep.subr.mxu0 %v2916
        %2992 = vmatpush1.msra.mxu0 %v2915
        %2993 = vmatprep.subr.mxu0 %v2914
        %2994 = vmatpush1.msra.mxu0 %v2913
        %2995 = vmatprep.subr.mxu0 %v2912
        %2996 = vmatpush1.msra.mxu0 %v2911
        %2997 = vmatprep.subr.mxu0 %v2910
        %2998 = vmatpush1.msra.mxu0 %v2909
        %2999 = vmatprep.subr.mxu0 %v2908
        %3000 = vmatpush1.msra.mxu0 %v2907
        %3001 = vmatprep.subr.mxu0 %v2906
        %3002 = vmatpush1.msra.mxu0 %v2905
        %3003 = vmatprep.subr.mxu0 %v2904
        %3004 = vmatpush1.msra.mxu0 %v2903
        %3005 = vmatprep.subr.mxu0 %v2902
        %3006 = vmatpush1.msra.mxu0 %v2901
        %3007 = vmatprep.subr.mxu0 %v2900
        %3008 = vmatpush1.msra.mxu0 %v2899
        %3009 = vmatprep.subr.mxu0 0.0
        %3010 = vmatpush2.msra.mxu0 0.0
        %3011 = vmatprep.subr.mxu0 0.0
        %3012 = vmatpush2.msra.mxu0 0.0
        %3013 = vmatprep.subr.mxu0 0.0
        %3014 = vmatpush2.msra.mxu0 0.0
        %3015 = vmatprep.subr.mxu0 0.0
        %3016 = vmatpush2.msra.mxu0 0.0
        %3017 = vmatprep.subr.mxu0 0.0
        %3018 = vmatpush2.msra.mxu0 0.0
        %3019 = vmatprep.subr.mxu0 0.0
        %3020 = vmatpush2.msra.mxu0 0.0
        %3021 = vmatprep.subr.mxu0 0.0
        %3022 = vmatpush2.msra.mxu0 0.0
        %3023 = vmatprep.subr.mxu0 0.0
        %3024 = vmatpush2.msra.mxu0 0.0
        %3025 = vmatprep.subr.mxu0 0.0
        %3026 = vmatpush2.msra.mxu0 0.0
        %3027 = vmatprep.subr.mxu0 0.0
        %3028 = vmatpush2.msra.mxu0 0.0
        %3029 = vmatprep.subr.mxu0 0.0
        %3030 = vmatpush2.msra.mxu0 0.0
        %3031 = vmatprep.subr.mxu0 0.0
        %3032 = vmatpush2.msra.mxu0 0.0
        %3033 = vmatprep.subr.mxu0 0.0
        %3034 = vmatpush2.msra.mxu0 0.0
        %3035 = vmatprep.subr.mxu0 0.0
        %3036 = vmatpush2.msra.mxu0 0.0
        %3037 = vmatprep.subr.mxu0 %v2934
        %3038 = vmatpush2.msra.mxu0 %v2933
        %3039 = vmatprep.subr.mxu0 %v2932
        %3040 = vmatpush2.msra.mxu0 %v2931
        %3041 = vmatprep.mubr.f32.mxu0 %v2972
        %3042 = vmatmul.mubr.f32.gmra.mxu0 %v2772
        %v3043 = vpop.f32.mrf.mxu0
        %v3044 = vadd.f32 %v2781, %v3043
        %v3045 = vpop.f32.mrf.mxu0
        %v3046 = vadd.f32 %v2781, %v3045
        %3047 = vmatprep.mubr.f32.mxu0 %v2975
        %3048 = vmatmul.mubr.f32.gmra.mxu0 %v2774
        %v3049 = vpop.f32.mrf.mxu0
        %v3050 = vadd.f32 %v2786, %v3049
        %v3051 = vpop.f32.mrf.mxu0
        %v3052 = vadd.f32 %v2786, %v3051
        %3053 = vdwg.mxu0
        %v3054 = vmax.f32 %v3044, 0.0
        %v3055 = vmax.f32 %v3046, 0.0
        %v3056 = vmax.f32 %v3050, 0.0
        %v3057 = vmax.f32 %v3052, 0.0
        %3058 = vst [vmem:[%s305] sm:$0xff] %v3054
        %3059 = vst [vmem:[%s305 + $0x8] sm:$0xff] %v3055
        %3060 = vst [vmem:[%s305 + $0x10] sm:$0xff] %v3056
        %3061 = vst [vmem:[%s305 + $0x18] sm:$0xff] %v3057
        %p3062 = scmp.lt.s32.totalorder %s18, 1
        %s3063 = scalar_select %p3062, %s18, 1
        %s3064 = smul.addr %s3063, 4
        %s3065 = smul.addr %s3064, 8
        %s3066 = scalar_lea.vmem %s6, %s3065
        // Predicated region
        $region49: #{asym_bi_cs_fuse_reduce_pallas.3} parent=43 // pred_check
          %p3067 = pneg %p177
        $region50: #{asym_bi_cs_fuse_reduce_pallas.3} parent=43 // pred_check_branch
          %3069 = sbr.rel (%p3067) target = $region52
        $region51: #{asym_bi_cs_fuse_reduce_pallas.3} parent=43 // pred_region
          _
        $region52: #{asym_bi_cs_fuse_reduce_pallas.3} parent=43 // pred_fallthru
          _
      $region44: #{asym_bi_cs_fuse_reduce_pallas.3} parent=5 // pred_fallthru
        _
      %p3070 = scmp.le.s32.totalorder 2, %s13
      // Predicated region
      $region53: #{asym_bi_cs_fuse_reduce_pallas.3} parent=5 // pred_check
        %p3071 = pneg %p3070
      $region54: #{asym_bi_cs_fuse_reduce_pallas.3} parent=5 // pred_check_branch
        %3073 = sbr.rel (%p3071) target = $region56
      $region55: #{asym_bi_cs_fuse_reduce_pallas.3} parent=5 // pred_region
        %s3074 = ssub.s32 %s13, 2
        // Predicated region
        $region57: #{asym_bi_cs_fuse_reduce_pallas.3} parent=55 // pred_check
          %p3075 = pneg %p183
        $region58: #{asym_bi_cs_fuse_reduce_pallas.3} parent=55 // pred_check_branch
          %3077 = sbr.rel (%p3075) target = $region60
        $region59: #{asym_bi_cs_fuse_reduce_pallas.3} parent=55 // pred_region
          %p3078 = scmp.lt.s32.totalorder %s19, 1
          %s3079 = scalar_select %p3078, %s19, 1
          %s3080 = smul.addr %s3079, 4
          %s3081 = smul.addr %s3080, 8
          %s3082 = scalar_lea.vmem %s6, %s3081
        $region60: #{asym_bi_cs_fuse_reduce_pallas.3} parent=55 // pred_fallthru
          _
      $region56: #{asym_bi_cs_fuse_reduce_pallas.3} parent=5 // pred_fallthru
        _
    $region6: #{asym_bi_cs_fuse_reduce_pallas.3} parent=1 // loop_footer
      %s17 = sadd.s32 1, %s13
    $region7: #{asym_bi_cs_fuse_reduce_pallas.3} parent=1 // loop_footer_branch
      %12 = sbr.rel target = $region3
    $region8: #{asym_bi_cs_fuse_reduce_pallas.3} parent=1 // loop_exit
      _
    %3083 = vsyncpa [#allocation3], 1
    %s3084 = scalar_lea.sflag [#allocation3], 1
    %3085 = vsyncpa %s3084, 1

</llo_original>
